<compile_context>
chip_gen: v5e
topology: v5e:2x2
jax: 0.10.0
libtpu: 0.0.40
codegen_flags: <defaults>
</compile_context>

<pallas_src>
import functools

import numpy as np
import jax
import jax.numpy as jnp
from jax.experimental import pallas as pl
from jax.experimental.pallas import tpu as pltpu


def _round_up(x, m):
    return ((x + m - 1) // m) * m


def _centered_dft_matrix(n, n_pad):
    """Complex A embedded in an (n_pad, n_pad) zero matrix such that
    A[:n, :n] @ x == fftshift(fft(ifftshift(x), norm='ortho'))."""
    k = np.arange(n)
    F = np.exp(-2j * np.pi * np.outer(k, k) / n) / np.sqrt(n)   # ortho norm
    P = np.fft.ifftshift(np.eye(n), axes=0)   # P @ x == ifftshift(x)
    Q = np.fft.fftshift(np.eye(n), axes=0)    # Q @ x == fftshift(x)
    A = np.zeros((n_pad, n_pad), np.complex64)
    A[:n, :n] = Q @ F @ P
    return A


def _physical_vmem_bytes():
    try:
        info = pltpu.get_tpu_info()
        for name in ("vmem_capacity_bytes", "vmem_size_bytes", "vmem_bytes"):
            v = getattr(info, name, None)
            if v:
                return int(v)
    except Exception:
        pass
    return 64 * 1024 * 1024          # conservative fallback (v7x has the smallest VMEM)


def _auto_coil_group(coils_per_split, Mp, Np, mat_bytes, budget):
    """Largest divisor of coils_per_split whose estimated working set fits VMEM."""
    plane = Mp * Np * 4                                   # one (Mp, Np) f32 plane
    fixed = 4 * (Mp * Mp + Np * Np) * mat_bytes           # DFT matrices (conservative)
    fixed += 16 * plane                                   # im/mask/out blocks (2x buffered) + misc
    fixed += 2 * 1024 * 1024                              # slack
    per_coil = 15 * plane                                 # Smap block (x2 buf) + scratch + live slabs
    best = 1
    for g in range(1, coils_per_split + 1):
        if coils_per_split % g == 0 and fixed + per_coil * g <= budget:
            best = g
    return best


def _single_buffered_spec(shape, index_map):
    # The DFT matrices never change across the grid -> no benefit from double buffering.
    try:
        return pl.BlockSpec(shape, index_map, pipeline_mode=pl.Buffered(1))
    except Exception:                     # fall back to the default pipelining
        return pl.BlockSpec(shape, index_map)


def _opata_kernel(lam_ref, im_ref, smap_ref, mask_ref,
                  amr_ref, ami_ref, anrt_ref, anit_ref,
                  out_ref, wr_s, wi_s, *, cdt):
    f32 = jnp.float32
    s = pl.program_id(0)       # core-split axis (parallel)
    g = pl.program_id(2)       # coil-group axis (reduction)
    lam = lam_ref[0]           # SMEM scalar -> no recompile when lambda changes

    im_blk = im_ref[0]                       # (2, Mp, Np)
    im_r, im_i = im_blk[0], im_blk[1]
    mask_blk = mask_ref[0]
    m_r, m_i = mask_blk[0], mask_blk[1]

    AMr, AMi = amr_ref[...], ami_ref[...]    # (Mp, Mp), compute dtype
    ANrT, ANiT = anrt_ref[...], anit_ref[...]  # (Np, Np), compute dtype

    # Initialize the resident output block on the first reduction step.
    # Only core-split 0 carries the lambda * im term (others hold partial sums).
    @pl.when(g == 0)
    def _():
        scale = jnp.where(s == 0, lam, 0.0)
        out_ref[0, 0, 0] = scale * im_r
        out_ref[0, 0, 1] = scale * im_i

    smap_blk = smap_ref[0]                   # (G, 2, Mp, Np)
    sr = smap_blk[:, 0]
    si = smap_blk[:, 1]
    G, Mp, Np = sr.shape

    def col_dft(ar, ai):
        # (ar + i*ai) @ A_N^T  -- coil-batched wide matmuls, f32 accumulation
        a_r = ar.reshape(G * Mp, Np).astype(cdt)
        a_i = ai.reshape(G * Mp, Np).astype(cdt)
        br = (jnp.dot(a_r, ANrT, preferred_element_type=f32)
              - jnp.dot(a_i, ANiT, preferred_element_type=f32))
        bi = (jnp.dot(a_r, ANiT, preferred_element_type=f32)
              + jnp.dot(a_i, ANrT, preferred_element_type=f32))
        return br.reshape(G, Mp, Np), bi.reshape(G, Mp, Np)

    # Coil images  X = im * S  (elementwise complex product, all coils at once)
    xr = im_r[None] * sr - im_i[None] * si
    xi = im_r[None] * si + im_i[None] * sr

    # Column DFT for the whole coil group:  W = X @ A_N^T
    wr, wi = col_dft(xr, xi)
    wr_s[...] = wr
    wi_s[...] = wi

    # Per-coil middle section (rolled loop bounds live ranges to one coil):
    #   K  = A_M @ W            (row DFT)
    #   K' = K * mask
    #   V  = A_M @ conj(K')     (row IDFT via conjugate reuse; final conj later)
    # results are written back in place into the W scratch slabs.
    @pl.loop(0, G)
    def _(c):
        w_r = wr_s[c].astype(cdt)
        w_i = wi_s[c].astype(cdt)
        kr = (jnp.dot(AMr, w_r, preferred_element_type=f32)
              - jnp.dot(AMi, w_i, preferred_element_type=f32))
        ki = (jnp.dot(AMr, w_i, preferred_element_type=f32)
              + jnp.dot(AMi, w_r, preferred_element_type=f32))
        kr = (kr * m_r).astype(cdt)
        ki = (ki * m_i).astype(cdt)
        vr = (jnp.dot(AMr, kr, preferred_element_type=f32)
              + jnp.dot(AMi, ki, preferred_element_type=f32))
        vi = (jnp.dot(AMi, kr, preferred_element_type=f32)
              - jnp.dot(AMr, ki, preferred_element_type=f32))
        wr_s[c] = vr
        wi_s[c] = vi

    # Column IDFT for the whole group:  U' = V @ A_N^T ;  U = conj(U')
    ur, ui = col_dft(wr_s[...], wi_s[...])

    # Accumulate  U * conj(S)  over the coils of this group.
    acc_r = jnp.sum(ur * sr - ui * si, axis=0)
    acc_i = -jnp.sum(ui * sr + ur * si, axis=0)

    out_ref[0, 0, 0] += acc_r
    out_ref[0, 0, 1] += acc_i


def opata_pallas(im, mask, smap, lambda1, *, compute_dtype=jnp.bfloat16,
                 coil_group=None, core_splits=1, align=128):
    B, C, two, M, N = smap.shape
    assert two == 2
    assert im.shape == (B, 2, M, N)
    assert mask.shape == (B, 2, M, N)

    # Lane/MXU alignment: zero-pad spatial dims (exact -- padded DFT matrices
    # keep padded rows/cols of every intermediate at zero; sliced off at the end).
    align = int(align) if align else 1
    Mp = _round_up(M, max(align, 8))
    Np = _round_up(N, max(align, 128))

    f32 = jnp.float32
    im_p, mask_p, smap_p = im.astype(f32), mask.astype(f32), smap.astype(f32)
    if (Mp, Np) != (M, N):
        pm, pn = Mp - M, Np - N
        im_p = jnp.pad(im_p, ((0, 0), (0, 0), (0, pm), (0, pn)))
        mask_p = jnp.pad(mask_p, ((0, 0), (0, 0), (0, pm), (0, pn)))
        smap_p = jnp.pad(smap_p, ((0, 0), (0, 0), (0, 0), (0, pm), (0, pn)))

    cdt = jnp.dtype(compute_dtype)
    A_M = _centered_dft_matrix(M, Mp)
    A_N = _centered_dft_matrix(N, Np)
    mats = [jnp.asarray(A_M.real, cdt), jnp.asarray(A_M.imag, cdt),
            jnp.asarray(A_N.real.T, cdt), jnp.asarray(A_N.imag.T, cdt)]

    # Generation-aware scoped-VMEM budget (v5e/v6e: 128 MiB phys, v7x: 64 MiB).
    vmem_cap = (_physical_vmem_bytes() * 3) // 4

    S = int(core_splits)
    assert C % S == 0, "core_splits must divide num_coil"
    coils_per_split = C // S
    if coil_group is None:
        coil_group = _auto_coil_group(coils_per_split, Mp, Np, cdt.itemsize, vmem_cap)
    assert coils_per_split % coil_group == 0, \
        "coil_group must divide num_coil // core_splits"
    g_steps = coils_per_split // coil_group

    lam_arr = jnp.full((1,), lambda1, dtype=f32)

    grid_spec = pltpu.PrefetchScalarGridSpec(
        num_scalar_prefetch=0,
        grid=(S, B, g_steps),                      # coil-group (reduction) axis last
        in_specs=[
            pl.BlockSpec(memory_space=pltpu.MemorySpace.SMEM),             # lambda1
            pl.BlockSpec((1, 2, Mp, Np), lambda s, b, g: (b, 0, 0, 0)),    # im
            pl.BlockSpec((1, coil_group, 2, Mp, Np),
                         lambda s, b, g: (b, s * g_steps + g, 0, 0, 0)),   # Smap slab
            pl.BlockSpec((1, 2, Mp, Np), lambda s, b, g: (b, 0, 0, 0)),    # mask
        ] + [_single_buffered_spec(m.shape, lambda s, b, g: (0, 0)) for m in mats],
        out_specs=pl.BlockSpec((1, 1, 2, Mp, Np),
                               lambda s, b, g: (s, b, 0, 0, 0)),
        scratch_shapes=[pltpu.VMEM((coil_group, Mp, Np), f32),
                        pltpu.VMEM((coil_group, Mp, Np), f32)],
    )

    partial = pl.pallas_call(
        functools.partial(_opata_kernel, cdt=cdt),
        out_shape=jax.ShapeDtypeStruct((S, B, 2, Mp, Np), f32),
        grid_spec=grid_spec,
        compiler_params=pltpu.CompilerParams(
            dimension_semantics=("parallel", "parallel", "arbitrary"),
            vmem_limit_bytes=int(vmem_cap)),
    )(lam_arr, im_p, smap_p, mask_p, *mats)

    out = partial[0] if S == 1 else partial.sum(axis=0)
    return out[..., :M, :N]


def opata_reference(im, mask, smap, lambda1):
    """Pure-JAX reference mirroring the PyTorch forward."""
    B, C, _, M, N = smap.shape
    im_coil = jnp.broadcast_to(im[:, None], (B, C, 2, M, N))
    xr = im_coil[:, :, 0] * smap[:, :, 0] - im_coil[:, :, 1] * smap[:, :, 1]
    xi = im_coil[:, :, 0] * smap[:, :, 1] + im_coil[:, :, 1] * smap[:, :, 0]
    x = xr + 1j * xi
    k = jnp.fft.fftshift(
        jnp.fft.fft2(jnp.fft.ifftshift(x, axes=(-2, -1)),
                     axes=(-2, -1), norm="ortho"), axes=(-2, -1))
    kr = k.real * mask[:, None, 0]
    ki = k.imag * mask[:, None, 1]
    u = jnp.fft.fftshift(
        jnp.fft.ifft2(jnp.fft.ifftshift(kr + 1j * ki, axes=(-2, -1)),
                      axes=(-2, -1), norm="ortho"), axes=(-2, -1))
    vr = u.real * smap[:, :, 0] + u.imag * smap[:, :, 1]
    vi = u.imag * smap[:, :, 0] - u.real * smap[:, :, 1]
    out_r = vr.sum(1) + lambda1 * im[:, 0]
    out_i = vi.sum(1) + lambda1 * im[:, 1]
    return jnp.stack([out_r, out_i], axis=1)


if __name__ == "__main__":
    B, C, M, N = 2, 4, 16, 16
    lambda1 = 0.05

    key = jax.random.PRNGKey(0)
    k1, k2, k3 = jax.random.split(key, 3)
    im = jax.random.normal(k1, (B, 2, M, N), dtype=jnp.float32)
    smap = jax.random.normal(k2, (B, C, 2, M, N), dtype=jnp.float32) * 0.5
    # binary k-space mask, identical for real/imag channels (typical usage)
    mask_1ch = (jax.random.uniform(k3, (B, 1, M, N)) > 0.4).astype(jnp.float32)
    mask = jnp.broadcast_to(mask_1ch, (B, 2, M, N)).astype(jnp.float32)

    ref = opata_reference(im, mask, smap, lambda1)

    # Default fast path: bf16 MXU matmuls, auto coil grouping, 128-aligned padding.
    out_bf16 = jax.block_until_ready(opata_pallas(im, mask, smap, lambda1))
    assert out_bf16.shape == (B, 2, M, N)
    err_bf16 = float(jnp.max(jnp.abs(out_bf16 - ref)))
    assert jnp.allclose(out_bf16, ref, atol=3e-2, rtol=3e-2), err_bf16

    # Exact f32 path + explicit coil grouping + 2-way core split (v7x megacore).
    out_f32 = jax.block_until_ready(
        opata_pallas(im, mask, smap, lambda1, compute_dtype=jnp.float32,
                     coil_group=2, core_splits=2))
    err_f32 = float(jnp.max(jnp.abs(out_f32 - ref)))
    assert jnp.allclose(out_f32, ref, atol=1e-3, rtol=1e-3), err_f32

    print("KERNEL_OK")
</pallas_src>

<mosaic_0001>
module attributes {stable_mosaic.version = 11 : i64} {
  func.func @_opata_kernel(%arg0: i32, %arg1: i32, %arg2: i32, %arg3: memref<1xf32, #tpu.memory_space<smem>>, %arg4: memref<1x2x128x128xf32, #tpu.memory_space<vmem>>, %arg5: memref<1x4x2x128x128xf32, #tpu.memory_space<vmem>>, %arg6: memref<1x2x128x128xf32, #tpu.memory_space<vmem>>, %arg7: memref<128x128xbf16, #tpu.memory_space<vmem>>, %arg8: memref<128x128xbf16, #tpu.memory_space<vmem>>, %arg9: memref<128x128xbf16, #tpu.memory_space<vmem>>, %arg10: memref<128x128xbf16, #tpu.memory_space<vmem>>, %arg11: memref<1x1x2x128x128xf32, #tpu.memory_space<vmem>>, %arg12: memref<4x128x128xf32, #tpu.memory_space<vmem>>, %arg13: memref<4x128x128xf32, #tpu.memory_space<vmem>>) attributes {dimension_semantics = [#tpu.dimension_semantics<parallel>, #tpu.dimension_semantics<parallel>, #tpu.dimension_semantics<arbitrary>], iteration_bounds = array<i64: 1, 2, 1>, scalar_prefetch = 0 : i64, scratch_operands = 2 : i64, tpu.core_type = #tpu.core_type<tc>, window_params = [{transform_indices = @transform_0, window_bounds = array<i64: 1>}, {transform_indices = @transform_1, window_bounds = array<i64: 1, 2, 128, 128>}, {transform_indices = @transform_2, window_bounds = array<i64: 1, 4, 2, 128, 128>}, {transform_indices = @transform_3, window_bounds = array<i64: 1, 2, 128, 128>}, {pipeline_mode = #tpu.pipeline_mode<synchronous>, transform_indices = @transform_4, window_bounds = array<i64: 128, 128>}, {pipeline_mode = #tpu.pipeline_mode<synchronous>, transform_indices = @transform_5, window_bounds = array<i64: 128, 128>}, {pipeline_mode = #tpu.pipeline_mode<synchronous>, transform_indices = @transform_6, window_bounds = array<i64: 128, 128>}, {pipeline_mode = #tpu.pipeline_mode<synchronous>, transform_indices = @transform_7, window_bounds = array<i64: 128, 128>}, {transform_indices = @transform_8, window_bounds = array<i64: 1, 1, 2, 128, 128>}]} {
    %c0 = arith.constant 0 : index
    %0 = memref.load %arg3[%c0] : memref<1xf32, #tpu.memory_space<smem>>
    %c0_0 = arith.constant 0 : index
    %c0_1 = arith.constant 0 : index
    %c0_2 = arith.constant 0 : index
    %c0_3 = arith.constant 0 : index
    %1 = vector.load %arg4[%c0_0, %c0_1, %c0_2, %c0_3] : memref<1x2x128x128xf32, #tpu.memory_space<vmem>>, vector<1x2x128x128xf32>
    %2 = vector.shape_cast %1 : vector<1x2x128x128xf32> to vector<2x128x128xf32>
    %3 = vector.extract_strided_slice %2 {offsets = [0, 0, 0], sizes = [1, 128, 128], strides = [1, 1, 1]} : vector<2x128x128xf32> to vector<1x128x128xf32>
    %4 = vector.shape_cast %3 : vector<1x128x128xf32> to vector<128x128xf32>
    %5 = vector.extract_strided_slice %2 {offsets = [1, 0, 0], sizes = [1, 128, 128], strides = [1, 1, 1]} : vector<2x128x128xf32> to vector<1x128x128xf32>
    %6 = vector.shape_cast %5 : vector<1x128x128xf32> to vector<128x128xf32>
    %c0_4 = arith.constant 0 : index
    %c0_5 = arith.constant 0 : index
    %c0_6 = arith.constant 0 : index
    %c0_7 = arith.constant 0 : index
    %7 = vector.load %arg6[%c0_4, %c0_5, %c0_6, %c0_7] : memref<1x2x128x128xf32, #tpu.memory_space<vmem>>, vector<1x2x128x128xf32>
    %8 = vector.shape_cast %7 : vector<1x2x128x128xf32> to vector<2x128x128xf32>
    %9 = vector.extract_strided_slice %8 {offsets = [0, 0, 0], sizes = [1, 128, 128], strides = [1, 1, 1]} : vector<2x128x128xf32> to vector<1x128x128xf32>
    %10 = vector.shape_cast %9 : vector<1x128x128xf32> to vector<128x128xf32>
    %11 = vector.extract_strided_slice %8 {offsets = [1, 0, 0], sizes = [1, 128, 128], strides = [1, 1, 1]} : vector<2x128x128xf32> to vector<1x128x128xf32>
    %12 = vector.shape_cast %11 : vector<1x128x128xf32> to vector<128x128xf32>
    %c0_8 = arith.constant 0 : index
    %c0_9 = arith.constant 0 : index
    %13 = vector.load %arg7[%c0_8, %c0_9] : memref<128x128xbf16, #tpu.memory_space<vmem>>, vector<128x128xbf16>
    %c0_10 = arith.constant 0 : index
    %c0_11 = arith.constant 0 : index
    %14 = vector.load %arg8[%c0_10, %c0_11] : memref<128x128xbf16, #tpu.memory_space<vmem>>, vector<128x128xbf16>
    %c0_12 = arith.constant 0 : index
    %c0_13 = arith.constant 0 : index
    %15 = vector.load %arg9[%c0_12, %c0_13] : memref<128x128xbf16, #tpu.memory_space<vmem>>, vector<128x128xbf16>
    %c0_14 = arith.constant 0 : index
    %c0_15 = arith.constant 0 : index
    %16 = vector.load %arg10[%c0_14, %c0_15] : memref<128x128xbf16, #tpu.memory_space<vmem>>, vector<128x128xbf16>
    %c0_i32 = arith.constant 0 : i32
    %17 = arith.cmpi eq, %arg2, %c0_i32 : i32
    %18 = arith.extui %17 : i1 to i32
    %c0_i32_16 = arith.constant 0 : i32
    %19 = arith.cmpi ne, %18, %c0_i32_16 : i32
    scf.if %19 {
      %c0_i32_65 = arith.constant 0 : i32
      %91 = arith.cmpi eq, %arg0, %c0_i32_65 : i32
      %cst_66 = arith.constant 0.000000e+00 : f32
      %92 = arith.select %91, %0, %cst_66 : f32
      %93 = vector.broadcast %92 : f32 to vector<128x128xf32>
      %94 = arith.mulf %93, %4 : vector<128x128xf32>
      %c0_67 = arith.constant 0 : index
      %c0_68 = arith.constant 0 : index
      %c0_69 = arith.constant 0 : index
      %c0_70 = arith.constant 0 : index
      %c0_71 = arith.constant 0 : index
      %95 = vector.load %arg11[%c0_67, %c0_68, %c0_69, %c0_70, %c0_71] : memref<1x1x2x128x128xf32, #tpu.memory_space<vmem>>, vector<1x1x1x128x128xf32>
      %96 = vector.shape_cast %95 : vector<1x1x1x128x128xf32> to vector<128x128xf32>
      %97 = vector.shape_cast %94 : vector<128x128xf32> to vector<1x1x1x128x128xf32>
      tpu.vector_store %arg11[%c0_67, %c0_68, %c0_69, %c0_70, %c0_71], %97 {strides = array<i32>} : memref<1x1x2x128x128xf32, #tpu.memory_space<vmem>>, vector<1x1x1x128x128xf32>,
      %98 = vector.broadcast %92 : f32 to vector<128x128xf32>
      %99 = arith.mulf %98, %6 : vector<128x128xf32>
      %c0_72 = arith.constant 0 : index
      %c0_73 = arith.constant 0 : index
      %c1_74 = arith.constant 1 : index
      %c0_75 = arith.constant 0 : index
      %c0_76 = arith.constant 0 : index
      %100 = vector.load %arg11[%c0_72, %c0_73, %c1_74, %c0_75, %c0_76] : memref<1x1x2x128x128xf32, #tpu.memory_space<vmem>>, vector<1x1x1x128x128xf32>
      %101 = vector.shape_cast %100 : vector<1x1x1x128x128xf32> to vector<128x128xf32>
      %102 = vector.shape_cast %99 : vector<128x128xf32> to vector<1x1x1x128x128xf32>
      tpu.vector_store %arg11[%c0_72, %c0_73, %c1_74, %c0_75, %c0_76], %102 {strides = array<i32>} : memref<1x1x2x128x128xf32, #tpu.memory_space<vmem>>, vector<1x1x1x128x128xf32>,
    } else {
    }
    %c0_17 = arith.constant 0 : index
    %c0_18 = arith.constant 0 : index
    %c0_19 = arith.constant 0 : index
    %c0_20 = arith.constant 0 : index
    %c0_21 = arith.constant 0 : index
    %20 = vector.load %arg5[%c0_17, %c0_18, %c0_19, %c0_20, %c0_21] : memref<1x4x2x128x128xf32, #tpu.memory_space<vmem>>, vector<1x4x2x128x128xf32>
    %21 = vector.shape_cast %20 : vector<1x4x2x128x128xf32> to vector<4x2x128x128xf32>
    %22 = vector.extract_strided_slice %21 {offsets = [0, 0, 0, 0], sizes = [4, 1, 128, 128], strides = [1, 1, 1, 1]} : vector<4x2x128x128xf32> to vector<4x1x128x128xf32>
    %23 = vector.shape_cast %22 : vector<4x1x128x128xf32> to vector<4x128x128xf32>
    %24 = vector.extract_strided_slice %21 {offsets = [0, 1, 0, 0], sizes = [4, 1, 128, 128], strides = [1, 1, 1, 1]} : vector<4x2x128x128xf32> to vector<4x1x128x128xf32>
    %25 = vector.shape_cast %24 : vector<4x1x128x128xf32> to vector<4x128x128xf32>
    %26 = vector.shape_cast %4 : vector<128x128xf32> to vector<1x128x128xf32>
    %27 = vector.broadcast %26 : vector<1x128x128xf32> to vector<4x128x128xf32>
    %28 = arith.mulf %27, %23 : vector<4x128x128xf32>
    %29 = vector.shape_cast %6 : vector<128x128xf32> to vector<1x128x128xf32>
    %30 = vector.broadcast %29 : vector<1x128x128xf32> to vector<4x128x128xf32>
    %31 = arith.mulf %30, %25 : vector<4x128x128xf32>
    %32 = arith.subf %28, %31 : vector<4x128x128xf32>
    %33 = vector.shape_cast %4 : vector<128x128xf32> to vector<1x128x128xf32>
    %34 = vector.broadcast %33 : vector<1x128x128xf32> to vector<4x128x128xf32>
    %35 = arith.mulf %34, %25 : vector<4x128x128xf32>
    %36 = vector.shape_cast %6 : vector<128x128xf32> to vector<1x128x128xf32>
    %37 = vector.broadcast %36 : vector<1x128x128xf32> to vector<4x128x128xf32>
    %38 = arith.mulf %37, %23 : vector<4x128x128xf32>
    %39 = arith.addf %35, %38 : vector<4x128x128xf32>
    %40 = vector.shape_cast %32 : vector<4x128x128xf32> to vector<512x128xf32>
    %41 = arith.truncf %40 : vector<512x128xf32> to vector<512x128xbf16>
    %42 = vector.shape_cast %39 : vector<4x128x128xf32> to vector<512x128xf32>
    %43 = arith.truncf %42 : vector<512x128xf32> to vector<512x128xbf16>
    %cst = arith.constant dense<0.000000e+00> : vector<512x128xf32>
    %44 = tpu.matmul %41, %15, %cst {dimension_numbers = #tpu.dot_dimension_numbers<[1], [0], [0], [1], [0, 0, 1, 1], [], []>} : vector<512x128xbf16>, vector<128x128xbf16>, vector<512x128xf32> -> vector<512x128xf32>
    %cst_22 = arith.constant dense<0.000000e+00> : vector<512x128xf32>
    %45 = tpu.matmul %43, %16, %cst_22 {dimension_numbers = #tpu.dot_dimension_numbers<[1], [0], [0], [1], [0, 0, 1, 1], [], []>} : vector<512x128xbf16>, vector<128x128xbf16>, vector<512x128xf32> -> vector<512x128xf32>
    %46 = arith.subf %44, %45 : vector<512x128xf32>
    %cst_23 = arith.constant dense<0.000000e+00> : vector<512x128xf32>
    %47 = tpu.matmul %41, %16, %cst_23 {dimension_numbers = #tpu.dot_dimension_numbers<[1], [0], [0], [1], [0, 0, 1, 1], [], []>} : vector<512x128xbf16>, vector<128x128xbf16>, vector<512x128xf32> -> vector<512x128xf32>
    %cst_24 = arith.constant dense<0.000000e+00> : vector<512x128xf32>
    %48 = tpu.matmul %43, %15, %cst_24 {dimension_numbers = #tpu.dot_dimension_numbers<[1], [0], [0], [1], [0, 0, 1, 1], [], []>} : vector<512x128xbf16>, vector<128x128xbf16>, vector<512x128xf32> -> vector<512x128xf32>
    %49 = arith.addf %47, %48 : vector<512x128xf32>
    %50 = vector.shape_cast %46 : vector<512x128xf32> to vector<4x128x128xf32>
    %51 = vector.shape_cast %49 : vector<512x128xf32> to vector<4x128x128xf32>
    %c0_25 = arith.constant 0 : index
    %c0_26 = arith.constant 0 : index
    %c0_27 = arith.constant 0 : index
    %52 = vector.load %arg12[%c0_25, %c0_26, %c0_27] : memref<4x128x128xf32, #tpu.memory_space<vmem>>, vector<4x128x128xf32>
    tpu.vector_store %arg12[%c0_25, %c0_26, %c0_27], %50 {strides = array<i32>} : memref<4x128x128xf32, #tpu.memory_space<vmem>>, vector<4x128x128xf32>,
    %c0_28 = arith.constant 0 : index
    %c0_29 = arith.constant 0 : index
    %c0_30 = arith.constant 0 : index
    %53 = vector.load %arg13[%c0_28, %c0_29, %c0_30] : memref<4x128x128xf32, #tpu.memory_space<vmem>>, vector<4x128x128xf32>
    tpu.vector_store %arg13[%c0_28, %c0_29, %c0_30], %51 {strides = array<i32>} : memref<4x128x128xf32, #tpu.memory_space<vmem>>, vector<4x128x128xf32>,
    %c0_i32_31 = arith.constant 0 : i32
    %c4_i32 = arith.constant 4 : i32
    %54 = arith.addi %c0_i32_31, %c4_i32 : i32
    %c1_i32 = arith.constant 1 : i32
    scf.for %arg14 = %c0_i32_31 to %54 step %c1_i32  : i32 {
      %c1_i32_65 = arith.constant 1 : i32
      %91 = arith.muli %arg14, %c1_i32_65 : i32
      %c0_i32_66 = arith.constant 0 : i32
      %92 = arith.addi %c0_i32_66, %91 : i32
      %93 = arith.index_cast %92 : i32 to index
      %c0_67 = arith.constant 0 : index
      %c0_68 = arith.constant 0 : index
      %94 = vector.load %arg12[%93, %c0_67, %c0_68] : memref<4x128x128xf32, #tpu.memory_space<vmem>>, vector<1x128x128xf32>
      %95 = vector.shape_cast %94 : vector<1x128x128xf32> to vector<128x128xf32>
      %96 = arith.truncf %95 : vector<128x128xf32> to vector<128x128xbf16>
      %97 = arith.index_cast %92 : i32 to index
      %c0_69 = arith.constant 0 : index
      %c0_70 = arith.constant 0 : index
      %98 = vector.load %arg13[%97, %c0_69, %c0_70] : memref<4x128x128xf32, #tpu.memory_space<vmem>>, vector<1x128x128xf32>
      %99 = vector.shape_cast %98 : vector<1x128x128xf32> to vector<128x128xf32>
      %100 = arith.truncf %99 : vector<128x128xf32> to vector<128x128xbf16>
      %cst_71 = arith.constant dense<0.000000e+00> : vector<128x128xf32>
      %101 = tpu.matmul %13, %96, %cst_71 {dimension_numbers = #tpu.dot_dimension_numbers<[1], [0], [0], [1], [0, 0, 1, 1], [], []>} : vector<128x128xbf16>, vector<128x128xbf16>, vector<128x128xf32> -> vector<128x128xf32>
      %cst_72 = arith.constant dense<0.000000e+00> : vector<128x128xf32>
      %102 = tpu.matmul %14, %100, %cst_72 {dimension_numbers = #tpu.dot_dimension_numbers<[1], [0], [0], [1], [0, 0, 1, 1], [], []>} : vector<128x128xbf16>, vector<128x128xbf16>, vector<128x128xf32> -> vector<128x128xf32>
      %103 = arith.subf %101, %102 : vector<128x128xf32>
      %cst_73 = arith.constant dense<0.000000e+00> : vector<128x128xf32>
      %104 = tpu.matmul %13, %100, %cst_73 {dimension_numbers = #tpu.dot_dimension_numbers<[1], [0], [0], [1], [0, 0, 1, 1], [], []>} : vector<128x128xbf16>, vector<128x128xbf16>, vector<128x128xf32> -> vector<128x128xf32>
      %cst_74 = arith.constant dense<0.000000e+00> : vector<128x128xf32>
      %105 = tpu.matmul %14, %96, %cst_74 {dimension_numbers = #tpu.dot_dimension_numbers<[1], [0], [0], [1], [0, 0, 1, 1], [], []>} : vector<128x128xbf16>, vector<128x128xbf16>, vector<128x128xf32> -> vector<128x128xf32>
      %106 = arith.addf %104, %105 : vector<128x128xf32>
      %107 = arith.mulf %103, %10 : vector<128x128xf32>
      %108 = arith.truncf %107 : vector<128x128xf32> to vector<128x128xbf16>
      %109 = arith.mulf %106, %12 : vector<128x128xf32>
      %110 = arith.truncf %109 : vector<128x128xf32> to vector<128x128xbf16>
      %cst_75 = arith.constant dense<0.000000e+00> : vector<128x128xf32>
      %111 = tpu.matmul %13, %108, %cst_75 {dimension_numbers = #tpu.dot_dimension_numbers<[1], [0], [0], [1], [0, 0, 1, 1], [], []>} : vector<128x128xbf16>, vector<128x128xbf16>, vector<128x128xf32> -> vector<128x128xf32>
      %cst_76 = arith.constant dense<0.000000e+00> : vector<128x128xf32>
      %112 = tpu.matmul %14, %110, %cst_76 {dimension_numbers = #tpu.dot_dimension_numbers<[1], [0], [0], [1], [0, 0, 1, 1], [], []>} : vector<128x128xbf16>, vector<128x128xbf16>, vector<128x128xf32> -> vector<128x128xf32>
      %113 = arith.addf %111, %112 : vector<128x128xf32>
      %cst_77 = arith.constant dense<0.000000e+00> : vector<128x128xf32>
      %114 = tpu.matmul %14, %108, %cst_77 {dimension_numbers = #tpu.dot_dimension_numbers<[1], [0], [0], [1], [0, 0, 1, 1], [], []>} : vector<128x128xbf16>, vector<128x128xbf16>, vector<128x128xf32> -> vector<128x128xf32>
      %cst_78 = arith.constant dense<0.000000e+00> : vector<128x128xf32>
      %115 = tpu.matmul %13, %110, %cst_78 {dimension_numbers = #tpu.dot_dimension_numbers<[1], [0], [0], [1], [0, 0, 1, 1], [], []>} : vector<128x128xbf16>, vector<128x128xbf16>, vector<128x128xf32> -> vector<128x128xf32>
      %116 = arith.subf %114, %115 : vector<128x128xf32>
      %117 = arith.index_cast %92 : i32 to index
      %c0_79 = arith.constant 0 : index
      %c0_80 = arith.constant 0 : index
      %118 = vector.load %arg12[%117, %c0_79, %c0_80] : memref<4x128x128xf32, #tpu.memory_space<vmem>>, vector<1x128x128xf32>
      %119 = vector.shape_cast %118 : vector<1x128x128xf32> to vector<128x128xf32>
      %120 = vector.shape_cast %113 : vector<128x128xf32> to vector<1x128x128xf32>
      tpu.vector_store %arg12[%117, %c0_79, %c0_80], %120 {strides = array<i32>} : memref<4x128x128xf32, #tpu.memory_space<vmem>>, vector<1x128x128xf32>,
      %121 = arith.index_cast %92 : i32 to index
      %c0_81 = arith.constant 0 : index
      %c0_82 = arith.constant 0 : index
      %122 = vector.load %arg13[%121, %c0_81, %c0_82] : memref<4x128x128xf32, #tpu.memory_space<vmem>>, vector<1x128x128xf32>
      %123 = vector.shape_cast %122 : vector<1x128x128xf32> to vector<128x128xf32>
      %124 = vector.shape_cast %116 : vector<128x128xf32> to vector<1x128x128xf32>
      tpu.vector_store %arg13[%121, %c0_81, %c0_82], %124 {strides = array<i32>} : memref<4x128x128xf32, #tpu.memory_space<vmem>>, vector<1x128x128xf32>,
    }
    %c4_i32_32 = arith.constant 4 : i32
    %c0_33 = arith.constant 0 : index
    %c0_34 = arith.constant 0 : index
    %c0_35 = arith.constant 0 : index
    %55 = vector.load %arg12[%c0_33, %c0_34, %c0_35] : memref<4x128x128xf32, #tpu.memory_space<vmem>>, vector<4x128x128xf32>
    %c0_36 = arith.constant 0 : index
    %c0_37 = arith.constant 0 : index
    %c0_38 = arith.constant 0 : index
    %56 = vector.load %arg13[%c0_36, %c0_37, %c0_38] : memref<4x128x128xf32, #tpu.memory_space<vmem>>, vector<4x128x128xf32>
    %57 = vector.shape_cast %55 : vector<4x128x128xf32> to vector<512x128xf32>
    %58 = arith.truncf %57 : vector<512x128xf32> to vector<512x128xbf16>
    %59 = vector.shape_cast %56 : vector<4x128x128xf32> to vector<512x128xf32>
    %60 = arith.truncf %59 : vector<512x128xf32> to vector<512x128xbf16>
    %cst_39 = arith.constant dense<0.000000e+00> : vector<512x128xf32>
    %61 = tpu.matmul %58, %15, %cst_39 {dimension_numbers = #tpu.dot_dimension_numbers<[1], [0], [0], [1], [0, 0, 1, 1], [], []>} : vector<512x128xbf16>, vector<128x128xbf16>, vector<512x128xf32> -> vector<512x128xf32>
    %cst_40 = arith.constant dense<0.000000e+00> : vector<512x128xf32>
    %62 = tpu.matmul %60, %16, %cst_40 {dimension_numbers = #tpu.dot_dimension_numbers<[1], [0], [0], [1], [0, 0, 1, 1], [], []>} : vector<512x128xbf16>, vector<128x128xbf16>, vector<512x128xf32> -> vector<512x128xf32>
    %63 = arith.subf %61, %62 : vector<512x128xf32>
    %cst_41 = arith.constant dense<0.000000e+00> : vector<512x128xf32>
    %64 = tpu.matmul %58, %16, %cst_41 {dimension_numbers = #tpu.dot_dimension_numbers<[1], [0], [0], [1], [0, 0, 1, 1], [], []>} : vector<512x128xbf16>, vector<128x128xbf16>, vector<512x128xf32> -> vector<512x128xf32>
    %cst_42 = arith.constant dense<0.000000e+00> : vector<512x128xf32>
    %65 = tpu.matmul %60, %15, %cst_42 {dimension_numbers = #tpu.dot_dimension_numbers<[1], [0], [0], [1], [0, 0, 1, 1], [], []>} : vector<512x128xbf16>, vector<128x128xbf16>, vector<512x128xf32> -> vector<512x128xf32>
    %66 = arith.addf %64, %65 : vector<512x128xf32>
    %67 = vector.shape_cast %63 : vector<512x128xf32> to vector<4x128x128xf32>
    %68 = vector.shape_cast %66 : vector<512x128xf32> to vector<4x128x128xf32>
    %69 = arith.mulf %67, %23 : vector<4x128x128xf32>
    %70 = arith.mulf %68, %25 : vector<4x128x128xf32>
    %71 = arith.subf %69, %70 : vector<4x128x128xf32>
    %cst_43 = arith.constant dense<0.000000e+00> : vector<128x128xf32>
    %72 = vector.multi_reduction <add>, %71, %cst_43 [0] : vector<4x128x128xf32> to vector<128x128xf32>
    %73 = arith.mulf %68, %23 : vector<4x128x128xf32>
    %74 = arith.mulf %67, %25 : vector<4x128x128xf32>
    %75 = arith.addf %73, %74 : vector<4x128x128xf32>
    %cst_44 = arith.constant dense<0.000000e+00> : vector<128x128xf32>
    %76 = vector.multi_reduction <add>, %75, %cst_44 [0] : vector<4x128x128xf32> to vector<128x128xf32>
    %cst_45 = arith.constant 0.000000e+00 : f32
    %77 = vector.broadcast %cst_45 : f32 to vector<128x128xf32>
    %78 = arith.subf %77, %76 : vector<128x128xf32>
    %c0_46 = arith.constant 0 : index
    %c0_47 = arith.constant 0 : index
    %c0_48 = arith.constant 0 : index
    %c0_49 = arith.constant 0 : index
    %c0_50 = arith.constant 0 : index
    %79 = vector.load %arg11[%c0_46, %c0_47, %c0_48, %c0_49, %c0_50] : memref<1x1x2x128x128xf32, #tpu.memory_space<vmem>>, vector<1x1x1x128x128xf32>
    %80 = vector.shape_cast %79 : vector<1x1x1x128x128xf32> to vector<128x128xf32>
    %81 = arith.addf %80, %72 : vector<128x128xf32>
    %c0_51 = arith.constant 0 : index
    %c0_52 = arith.constant 0 : index
    %c0_53 = arith.constant 0 : index
    %c0_54 = arith.constant 0 : index
    %c0_55 = arith.constant 0 : index
    %82 = vector.load %arg11[%c0_51, %c0_52, %c0_53, %c0_54, %c0_55] : memref<1x1x2x128x128xf32, #tpu.memory_space<vmem>>, vector<1x1x1x128x128xf32>
    %83 = vector.shape_cast %82 : vector<1x1x1x128x128xf32> to vector<128x128xf32>
    %84 = vector.shape_cast %81 : vector<128x128xf32> to vector<1x1x1x128x128xf32>
    tpu.vector_store %arg11[%c0_51, %c0_52, %c0_53, %c0_54, %c0_55], %84 {strides = array<i32>} : memref<1x1x2x128x128xf32, #tpu.memory_space<vmem>>, vector<1x1x1x128x128xf32>,
    %c0_56 = arith.constant 0 : index
    %c0_57 = arith.constant 0 : index
    %c1 = arith.constant 1 : index
    %c0_58 = arith.constant 0 : index
    %c0_59 = arith.constant 0 : index
    %85 = vector.load %arg11[%c0_56, %c0_57, %c1, %c0_58, %c0_59] : memref<1x1x2x128x128xf32, #tpu.memory_space<vmem>>, vector<1x1x1x128x128xf32>
    %86 = vector.shape_cast %85 : vector<1x1x1x128x128xf32> to vector<128x128xf32>
    %87 = arith.addf %86, %78 : vector<128x128xf32>
    %c0_60 = arith.constant 0 : index
    %c0_61 = arith.constant 0 : index
    %c1_62 = arith.constant 1 : index
    %c0_63 = arith.constant 0 : index
    %c0_64 = arith.constant 0 : index
    %88 = vector.load %arg11[%c0_60, %c0_61, %c1_62, %c0_63, %c0_64] : memref<1x1x2x128x128xf32, #tpu.memory_space<vmem>>, vector<1x1x1x128x128xf32>
    %89 = vector.shape_cast %88 : vector<1x1x1x128x128xf32> to vector<128x128xf32>
    %90 = vector.shape_cast %87 : vector<128x128xf32> to vector<1x1x1x128x128xf32>
    tpu.vector_store %arg11[%c0_60, %c0_61, %c1_62, %c0_63, %c0_64], %90 {strides = array<i32>} : memref<1x1x2x128x128xf32, #tpu.memory_space<vmem>>, vector<1x1x1x128x128xf32>,
    return
  }
  func.func @transform_0(%arg0: i32, %arg1: i32, %arg2: i32) -> i32 {
    %c0_i32 = arith.constant 0 : i32
    %c0_i32_0 = arith.constant 0 : i32
    return %c0_i32 : i32
  }
  func.func @transform_1(%arg0: i32, %arg1: i32, %arg2: i32) -> (i32, i32, i32, i32) {
    %c0_i32 = arith.constant 0 : i32
    %c0_i32_0 = arith.constant 0 : i32
    %c0_i32_1 = arith.constant 0 : i32
    %c0_i32_2 = arith.constant 0 : i32
    return %arg1, %c0_i32, %c0_i32_0, %c0_i32_1 : i32, i32, i32, i32
  }
  func.func @transform_2(%arg0: i32, %arg1: i32, %arg2: i32) -> (i32, i32, i32, i32, i32) {
    %c1_i32 = arith.constant 1 : i32
    %0 = arith.muli %arg0, %c1_i32 : i32
    %1 = arith.addi %0, %arg2 : i32
    %c0_i32 = arith.constant 0 : i32
    %c0_i32_0 = arith.constant 0 : i32
    %c0_i32_1 = arith.constant 0 : i32
    %c0_i32_2 = arith.constant 0 : i32
    return %arg1, %1, %c0_i32, %c0_i32_0, %c0_i32_1 : i32, i32, i32, i32, i32
  }
  func.func @transform_3(%arg0: i32, %arg1: i32, %arg2: i32) -> (i32, i32, i32, i32) {
    %c0_i32 = arith.constant 0 : i32
    %c0_i32_0 = arith.constant 0 : i32
    %c0_i32_1 = arith.constant 0 : i32
    %c0_i32_2 = arith.constant 0 : i32
    return %arg1, %c0_i32, %c0_i32_0, %c0_i32_1 : i32, i32, i32, i32
  }
  func.func @transform_4(%arg0: i32, %arg1: i32, %arg2: i32) -> (i32, i32) {
    %c0_i32 = arith.constant 0 : i32
    %c0_i32_0 = arith.constant 0 : i32
    %c0_i32_1 = arith.constant 0 : i32
    return %c0_i32, %c0_i32_0 : i32, i32
  }
  func.func @transform_5(%arg0: i32, %arg1: i32, %arg2: i32) -> (i32, i32) {
    %c0_i32 = arith.constant 0 : i32
    %c0_i32_0 = arith.constant 0 : i32
    %c0_i32_1 = arith.constant 0 : i32
    return %c0_i32, %c0_i32_0 : i32, i32
  }
  func.func @transform_6(%arg0: i32, %arg1: i32, %arg2: i32) -> (i32, i32) {
    %c0_i32 = arith.constant 0 : i32
    %c0_i32_0 = arith.constant 0 : i32
    %c0_i32_1 = arith.constant 0 : i32
    return %c0_i32, %c0_i32_0 : i32, i32
  }
  func.func @transform_7(%arg0: i32, %arg1: i32, %arg2: i32) -> (i32, i32) {
    %c0_i32 = arith.constant 0 : i32
    %c0_i32_0 = arith.constant 0 : i32
    %c0_i32_1 = arith.constant 0 : i32
    return %c0_i32, %c0_i32_0 : i32, i32
  }
  func.func @transform_8(%arg0: i32, %arg1: i32, %arg2: i32) -> (i32, i32, i32, i32, i32) {
    %c0_i32 = arith.constant 0 : i32
    %c0_i32_0 = arith.constant 0 : i32
    %c0_i32_1 = arith.constant 0 : i32
    %c0_i32_2 = arith.constant 0 : i32
    return %arg0, %arg1, %c0_i32, %c0_i32_0, %c0_i32_1 : i32, i32, i32, i32, i32
  }
}

</mosaic_0001>

<llo_original>
// kernel: tpu_custom_call.1
$region0: #{tpu_custom_call.1}
  #allocation0 [shape = 'u32[]', space=smem, size = 0x4, offset = 0x4, fixed_abs, tag = 'smem constant byte address 0x4 - core index']
  #allocation1 [shape = 'u32[72,128]{1,0:T(1,128)}', space=vmem, size = 0x9000, scoped, tag = 'internal scratch']
  #allocation2 [shape = 'f32[4,128,128]{2,1,0:T(8,128)}', space=vmem, size = 0x40000, scoped, tag = 'scratch operand']
  #allocation3 [shape = 'f32[4,128,128]{2,1,0:T(8,128)}', space=vmem, size = 0x40000, scoped, tag = 'scratch operand']
  #allocation4 [shape = 'f32[1]{0:T(128)S(6)}', space=smem, size = 0x200, scoped, tag = 'scoped memory for tpu_custom_call.1']
  %s0 = inlined_call_operand.<no memory space> [shape: f32[1], index: 0, kind: input, shape index: {}]
  %s1 = inlined_call_operand.hbm [shape: f32[2,2,128,128], index: 1, kind: input, shape index: {}]
  %s2 = inlined_call_operand.hbm [shape: f32[2,4,2,128,128], index: 2, kind: input, shape index: {}]
  %s3 = inlined_call_operand.hbm [shape: f32[2,2,128,128], index: 3, kind: input, shape index: {}]
  %s4 = inlined_call_operand.hbm [shape: bf16[128,128], index: 4, kind: input, shape index: {}]
  %s5 = inlined_call_operand.hbm [shape: bf16[128,128], index: 5, kind: input, shape index: {}]
  %s6 = inlined_call_operand.hbm [shape: bf16[128,128], index: 6, kind: input, shape index: {}]
  %s7 = inlined_call_operand.hbm [shape: bf16[128,128], index: 7, kind: input, shape index: {}]
  %s8 = inlined_call_operand.hbm [shape: f32[1,2,2,128,128], index: 8, kind: output, shape index: {}]
  %s9 = sld [smem:[#allocation0]]
  $region104: #{tpu_custom_call.1} parent=0
    _
  %s11 = ssub.s32 1, %s9
  %s12 = scalar_select 0, %s11, %s9
  %13 = sst [smem:[#allocation4]] %s0
  $region1: #{tpu_custom_call.1} parent=0
    #allocation5 [shape = 'u8[262144]{0}', space=vmem, size = 0x40000, scoped, tag = 'input window, operand 1']
    #allocation6 [shape = 's32[2]{0}', space=sflag, size = 0x8, scoped, tag = 'scoped memory for tpu_custom_call.1']
    #allocation7 [shape = 's32[2]{0}', space=sflag, size = 0x8, scoped, tag = 'scoped memory for tpu_custom_call.1']
    #allocation8 [shape = 'u8[1048576]{0}', space=vmem, size = 0x100000, scoped, tag = 'input window, operand 2']
    #allocation9 [shape = 's32[2]{0}', space=sflag, size = 0x8, scoped, tag = 'scoped memory for tpu_custom_call.1']
    #allocation10 [shape = 'u8[262144]{0}', space=vmem, size = 0x40000, scoped, tag = 'input window, operand 3']
    #allocation11 [shape = 'u8[32768]{0}', space=vmem, size = 0x8000, scoped, tag = 'input window, operand 4, single buffered']
    #allocation12 [shape = 's32[1]{0}', space=sflag, size = 0x4, scoped, tag = 'scoped memory for tpu_custom_call.1']
    #allocation13 [shape = 'u8[32768]{0}', space=vmem, size = 0x8000, scoped, tag = 'input window, operand 5, single buffered']
    #allocation14 [shape = 'u8[32768]{0}', space=vmem, size = 0x8000, scoped, tag = 'input window, operand 6, single buffered']
    #allocation15 [shape = 's32[1]{0}', space=sflag, size = 0x4, scoped, tag = 'scoped memory for tpu_custom_call.1']
    #allocation16 [shape = 'u8[32768]{0}', space=vmem, size = 0x8000, scoped, tag = 'input window, operand 7, single buffered']
    #allocation17 [shape = 'u8[262144]{0}', space=vmem, size = 0x40000, scoped, tag = 'output window, operand 0']
    %14 = vsyncpa [#allocation6], 0
    %s15 = scalar_lea.sflag [#allocation6], 1
    %16 = vsyncpa %s15, 0
    %17 = vsyncpa [#allocation9], 0
    %s18 = scalar_lea.sflag [#allocation9], 1
    %19 = vsyncpa %s18, 0
    %20 = vsyncpa [#allocation12], 0
    %21 = vsyncpa [#allocation15], 0
    %22 = vsyncpa [#allocation7], 0
    %s23 = scalar_lea.sflag [#allocation7], 1
    %24 = vsyncpa %s23, 0
    loop: start=0, step=1, limit=4
    $region2: #{tpu_custom_call.1} parent=1 // loop_pre_header
      _
    $region3: #{tpu_custom_call.1} parent=1 // loop_header
      %s26 = sphi 0, %s30
      %p27 = scmp.ge.s32.totalorder %s26, 4
      %s33 = sphi 0, %s52
      %s34 = sphi 0, %s48
      %s35 = sphi 0, %s44
      %s36 = sphi 0, %s33
      %s37 = sphi 0, %s34
      %s38 = sphi 0, %s35
      %s39 = sphi 0, %s36
      %s40 = sphi 0, %s37
      %s41 = sphi 0, %s38
      %s53 = sphi 0, %s53
      %s55 = sphi 0, %s53
      %s56 = sphi 0, %s55
      %s70 = sphi 0, %s56
      %s76 = sphi 0, %s78
      %s79 = sphi 0, %s76
      %s80 = sphi 0, %s79
      %s96 = sphi 0, %s80
      %s106 = sphi 0, %s108
      %s109 = sphi 0, %s106
      %s110 = sphi 0, %s109
      %s126 = sphi 0, %s110
      %s132 = sphi 0, %s134
      %s135 = sphi 0, %s132
      %s136 = sphi 0, %s135
      %s152 = sphi 0, %s136
      %s156 = sphi 0, %s156
      %s158 = sphi 0, %s156
      %s159 = sphi 0, %s158
      %s173 = sphi 0, %s159
      %s177 = sphi 0, %s177
      %s179 = sphi 0, %s177
      %s180 = sphi 0, %s179
      %s194 = sphi 0, %s180
      %s198 = sphi 0, %s198
      %s200 = sphi 0, %s198
      %s201 = sphi 0, %s200
      %s215 = sphi 0, %s201
      %s219 = sphi 0, %s219
      %s221 = sphi 0, %s219
      %s222 = sphi 0, %s221
      %s236 = sphi 0, %s222
      %s244 = sphi 0, %s246
      %s247 = sphi 0, %s244
      %s248 = sphi 0, %s247
      %s264 = sphi 0, %s248
    $region4: #{tpu_custom_call.1} parent=1 // loop_header_branch
      %29 = sbr.rel (%p27) target = $region8
    $region5: #{tpu_custom_call.1} parent=1 // loop_body
      %s31 = ssub.s32 %s26, 1
      %s32 = ssub.s32 %s26, 2
      %s42 = sadd.s32 1, %s35
      %p43 = scmp.ge.s32.totalorder %s42, 1
      %s44 = scalar_select %p43, 0, %s42
      %s45 = sadd.s32 1, %s34
      %s46 = scalar_select %p43, %s45, %s34
      %p47 = scmp.ge.s32.totalorder %s46, 2
      %s48 = scalar_select %p47, 0, %s46
      %s49 = sadd.s32 1, %s33
      %s50 = scalar_select %p47, %s49, %s33
      %p51 = scmp.ge.s32.totalorder %s50, 1
      %s52 = scalar_select %p51, 0, %s50
      %s54 = sadd.s32 %s53, 1
      %p57 = scmp.eq.s32.totalorder %s26, 1
      %p58 = scmp.ne.s32.totalorder %s53, %s55
      %p59 = scmp.eq.s32.totalorder %s26, 0
      %p60 = por %p58, %p59
      %p61 = scmp.ne.s32.totalorder %s53, %s55
      %p62 = scmp.eq.s32.totalorder %s31, 1
      %p63 = por %p61, %p62
      %p64 = scmp.ne.s32.totalorder %s55, %s56
      %p65 = scmp.eq.s32.totalorder %s31, 0
      %p66 = por %p64, %p65
      %p67 = scmp.ne.s32.totalorder %s55, %s56
      %p68 = scmp.eq.s32.totalorder %s32, 1
      %p69 = por %p67, %p68
      %p71 = scmp.ne.s32.totalorder %s56, %s70
      %p72 = scmp.eq.s32.totalorder %s32, 0
      %p73 = por %p71, %p72
      %s74 = ssub.s32 %s34, %s48
      %p75 = scmp.eq.s32.totalorder %s74, 0
      %s77 = sadd.s32 %s76, 1
      %s78 = scalar_select %p75, %s76, %s77
      %p81 = pneg %p75
      %p82 = scmp.eq.s32.totalorder %s26, 1
      %p83 = por %p81, %p82
      %p84 = scmp.ne.s32.totalorder %s76, %s79
      %p85 = scmp.eq.s32.totalorder %s26, 0
      %p86 = por %p84, %p85
      %p87 = scmp.ne.s32.totalorder %s76, %s79
      %p88 = scmp.eq.s32.totalorder %s31, 1
      %p89 = por %p87, %p88
      %p90 = scmp.ne.s32.totalorder %s79, %s80
      %p91 = scmp.eq.s32.totalorder %s31, 0
      %p92 = por %p90, %p91
      %p93 = scmp.ne.s32.totalorder %s79, %s80
      %p94 = scmp.eq.s32.totalorder %s32, 1
      %p95 = por %p93, %p94
      %p97 = scmp.ne.s32.totalorder %s80, %s96
      %p98 = scmp.eq.s32.totalorder %s32, 0
      %p99 = por %p97, %p98
      %s100 = sadd.s32 %s33, %s35
      %s101 = sadd.s32 %s52, %s44
      %s102 = ssub.s32 %s34, %s48
      %s103 = ssub.s32 %s100, %s101
      %s104 = sor.u32 %s102, %s103
      %p105 = scmp.eq.s32.totalorder %s104, 0
      %s107 = sadd.s32 %s106, 1
      %s108 = scalar_select %p105, %s106, %s107
      %p111 = pneg %p105
      %p112 = scmp.eq.s32.totalorder %s26, 1
      %p113 = por %p111, %p112
      %p114 = scmp.ne.s32.totalorder %s106, %s109
      %p115 = scmp.eq.s32.totalorder %s26, 0
      %p116 = por %p114, %p115
      %p117 = scmp.ne.s32.totalorder %s106, %s109
      %p118 = scmp.eq.s32.totalorder %s31, 1
      %p119 = por %p117, %p118
      %p120 = scmp.ne.s32.totalorder %s109, %s110
      %p121 = scmp.eq.s32.totalorder %s31, 0
      %p122 = por %p120, %p121
      %p123 = scmp.ne.s32.totalorder %s109, %s110
      %p124 = scmp.eq.s32.totalorder %s32, 1
      %p125 = por %p123, %p124
      %p127 = scmp.ne.s32.totalorder %s110, %s126
      %p128 = scmp.eq.s32.totalorder %s32, 0
      %p129 = por %p127, %p128
      %s130 = ssub.s32 %s34, %s48
      %p131 = scmp.eq.s32.totalorder %s130, 0
      %s133 = sadd.s32 %s132, 1
      %s134 = scalar_select %p131, %s132, %s133
      %p137 = pneg %p131
      %p138 = scmp.eq.s32.totalorder %s26, 1
      %p139 = por %p137, %p138
      %p140 = scmp.ne.s32.totalorder %s132, %s135
      %p141 = scmp.eq.s32.totalorder %s26, 0
      %p142 = por %p140, %p141
      %p143 = scmp.ne.s32.totalorder %s132, %s135
      %p144 = scmp.eq.s32.totalorder %s31, 1
      %p145 = por %p143, %p144
      %p146 = scmp.ne.s32.totalorder %s135, %s136
      %p147 = scmp.eq.s32.totalorder %s31, 0
      %p148 = por %p146, %p147
      %p149 = scmp.ne.s32.totalorder %s135, %s136
      %p150 = scmp.eq.s32.totalorder %s32, 1
      %p151 = por %p149, %p150
      %p153 = scmp.ne.s32.totalorder %s136, %s152
      %p154 = scmp.eq.s32.totalorder %s32, 0
      %p155 = por %p153, %p154
      %s157 = sadd.s32 %s156, 1
      %p160 = scmp.eq.s32.totalorder %s26, 1
      %p161 = scmp.ne.s32.totalorder %s156, %s158
      %p162 = scmp.eq.s32.totalorder %s26, 0
      %p163 = por %p161, %p162
      %p164 = scmp.ne.s32.totalorder %s156, %s158
      %p165 = scmp.eq.s32.totalorder %s31, 1
      %p166 = por %p164, %p165
      %p167 = scmp.ne.s32.totalorder %s158, %s159
      %p168 = scmp.eq.s32.totalorder %s31, 0
      %p169 = por %p167, %p168
      %p170 = scmp.ne.s32.totalorder %s158, %s159
      %p171 = scmp.eq.s32.totalorder %s32, 1
      %p172 = por %p170, %p171
      %p174 = scmp.ne.s32.totalorder %s159, %s173
      %p175 = scmp.eq.s32.totalorder %s32, 0
      %p176 = por %p174, %p175
      %s178 = sadd.s32 %s177, 1
      %p181 = scmp.eq.s32.totalorder %s26, 1
      %p182 = scmp.ne.s32.totalorder %s177, %s179
      %p183 = scmp.eq.s32.totalorder %s26, 0
      %p184 = por %p182, %p183
      %p185 = scmp.ne.s32.totalorder %s177, %s179
      %p186 = scmp.eq.s32.totalorder %s31, 1
      %p187 = por %p185, %p186
      %p188 = scmp.ne.s32.totalorder %s179, %s180
      %p189 = scmp.eq.s32.totalorder %s31, 0
      %p190 = por %p188, %p189
      %p191 = scmp.ne.s32.totalorder %s179, %s180
      %p192 = scmp.eq.s32.totalorder %s32, 1
      %p193 = por %p191, %p192
      %p195 = scmp.ne.s32.totalorder %s180, %s194
      %p196 = scmp.eq.s32.totalorder %s32, 0
      %p197 = por %p195, %p196
      %s199 = sadd.s32 %s198, 1
      %p202 = scmp.eq.s32.totalorder %s26, 1
      %p203 = scmp.ne.s32.totalorder %s198, %s200
      %p204 = scmp.eq.s32.totalorder %s26, 0
      %p205 = por %p203, %p204
      %p206 = scmp.ne.s32.totalorder %s198, %s200
      %p207 = scmp.eq.s32.totalorder %s31, 1
      %p208 = por %p206, %p207
      %p209 = scmp.ne.s32.totalorder %s200, %s201
      %p210 = scmp.eq.s32.totalorder %s31, 0
      %p211 = por %p209, %p210
      %p212 = scmp.ne.s32.totalorder %s200, %s201
      %p213 = scmp.eq.s32.totalorder %s32, 1
      %p214 = por %p212, %p213
      %p216 = scmp.ne.s32.totalorder %s201, %s215
      %p217 = scmp.eq.s32.totalorder %s32, 0
      %p218 = por %p216, %p217
      %s220 = sadd.s32 %s219, 1
      %p223 = scmp.eq.s32.totalorder %s26, 1
      %p224 = scmp.ne.s32.totalorder %s219, %s221
      %p225 = scmp.eq.s32.totalorder %s26, 0
      %p226 = por %p224, %p225
      %p227 = scmp.ne.s32.totalorder %s219, %s221
      %p228 = scmp.eq.s32.totalorder %s31, 1
      %p229 = por %p227, %p228
      %p230 = scmp.ne.s32.totalorder %s221, %s222
      %p231 = scmp.eq.s32.totalorder %s31, 0
      %p232 = por %p230, %p231
      %p233 = scmp.ne.s32.totalorder %s221, %s222
      %p234 = scmp.eq.s32.totalorder %s32, 1
      %p235 = por %p233, %p234
      %p237 = scmp.ne.s32.totalorder %s222, %s236
      %p238 = scmp.eq.s32.totalorder %s32, 0
      %p239 = por %p237, %p238
      %s240 = ssub.s32 %s33, %s52
      %s241 = ssub.s32 %s34, %s48
      %s242 = sor.u32 %s240, %s241
      %p243 = scmp.eq.s32.totalorder %s242, 0
      %s245 = sadd.s32 %s244, 1
      %s246 = scalar_select %p243, %s244, %s245
      %p249 = pneg %p243
      %p250 = scmp.eq.s32.totalorder %s26, 1
      %p251 = por %p249, %p250
      %p252 = scmp.ne.s32.totalorder %s244, %s247
      %p253 = scmp.eq.s32.totalorder %s26, 0
      %p254 = por %p252, %p253
      %p255 = scmp.ne.s32.totalorder %s244, %s247
      %p256 = scmp.eq.s32.totalorder %s31, 1
      %p257 = por %p255, %p256
      %p258 = scmp.ne.s32.totalorder %s247, %s248
      %p259 = scmp.eq.s32.totalorder %s31, 0
      %p260 = por %p258, %p259
      %p261 = scmp.ne.s32.totalorder %s247, %s248
      %p262 = scmp.eq.s32.totalorder %s32, 1
      %p263 = por %p261, %p262
      %p265 = scmp.ne.s32.totalorder %s248, %s264
      %p266 = scmp.eq.s32.totalorder %s32, 0
      %p267 = por %p265, %p266
      %p268 = scmp.le.s32.totalorder 1, %s26
      %p269 = scmp.lt.s32.totalorder %s26, 3
      %p270 = pnand %p268, %p269
      %p271 = pneg %p270
      // Predicated region
      $region9: #{tpu_custom_call.1} parent=5 // pred_check
        _
      $region10: #{tpu_custom_call.1} parent=5 // pred_check_branch
        %273 = sbr.rel (%p270) target = $region12
      $region11: #{tpu_custom_call.1} parent=5 // pred_region
        %s274 = ssub.s32 %s26, 1
        // Predicated region
        $region13: #{tpu_custom_call.1} parent=11 // pred_check
          %p275 = pneg %p66
        $region14: #{tpu_custom_call.1} parent=11 // pred_check_branch
          %277 = sbr.rel (%p275) target = $region16
        $region15: #{tpu_custom_call.1} parent=11 // pred_region
          _
        $region16: #{tpu_custom_call.1} parent=11 // pred_fallthru
          _
        // Predicated region
        $region17: #{tpu_custom_call.1} parent=11 // pred_check
          %p278 = pneg %p169
        $region18: #{tpu_custom_call.1} parent=11 // pred_check_branch
          %280 = sbr.rel (%p278) target = $region20
        $region19: #{tpu_custom_call.1} parent=11 // pred_region
          %282 = vsyncadd [#allocation12], 0
          %s283 = sshll.u32 %s4, 4
          %s284 = int_to_ptr.hbm [resolvable:$true] %s283
          %s285 = sshll.u32 [#allocation11], 4
          %s286 = int_to_ptr.vmem [resolvable:$true] %s285
          %291 = dma.hbm_to_vmem [thread:$0]  %s284, 1024, %s286, [#allocation12], 64, 64, 4
        $region20: #{tpu_custom_call.1} parent=11 // pred_fallthru
          _
        // Predicated region
        $region21: #{tpu_custom_call.1} parent=11 // pred_check
          %p292 = pneg %p190
        $region22: #{tpu_custom_call.1} parent=11 // pred_check_branch
          %294 = sbr.rel (%p292) target = $region24
        $region23: #{tpu_custom_call.1} parent=11 // pred_region
          %296 = vsyncadd [#allocation12], 0
          %s297 = sshll.u32 %s5, 4
          %s298 = int_to_ptr.hbm [resolvable:$true] %s297
          %s299 = sshll.u32 [#allocation13], 4
          %s300 = int_to_ptr.vmem [resolvable:$true] %s299
          %305 = dma.hbm_to_vmem [thread:$0]  %s298, 1024, %s300, [#allocation12], 64, 64, 4
        $region24: #{tpu_custom_call.1} parent=11 // pred_fallthru
          _
        // Predicated region
        $region25: #{tpu_custom_call.1} parent=11 // pred_check
          %p306 = pneg %p211
        $region26: #{tpu_custom_call.1} parent=11 // pred_check_branch
          %308 = sbr.rel (%p306) target = $region28
        $region27: #{tpu_custom_call.1} parent=11 // pred_region
          %310 = vsyncadd [#allocation15], 0
          %s311 = sshll.u32 %s6, 4
          %s312 = int_to_ptr.hbm [resolvable:$true] %s311
          %s313 = sshll.u32 [#allocation14], 4
          %s314 = int_to_ptr.vmem [resolvable:$true] %s313
          %319 = dma.hbm_to_vmem [thread:$0]  %s312, 1024, %s314, [#allocation15], 64, 64, 4
        $region28: #{tpu_custom_call.1} parent=11 // pred_fallthru
          _
        // Predicated region
        $region29: #{tpu_custom_call.1} parent=11 // pred_check
          %p320 = pneg %p232
        $region30: #{tpu_custom_call.1} parent=11 // pred_check_branch
          %322 = sbr.rel (%p320) target = $region32
        $region31: #{tpu_custom_call.1} parent=11 // pred_region
          %324 = vsyncadd [#allocation15], 0
          %s325 = sshll.u32 %s7, 4
          %s326 = int_to_ptr.hbm [resolvable:$true] %s325
          %s327 = sshll.u32 [#allocation16], 4
          %s328 = int_to_ptr.vmem [resolvable:$true] %s327
          %333 = dma.hbm_to_vmem [thread:$0]  %s326, 1024, %s328, [#allocation15], 64, 64, 4
        $region32: #{tpu_custom_call.1} parent=11 // pred_fallthru
          _
      $region12: #{tpu_custom_call.1} parent=5 // pred_fallthru
        _
      %p334 = scmp.lt.s32.totalorder %s26, 2
      // Predicated region
      $region33: #{tpu_custom_call.1} parent=5 // pred_check
        %p335 = pneg %p334
      $region34: #{tpu_custom_call.1} parent=5 // pred_check_branch
        %337 = sbr.rel (%p335) target = $region36
      $region35: #{tpu_custom_call.1} parent=5 // pred_region
        // Predicated region
        $region37: #{tpu_custom_call.1} parent=35 // pred_check
          %p338 = pneg %p86
        $region38: #{tpu_custom_call.1} parent=35 // pred_check_branch
          %340 = sbr.rel (%p338) target = $region40
        $region39: #{tpu_custom_call.1} parent=35 // pred_region
          %s341 = sand.u32 %s76, 1
          %s342 = scalar_lea.sflag [#allocation6], %s341
          %s343 = sand.u32 %s76, 1
          %s344 = smul.addr %s343, 256
          %s345 = scalar_lea.vmem [#allocation5], %s344
          %347 = vsyncadd %s342, 0
          %s348 = smul.addr %s34, 32
          %s349 = smul.addr %s348, 8
          %s350 = scalar_lea.hbm %s1, %s349
          %s351 = sshll.u32 %s350, 4
          %s352 = int_to_ptr.hbm [resolvable:$true] %s351
          %s353 = sshll.u32 %s345, 4
          %s354 = int_to_ptr.vmem [resolvable:$true] %s353
          %359 = dma.hbm_to_vmem [thread:$0]  %s352, 4096, %s354, %s342, 128, 128, 8
        $region40: #{tpu_custom_call.1} parent=35 // pred_fallthru
          _
        // Predicated region
        $region41: #{tpu_custom_call.1} parent=35 // pred_check
          %p360 = pneg %p116
        $region42: #{tpu_custom_call.1} parent=35 // pred_check_branch
          %362 = sbr.rel (%p360) target = $region44
        $region43: #{tpu_custom_call.1} parent=35 // pred_region
          %s363 = sand.u32 %s26, 1
          %s364 = scalar_lea.sflag [#allocation9], %s363
          %s365 = sand.u32 %s106, 1
          %s366 = smul.addr %s365, 1024
          %s367 = scalar_lea.vmem [#allocation8], %s366
          %s368 = sadd.s32 %s33, %s35
          %s369 = smul.u32 4, %s368
          %371 = vsyncadd %s364, 0
          %s372 = smul.addr %s369, 32
          %s373 = smul.addr %s34, 128
          %s374 = sadd.s32 %s372, %s373
          %s375 = smul.addr %s374, 8
          %s376 = scalar_lea.hbm %s2, %s375
          %s377 = sshll.u32 %s376, 4
          %s378 = int_to_ptr.hbm [resolvable:$true] %s377
          %s379 = sshll.u32 %s367, 4
          %s380 = int_to_ptr.vmem [resolvable:$true] %s379
          %385 = dma.hbm_to_vmem [thread:$0]  %s378, 16384, %s380, %s364, 128, 128, 8
        $region44: #{tpu_custom_call.1} parent=35 // pred_fallthru
          _
        // Predicated region
        $region45: #{tpu_custom_call.1} parent=35 // pred_check
          %p386 = pneg %p142
        $region46: #{tpu_custom_call.1} parent=35 // pred_check_branch
          %388 = sbr.rel (%p386) target = $region48
        $region47: #{tpu_custom_call.1} parent=35 // pred_region
          %s389 = sand.u32 %s26, 1
          %s390 = scalar_lea.sflag [#allocation9], %s389
          %s391 = sand.u32 %s132, 1
          %s392 = smul.addr %s391, 256
          %s393 = scalar_lea.vmem [#allocation10], %s392
          %395 = vsyncadd %s390, 0
          %s396 = smul.addr %s34, 32
          %s397 = smul.addr %s396, 8
          %s398 = scalar_lea.hbm %s3, %s397
          %s399 = sshll.u32 %s398, 4
          %s400 = int_to_ptr.hbm [resolvable:$true] %s399
          %s401 = sshll.u32 %s393, 4
          %s402 = int_to_ptr.vmem [resolvable:$true] %s401
          %407 = dma.hbm_to_vmem [thread:$0]  %s400, 4096, %s402, %s390, 128, 128, 8
        $region48: #{tpu_custom_call.1} parent=35 // pred_fallthru
          _
      $region36: #{tpu_custom_call.1} parent=5 // pred_fallthru
        _
      %p408 = scmp.le.s32.totalorder 1, %s26
      %p409 = scmp.lt.s32.totalorder %s26, 3
      %p410 = pnand %p408, %p409
      %p411 = pneg %p410
      // Predicated region
      $region49: #{tpu_custom_call.1} parent=5 // pred_check
        _
      $region50: #{tpu_custom_call.1} parent=5 // pred_check_branch
        %413 = sbr.rel (%p410) target = $region52
      $region51: #{tpu_custom_call.1} parent=5 // pred_region
        %s414 = ssub.s32 %s26, 1
        %s415 = sand.u32 %s79, 1
        %s416 = scalar_lea.sflag [#allocation6], %s415
        %s417 = sand.u32 %s79, 1
        %s418 = smul.addr %s417, 256
        %s419 = scalar_lea.vmem [#allocation5], %s418
        // Predicated region
        $region53: #{tpu_custom_call.1} parent=51 // pred_check
          %p420 = pneg %p92
        $region54: #{tpu_custom_call.1} parent=51 // pred_check_branch
          %422 = sbr.rel (%p420) target = $region56
        $region55: #{tpu_custom_call.1} parent=51 // pred_region
          %424 = dma.done %s416, 4096
        $region56: #{tpu_custom_call.1} parent=51 // pred_fallthru
          _
        %s425 = sand.u32 %s31, 1
        %s426 = scalar_lea.sflag [#allocation9], %s425
        %s427 = sand.u32 %s109, 1
        %s428 = smul.addr %s427, 1024
        %s429 = scalar_lea.vmem [#allocation8], %s428
        // Predicated region
        $region57: #{tpu_custom_call.1} parent=51 // pred_check
          %p430 = pneg %p122
        $region58: #{tpu_custom_call.1} parent=51 // pred_check_branch
          %432 = sbr.rel (%p430) target = $region60
        $region59: #{tpu_custom_call.1} parent=51 // pred_region
          %434 = dma.done %s426, 16384
        $region60: #{tpu_custom_call.1} parent=51 // pred_fallthru
          _
        %s435 = sand.u32 %s31, 1
        %s436 = scalar_lea.sflag [#allocation9], %s435
        %s437 = sand.u32 %s135, 1
        %s438 = smul.addr %s437, 256
        %s439 = scalar_lea.vmem [#allocation10], %s438
        // Predicated region
        $region61: #{tpu_custom_call.1} parent=51 // pred_check
          %p440 = pneg %p148
        $region62: #{tpu_custom_call.1} parent=51 // pred_check_branch
          %442 = sbr.rel (%p440) target = $region64
        $region63: #{tpu_custom_call.1} parent=51 // pred_region
          %444 = dma.done %s436, 4096
        $region64: #{tpu_custom_call.1} parent=51 // pred_fallthru
          _
        // Predicated region
        $region65: #{tpu_custom_call.1} parent=51 // pred_check
          %p445 = pneg %p169
        $region66: #{tpu_custom_call.1} parent=51 // pred_check_branch
          %447 = sbr.rel (%p445) target = $region68
        $region67: #{tpu_custom_call.1} parent=51 // pred_region
          %449 = dma.done [#allocation12], 1024
        $region68: #{tpu_custom_call.1} parent=51 // pred_fallthru
          _
        // Predicated region
        $region69: #{tpu_custom_call.1} parent=51 // pred_check
          %p450 = pneg %p190
        $region70: #{tpu_custom_call.1} parent=51 // pred_check_branch
          %452 = sbr.rel (%p450) target = $region72
        $region71: #{tpu_custom_call.1} parent=51 // pred_region
          %454 = dma.done [#allocation12], 1024
        $region72: #{tpu_custom_call.1} parent=51 // pred_fallthru
          _
        // Predicated region
        $region73: #{tpu_custom_call.1} parent=51 // pred_check
          %p455 = pneg %p211
        $region74: #{tpu_custom_call.1} parent=51 // pred_check_branch
          %457 = sbr.rel (%p455) target = $region76
        $region75: #{tpu_custom_call.1} parent=51 // pred_region
          %459 = dma.done [#allocation15], 1024
        $region76: #{tpu_custom_call.1} parent=51 // pred_fallthru
          _
        // Predicated region
        $region77: #{tpu_custom_call.1} parent=51 // pred_check
          %p460 = pneg %p232
        $region78: #{tpu_custom_call.1} parent=51 // pred_check_branch
          %462 = sbr.rel (%p460) target = $region80
        $region79: #{tpu_custom_call.1} parent=51 // pred_region
          %464 = dma.done [#allocation15], 1024
        $region80: #{tpu_custom_call.1} parent=51 // pred_fallthru
          _
        %p465 = pneg %p66
        %p466 = pneg %p63
        %s467 = sand.u32 %s79, 1
        %s468 = scalar_lea.sflag [#allocation6], %s467
        %s469 = sand.u32 %s79, 1
        %s470 = smul.addr %s469, 256
        %s471 = scalar_lea.vmem [#allocation5], %s470
        %p472 = pneg %p92
        %p473 = pneg %p89
        %s474 = sand.u32 %s31, 1
        %s475 = scalar_lea.sflag [#allocation9], %s474
        %s476 = sand.u32 %s109, 1
        %s477 = smul.addr %s476, 1024
        %s478 = scalar_lea.vmem [#allocation8], %s477
        %p479 = pneg %p122
        %p480 = pneg %p119
        %s481 = sand.u32 %s31, 1
        %s482 = scalar_lea.sflag [#allocation9], %s481
        %s483 = sand.u32 %s135, 1
        %s484 = smul.addr %s483, 256
        %s485 = scalar_lea.vmem [#allocation10], %s484
        %p486 = pneg %p148
        %p487 = pneg %p145
        %p488 = pneg %p169
        %p489 = pneg %p166
        %p490 = pneg %p190
        %p491 = pneg %p187
        %p492 = pneg %p211
        %p493 = pneg %p208
        %p494 = pneg %p232
        %p495 = pneg %p229
        %p496 = pneg %p260
        %p497 = pneg %p257
        %s498 = sand.u32 %s247, 1
        %s499 = scalar_lea.sflag [#allocation7], %s498
        %s500 = sand.u32 %s247, 1
        %s501 = smul.addr %s500, 256
        %s502 = scalar_lea.vmem [#allocation17], %s501
        %s503 = sadd.s32 %s36, %s38
        %s504 = smul.u32 4, %s503
        %s505 = sld [smem:[#allocation4]]
        %v506 = vld [vmem:[%s419] sm:$0xff]
        %v507 = vld [vmem:[%s419 + $0x8] sm:$0xff]
        %v508 = vld [vmem:[%s419 + $0x10] sm:$0xff]
        %v509 = vld [vmem:[%s419 + $0x18] sm:$0xff]
        %v510 = vld [vmem:[%s419 + $0x20] sm:$0xff]
        %v511 = vld [vmem:[%s419 + $0x28] sm:$0xff]
        %v512 = vld [vmem:[%s419 + $0x30] sm:$0xff]
        %v513 = vld [vmem:[%s419 + $0x38] sm:$0xff]
        %v514 = vld [vmem:[%s419 + $0x40] sm:$0xff]
        %v515 = vld [vmem:[%s419 + $0x48] sm:$0xff]
        %v516 = vld [vmem:[%s419 + $0x50] sm:$0xff]
        %v517 = vld [vmem:[%s419 + $0x58] sm:$0xff]
        %v518 = vld [vmem:[%s419 + $0x60] sm:$0xff]
        %v519 = vld [vmem:[%s419 + $0x68] sm:$0xff]
        %v520 = vld [vmem:[%s419 + $0x70] sm:$0xff]
        %v521 = vld [vmem:[%s419 + $0x78] sm:$0xff]
        %v522 = vld [vmem:[%s419 + $0x80] sm:$0xff]
        %v523 = vld [vmem:[%s419 + $0x88] sm:$0xff]
        %v524 = vld [vmem:[%s419 + $0x90] sm:$0xff]
        %v525 = vld [vmem:[%s419 + $0x98] sm:$0xff]
        %v526 = vld [vmem:[%s419 + $0xa0] sm:$0xff]
        %v527 = vld [vmem:[%s419 + $0xa8] sm:$0xff]
        %v528 = vld [vmem:[%s419 + $0xb0] sm:$0xff]
        %v529 = vld [vmem:[%s419 + $0xb8] sm:$0xff]
        %v530 = vld [vmem:[%s419 + $0xc0] sm:$0xff]
        %v531 = vld [vmem:[%s419 + $0xc8] sm:$0xff]
        %v532 = vld [vmem:[%s419 + $0xd0] sm:$0xff]
        %v533 = vld [vmem:[%s419 + $0xd8] sm:$0xff]
        %v534 = vld [vmem:[%s419 + $0xe0] sm:$0xff]
        %v535 = vld [vmem:[%s419 + $0xe8] sm:$0xff]
        %v536 = vld [vmem:[%s419 + $0xf0] sm:$0xff]
        %v537 = vld [vmem:[%s419 + $0xf8] sm:$0xff]
        %v538 = vld [vmem:[%s439] sm:$0xff]
        %v539 = vld [vmem:[%s439 + $0x8] sm:$0xff]
        %v540 = vld [vmem:[%s439 + $0x10] sm:$0xff]
        %v541 = vld [vmem:[%s439 + $0x18] sm:$0xff]
        %v542 = vld [vmem:[%s439 + $0x20] sm:$0xff]
        %v543 = vld [vmem:[%s439 + $0x28] sm:$0xff]
        %v544 = vld [vmem:[%s439 + $0x30] sm:$0xff]
        %v545 = vld [vmem:[%s439 + $0x38] sm:$0xff]
        %v546 = vld [vmem:[%s439 + $0x40] sm:$0xff]
        %v547 = vld [vmem:[%s439 + $0x48] sm:$0xff]
        %v548 = vld [vmem:[%s439 + $0x50] sm:$0xff]
        %v549 = vld [vmem:[%s439 + $0x58] sm:$0xff]
        %v550 = vld [vmem:[%s439 + $0x60] sm:$0xff]
        %v551 = vld [vmem:[%s439 + $0x68] sm:$0xff]
        %v552 = vld [vmem:[%s439 + $0x70] sm:$0xff]
        %v553 = vld [vmem:[%s439 + $0x78] sm:$0xff]
        %v554 = vld [vmem:[%s439 + $0x80] sm:$0xff]
        %v555 = vld [vmem:[%s439 + $0x88] sm:$0xff]
        %v556 = vld [vmem:[%s439 + $0x90] sm:$0xff]
        %v557 = vld [vmem:[%s439 + $0x98] sm:$0xff]
        %v558 = vld [vmem:[%s439 + $0xa0] sm:$0xff]
        %v559 = vld [vmem:[%s439 + $0xa8] sm:$0xff]
        %v560 = vld [vmem:[%s439 + $0xb0] sm:$0xff]
        %v561 = vld [vmem:[%s439 + $0xb8] sm:$0xff]
        %v562 = vld [vmem:[%s439 + $0xc0] sm:$0xff]
        %v563 = vld [vmem:[%s439 + $0xc8] sm:$0xff]
        %v564 = vld [vmem:[%s439 + $0xd0] sm:$0xff]
        %v565 = vld [vmem:[%s439 + $0xd8] sm:$0xff]
        %v566 = vld [vmem:[%s439 + $0xe0] sm:$0xff]
        %v567 = vld [vmem:[%s439 + $0xe8] sm:$0xff]
        %v568 = vld [vmem:[%s439 + $0xf0] sm:$0xff]
        %v569 = vld [vmem:[%s439 + $0xf8] sm:$0xff]
        %v570 = vld [vmem:[#allocation11] sm:$0xf]
        %v571 = vld [vmem:[#allocation11 + $0x4] sm:$0xf]
        %v572 = vld [vmem:[#allocation11 + $0x8] sm:$0xf]
        %v573 = vld [vmem:[#allocation11 + $0xc] sm:$0xf]
        %v574 = vld [vmem:[#allocation11 + $0x10] sm:$0xf]
        %v575 = vld [vmem:[#allocation11 + $0x14] sm:$0xf]
        %v576 = vld [vmem:[#allocation11 + $0x18] sm:$0xf]
        %v577 = vld [vmem:[#allocation11 + $0x1c] sm:$0xf]
        %v578 = vld [vmem:[#allocation11 + $0x20] sm:$0xf]
        %v579 = vld [vmem:[#allocation11 + $0x24] sm:$0xf]
        %v580 = vld [vmem:[#allocation11 + $0x28] sm:$0xf]
        %v581 = vld [vmem:[#allocation11 + $0x2c] sm:$0xf]
        %v582 = vld [vmem:[#allocation11 + $0x30] sm:$0xf]
        %v583 = vld [vmem:[#allocation11 + $0x34] sm:$0xf]
        %v584 = vld [vmem:[#allocation11 + $0x38] sm:$0xf]
        %v585 = vld [vmem:[#allocation11 + $0x3c] sm:$0xf]
        %v586 = vld [vmem:[#allocation13] sm:$0xf]
        %v587 = vld [vmem:[#allocation13 + $0x4] sm:$0xf]
        %v588 = vld [vmem:[#allocation13 + $0x8] sm:$0xf]
        %v589 = vld [vmem:[#allocation13 + $0xc] sm:$0xf]
        %v590 = vld [vmem:[#allocation13 + $0x10] sm:$0xf]
        %v591 = vld [vmem:[#allocation13 + $0x14] sm:$0xf]
        %v592 = vld [vmem:[#allocation13 + $0x18] sm:$0xf]
        %v593 = vld [vmem:[#allocation13 + $0x1c] sm:$0xf]
        %v594 = vld [vmem:[#allocation13 + $0x20] sm:$0xf]
        %v595 = vld [vmem:[#allocation13 + $0x24] sm:$0xf]
        %v596 = vld [vmem:[#allocation13 + $0x28] sm:$0xf]
        %v597 = vld [vmem:[#allocation13 + $0x2c] sm:$0xf]
        %v598 = vld [vmem:[#allocation13 + $0x30] sm:$0xf]
        %v599 = vld [vmem:[#allocation13 + $0x34] sm:$0xf]
        %v600 = vld [vmem:[#allocation13 + $0x38] sm:$0xf]
        %v601 = vld [vmem:[#allocation13 + $0x3c] sm:$0xf]
        %v602 = vld [vmem:[#allocation14] sm:$0xf]
        %v603 = vld [vmem:[#allocation14 + $0x4] sm:$0xf]
        %v604 = vld [vmem:[#allocation14 + $0x8] sm:$0xf]
        %v605 = vld [vmem:[#allocation14 + $0xc] sm:$0xf]
        %v606 = vld [vmem:[#allocation14 + $0x10] sm:$0xf]
        %v607 = vld [vmem:[#allocation14 + $0x14] sm:$0xf]
        %v608 = vld [vmem:[#allocation14 + $0x18] sm:$0xf]
        %v609 = vld [vmem:[#allocation14 + $0x1c] sm:$0xf]
        %v610 = vld [vmem:[#allocation14 + $0x20] sm:$0xf]
        %v611 = vld [vmem:[#allocation14 + $0x24] sm:$0xf]
        %v612 = vld [vmem:[#allocation14 + $0x28] sm:$0xf]
        %v613 = vld [vmem:[#allocation14 + $0x2c] sm:$0xf]
        %v614 = vld [vmem:[#allocation14 + $0x30] sm:$0xf]
        %v615 = vld [vmem:[#allocation14 + $0x34] sm:$0xf]
        %v616 = vld [vmem:[#allocation14 + $0x38] sm:$0xf]
        %v617 = vld [vmem:[#allocation14 + $0x3c] sm:$0xf]
        %v618 = vld [vmem:[#allocation16] sm:$0xf]
        %v619 = vld [vmem:[#allocation16 + $0x4] sm:$0xf]
        %v620 = vld [vmem:[#allocation16 + $0x8] sm:$0xf]
        %v621 = vld [vmem:[#allocation16 + $0xc] sm:$0xf]
        %v622 = vld [vmem:[#allocation16 + $0x10] sm:$0xf]
        %v623 = vld [vmem:[#allocation16 + $0x14] sm:$0xf]
        %v624 = vld [vmem:[#allocation16 + $0x18] sm:$0xf]
        %v625 = vld [vmem:[#allocation16 + $0x1c] sm:$0xf]
        %v626 = vld [vmem:[#allocation16 + $0x20] sm:$0xf]
        %v627 = vld [vmem:[#allocation16 + $0x24] sm:$0xf]
        %v628 = vld [vmem:[#allocation16 + $0x28] sm:$0xf]
        %v629 = vld [vmem:[#allocation16 + $0x2c] sm:$0xf]
        %v630 = vld [vmem:[#allocation16 + $0x30] sm:$0xf]
        %v631 = vld [vmem:[#allocation16 + $0x34] sm:$0xf]
        %v632 = vld [vmem:[#allocation16 + $0x38] sm:$0xf]
        %v633 = vld [vmem:[#allocation16 + $0x3c] sm:$0xf]
        %p634 = scmp.eq.s32.totalorder %s38, 0
        // Predicated region
        $region81: #{tpu_custom_call.1} parent=51 // pred_check
          %p635 = pneg %p634
        $region82: #{tpu_custom_call.1} parent=51 // pred_check_branch
          %637 = sbr.rel (%p635) target = $region84
        $region83: #{tpu_custom_call.1} parent=51 // pred_region
          %p638 = scmp.eq.s32.totalorder %s36, 0
          %s639 = scalar_select %p638, %s505, 0.0
          %v640 = vstv %s639
          %v641 = vmul.f32 %v640, %v506
          %v642 = vmul.f32 %v640, %v507
          %v643 = vmul.f32 %v640, %v508
          %v644 = vmul.f32 %v640, %v509
          %v645 = vmul.f32 %v640, %v510
          %v646 = vmul.f32 %v640, %v511
          %v647 = vmul.f32 %v640, %v512
          %v648 = vmul.f32 %v640, %v513
          %v649 = vmul.f32 %v640, %v514
          %v650 = vmul.f32 %v640, %v515
          %v651 = vmul.f32 %v640, %v516
          %v652 = vmul.f32 %v640, %v517
          %v653 = vmul.f32 %v640, %v518
          %v654 = vmul.f32 %v640, %v519
          %v655 = vmul.f32 %v640, %v520
          %v656 = vmul.f32 %v640, %v521
          %657 = vst [vmem:[%s502] sm:$0xff] %v641
          %658 = vst [vmem:[%s502 + $0x8] sm:$0xff] %v642
          %659 = vst [vmem:[%s502 + $0x10] sm:$0xff] %v643
          %660 = vst [vmem:[%s502 + $0x18] sm:$0xff] %v644
          %661 = vst [vmem:[%s502 + $0x20] sm:$0xff] %v645
          %662 = vst [vmem:[%s502 + $0x28] sm:$0xff] %v646
          %663 = vst [vmem:[%s502 + $0x30] sm:$0xff] %v647
          %664 = vst [vmem:[%s502 + $0x38] sm:$0xff] %v648
          %665 = vst [vmem:[%s502 + $0x40] sm:$0xff] %v649
          %666 = vst [vmem:[%s502 + $0x48] sm:$0xff] %v650
          %667 = vst [vmem:[%s502 + $0x50] sm:$0xff] %v651
          %668 = vst [vmem:[%s502 + $0x58] sm:$0xff] %v652
          %669 = vst [vmem:[%s502 + $0x60] sm:$0xff] %v653
          %670 = vst [vmem:[%s502 + $0x68] sm:$0xff] %v654
          %671 = vst [vmem:[%s502 + $0x70] sm:$0xff] %v655
          %672 = vst [vmem:[%s502 + $0x78] sm:$0xff] %v656
          %v673 = vmul.f32 %v640, %v522
          %v674 = vmul.f32 %v640, %v523
          %v675 = vmul.f32 %v640, %v524
          %v676 = vmul.f32 %v640, %v525
          %v677 = vmul.f32 %v640, %v526
          %v678 = vmul.f32 %v640, %v527
          %v679 = vmul.f32 %v640, %v528
          %v680 = vmul.f32 %v640, %v529
          %v681 = vmul.f32 %v640, %v530
          %v682 = vmul.f32 %v640, %v531
          %v683 = vmul.f32 %v640, %v532
          %v684 = vmul.f32 %v640, %v533
          %v685 = vmul.f32 %v640, %v534
          %v686 = vmul.f32 %v640, %v535
          %v687 = vmul.f32 %v640, %v536
          %v688 = vmul.f32 %v640, %v537
          %s689 = scalar_lea.vmem %s502, 128 [#allocation17]
          %690 = vst [vmem:[%s689] sm:$0xff] %v673
          %691 = vst [vmem:[%s689 + $0x8] sm:$0xff] %v674
          %692 = vst [vmem:[%s689 + $0x10] sm:$0xff] %v675
          %693 = vst [vmem:[%s689 + $0x18] sm:$0xff] %v676
          %694 = vst [vmem:[%s689 + $0x20] sm:$0xff] %v677
          %695 = vst [vmem:[%s689 + $0x28] sm:$0xff] %v678
          %696 = vst [vmem:[%s689 + $0x30] sm:$0xff] %v679
          %697 = vst [vmem:[%s689 + $0x38] sm:$0xff] %v680
          %698 = vst [vmem:[%s689 + $0x40] sm:$0xff] %v681
          %699 = vst [vmem:[%s689 + $0x48] sm:$0xff] %v682
          %700 = vst [vmem:[%s689 + $0x50] sm:$0xff] %v683
          %701 = vst [vmem:[%s689 + $0x58] sm:$0xff] %v684
          %702 = vst [vmem:[%s689 + $0x60] sm:$0xff] %v685
          %703 = vst [vmem:[%s689 + $0x68] sm:$0xff] %v686
          %704 = vst [vmem:[%s689 + $0x70] sm:$0xff] %v687
          %705 = vst [vmem:[%s689 + $0x78] sm:$0xff] %v688
        $region84: #{tpu_custom_call.1} parent=51 // pred_fallthru
          _
        %v706 = vld [vmem:[%s429] sm:$0xff]
        %v707 = vld [vmem:[%s429 + $0x8] sm:$0xff]
        %v708 = vld [vmem:[%s429 + $0x10] sm:$0xff]
        %v709 = vld [vmem:[%s429 + $0x18] sm:$0xff]
        %v710 = vld [vmem:[%s429 + $0x20] sm:$0xff]
        %v711 = vld [vmem:[%s429 + $0x28] sm:$0xff]
        %v712 = vld [vmem:[%s429 + $0x30] sm:$0xff]
        %v713 = vld [vmem:[%s429 + $0x38] sm:$0xff]
        %v714 = vld [vmem:[%s429 + $0x40] sm:$0xff]
        %v715 = vld [vmem:[%s429 + $0x48] sm:$0xff]
        %v716 = vld [vmem:[%s429 + $0x50] sm:$0xff]
        %v717 = vld [vmem:[%s429 + $0x58] sm:$0xff]
        %v718 = vld [vmem:[%s429 + $0x60] sm:$0xff]
        %v719 = vld [vmem:[%s429 + $0x68] sm:$0xff]
        %v720 = vld [vmem:[%s429 + $0x70] sm:$0xff]
        %v721 = vld [vmem:[%s429 + $0x78] sm:$0xff]
        %v722 = vld [vmem:[%s429 + $0x80] sm:$0xff]
        %v723 = vld [vmem:[%s429 + $0x88] sm:$0xff]
        %v724 = vld [vmem:[%s429 + $0x90] sm:$0xff]
        %v725 = vld [vmem:[%s429 + $0x98] sm:$0xff]
        %v726 = vld [vmem:[%s429 + $0xa0] sm:$0xff]
        %v727 = vld [vmem:[%s429 + $0xa8] sm:$0xff]
        %v728 = vld [vmem:[%s429 + $0xb0] sm:$0xff]
        %v729 = vld [vmem:[%s429 + $0xb8] sm:$0xff]
        %v730 = vld [vmem:[%s429 + $0xc0] sm:$0xff]
        %v731 = vld [vmem:[%s429 + $0xc8] sm:$0xff]
        %v732 = vld [vmem:[%s429 + $0xd0] sm:$0xff]
        %v733 = vld [vmem:[%s429 + $0xd8] sm:$0xff]
        %v734 = vld [vmem:[%s429 + $0xe0] sm:$0xff]
        %v735 = vld [vmem:[%s429 + $0xe8] sm:$0xff]
        %v736 = vld [vmem:[%s429 + $0xf0] sm:$0xff]
        %v737 = vld [vmem:[%s429 + $0xf8] sm:$0xff]
        %v738 = vld [vmem:[%s429 + $0x100] sm:$0xff]
        %v739 = vld [vmem:[%s429 + $0x108] sm:$0xff]
        %v740 = vld [vmem:[%s429 + $0x110] sm:$0xff]
        %v741 = vld [vmem:[%s429 + $0x118] sm:$0xff]
        %v742 = vld [vmem:[%s429 + $0x120] sm:$0xff]
        %v743 = vld [vmem:[%s429 + $0x128] sm:$0xff]
        %v744 = vld [vmem:[%s429 + $0x130] sm:$0xff]
        %v745 = vld [vmem:[%s429 + $0x138] sm:$0xff]
        %v746 = vld [vmem:[%s429 + $0x140] sm:$0xff]
        %v747 = vld [vmem:[%s429 + $0x148] sm:$0xff]
        %v748 = vld [vmem:[%s429 + $0x150] sm:$0xff]
        %v749 = vld [vmem:[%s429 + $0x158] sm:$0xff]
        %v750 = vld [vmem:[%s429 + $0x160] sm:$0xff]
        %v751 = vld [vmem:[%s429 + $0x168] sm:$0xff]
        %v752 = vld [vmem:[%s429 + $0x170] sm:$0xff]
        %v753 = vld [vmem:[%s429 + $0x178] sm:$0xff]
        %v754 = vld [vmem:[%s429 + $0x180] sm:$0xff]
        %v755 = vld [vmem:[%s429 + $0x188] sm:$0xff]
        %v756 = vld [vmem:[%s429 + $0x190] sm:$0xff]
        %v757 = vld [vmem:[%s429 + $0x198] sm:$0xff]
        %v758 = vld [vmem:[%s429 + $0x1a0] sm:$0xff]
        %v759 = vld [vmem:[%s429 + $0x1a8] sm:$0xff]
        %v760 = vld [vmem:[%s429 + $0x1b0] sm:$0xff]
        %v761 = vld [vmem:[%s429 + $0x1b8] sm:$0xff]
        %v762 = vld [vmem:[%s429 + $0x1c0] sm:$0xff]
        %v763 = vld [vmem:[%s429 + $0x1c8] sm:$0xff]
        %v764 = vld [vmem:[%s429 + $0x1d0] sm:$0xff]
        %v765 = vld [vmem:[%s429 + $0x1d8] sm:$0xff]
        %v766 = vld [vmem:[%s429 + $0x1e0] sm:$0xff]
        %v767 = vld [vmem:[%s429 + $0x1e8] sm:$0xff]
        %v768 = vld [vmem:[%s429 + $0x1f0] sm:$0xff]
        %v769 = vld [vmem:[%s429 + $0x1f8] sm:$0xff]
        %v770 = vld [vmem:[%s429 + $0x200] sm:$0xff]
        %v771 = vld [vmem:[%s429 + $0x208] sm:$0xff]
        %v772 = vld [vmem:[%s429 + $0x210] sm:$0xff]
        %v773 = vld [vmem:[%s429 + $0x218] sm:$0xff]
        %v774 = vld [vmem:[%s429 + $0x220] sm:$0xff]
        %v775 = vld [vmem:[%s429 + $0x228] sm:$0xff]
        %v776 = vld [vmem:[%s429 + $0x230] sm:$0xff]
        %v777 = vld [vmem:[%s429 + $0x238] sm:$0xff]
        %v778 = vld [vmem:[%s429 + $0x240] sm:$0xff]
        %v779 = vld [vmem:[%s429 + $0x248] sm:$0xff]
        %v780 = vld [vmem:[%s429 + $0x250] sm:$0xff]
        %v781 = vld [vmem:[%s429 + $0x258] sm:$0xff]
        %v782 = vld [vmem:[%s429 + $0x260] sm:$0xff]
        %v783 = vld [vmem:[%s429 + $0x268] sm:$0xff]
        %v784 = vld [vmem:[%s429 + $0x270] sm:$0xff]
        %v785 = vld [vmem:[%s429 + $0x278] sm:$0xff]
        %v786 = vld [vmem:[%s429 + $0x280] sm:$0xff]
        %v787 = vld [vmem:[%s429 + $0x288] sm:$0xff]
        %v788 = vld [vmem:[%s429 + $0x290] sm:$0xff]
        %v789 = vld [vmem:[%s429 + $0x298] sm:$0xff]
        %v790 = vld [vmem:[%s429 + $0x2a0] sm:$0xff]
        %v791 = vld [vmem:[%s429 + $0x2a8] sm:$0xff]
        %v792 = vld [vmem:[%s429 + $0x2b0] sm:$0xff]
        %v793 = vld [vmem:[%s429 + $0x2b8] sm:$0xff]
        %v794 = vld [vmem:[%s429 + $0x2c0] sm:$0xff]
        %v795 = vld [vmem:[%s429 + $0x2c8] sm:$0xff]
        %v796 = vld [vmem:[%s429 + $0x2d0] sm:$0xff]
        %v797 = vld [vmem:[%s429 + $0x2d8] sm:$0xff]
        %v798 = vld [vmem:[%s429 + $0x2e0] sm:$0xff]
        %v799 = vld [vmem:[%s429 + $0x2e8] sm:$0xff]
        %v800 = vld [vmem:[%s429 + $0x2f0] sm:$0xff]
        %v801 = vld [vmem:[%s429 + $0x2f8] sm:$0xff]
        %v802 = vld [vmem:[%s429 + $0x300] sm:$0xff]
        %v803 = vld [vmem:[%s429 + $0x308] sm:$0xff]
        %v804 = vld [vmem:[%s429 + $0x310] sm:$0xff]
        %v805 = vld [vmem:[%s429 + $0x318] sm:$0xff]
        %v806 = vld [vmem:[%s429 + $0x320] sm:$0xff]
        %v807 = vld [vmem:[%s429 + $0x328] sm:$0xff]
        %v808 = vld [vmem:[%s429 + $0x330] sm:$0xff]
        %v809 = vld [vmem:[%s429 + $0x338] sm:$0xff]
        %v810 = vld [vmem:[%s429 + $0x340] sm:$0xff]
        %v811 = vld [vmem:[%s429 + $0x348] sm:$0xff]
        %v812 = vld [vmem:[%s429 + $0x350] sm:$0xff]
        %v813 = vld [vmem:[%s429 + $0x358] sm:$0xff]
        %v814 = vld [vmem:[%s429 + $0x360] sm:$0xff]
        %v815 = vld [vmem:[%s429 + $0x368] sm:$0xff]
        %v816 = vld [vmem:[%s429 + $0x370] sm:$0xff]
        %v817 = vld [vmem:[%s429 + $0x378] sm:$0xff]
        %v818 = vld [vmem:[%s429 + $0x380] sm:$0xff]
        %v819 = vld [vmem:[%s429 + $0x388] sm:$0xff]
        %v820 = vld [vmem:[%s429 + $0x390] sm:$0xff]
        %v821 = vld [vmem:[%s429 + $0x398] sm:$0xff]
        %v822 = vld [vmem:[%s429 + $0x3a0] sm:$0xff]
        %v823 = vld [vmem:[%s429 + $0x3a8] sm:$0xff]
        %v824 = vld [vmem:[%s429 + $0x3b0] sm:$0xff]
        %v825 = vld [vmem:[%s429 + $0x3b8] sm:$0xff]
        %v826 = vld [vmem:[%s429 + $0x3c0] sm:$0xff]
        %v827 = vld [vmem:[%s429 + $0x3c8] sm:$0xff]
        %v828 = vld [vmem:[%s429 + $0x3d0] sm:$0xff]
        %v829 = vld [vmem:[%s429 + $0x3d8] sm:$0xff]
        %v830 = vld [vmem:[%s429 + $0x3e0] sm:$0xff]
        %v831 = vld [vmem:[%s429 + $0x3e8] sm:$0xff]
        %v832 = vld [vmem:[%s429 + $0x3f0] sm:$0xff]
        %v833 = vld [vmem:[%s429 + $0x3f8] sm:$0xff]
        %v834 = vmul.f32 %v506, %v706
        %v835 = vmul.f32 %v507, %v707
        %v836 = vmul.f32 %v508, %v708
        %v837 = vmul.f32 %v509, %v709
        %v838 = vmul.f32 %v510, %v710
        %v839 = vmul.f32 %v511, %v711
        %v840 = vmul.f32 %v512, %v712
        %v841 = vmul.f32 %v513, %v713
        %v842 = vmul.f32 %v514, %v714
        %v843 = vmul.f32 %v515, %v715
        %v844 = vmul.f32 %v516, %v716
        %v845 = vmul.f32 %v517, %v717
        %v846 = vmul.f32 %v518, %v718
        %v847 = vmul.f32 %v519, %v719
        %v848 = vmul.f32 %v520, %v720
        %v849 = vmul.f32 %v521, %v721
        %v850 = vmul.f32 %v506, %v738
        %v851 = vmul.f32 %v507, %v739
        %v852 = vmul.f32 %v508, %v740
        %v853 = vmul.f32 %v509, %v741
        %v854 = vmul.f32 %v510, %v742
        %v855 = vmul.f32 %v511, %v743
        %v856 = vmul.f32 %v512, %v744
        %v857 = vmul.f32 %v513, %v745
        %v858 = vmul.f32 %v514, %v746
        %v859 = vmul.f32 %v515, %v747
        %v860 = vmul.f32 %v516, %v748
        %v861 = vmul.f32 %v517, %v749
        %v862 = vmul.f32 %v518, %v750
        %v863 = vmul.f32 %v519, %v751
        %v864 = vmul.f32 %v520, %v752
        %v865 = vmul.f32 %v521, %v753
        %v866 = vmul.f32 %v506, %v770
        %v867 = vmul.f32 %v507, %v771
        %v868 = vmul.f32 %v508, %v772
        %v869 = vmul.f32 %v509, %v773
        %v870 = vmul.f32 %v510, %v774
        %v871 = vmul.f32 %v511, %v775
        %v872 = vmul.f32 %v512, %v776
        %v873 = vmul.f32 %v513, %v777
        %v874 = vmul.f32 %v514, %v778
        %v875 = vmul.f32 %v515, %v779
        %v876 = vmul.f32 %v516, %v780
        %v877 = vmul.f32 %v517, %v781
        %v878 = vmul.f32 %v518, %v782
        %v879 = vmul.f32 %v519, %v783
        %v880 = vmul.f32 %v520, %v784
        %v881 = vmul.f32 %v521, %v785
        %v882 = vmul.f32 %v506, %v802
        %v883 = vmul.f32 %v507, %v803
        %v884 = vmul.f32 %v508, %v804
        %v885 = vmul.f32 %v509, %v805
        %v886 = vmul.f32 %v510, %v806
        %v887 = vmul.f32 %v511, %v807
        %v888 = vmul.f32 %v512, %v808
        %v889 = vmul.f32 %v513, %v809
        %v890 = vmul.f32 %v514, %v810
        %v891 = vmul.f32 %v515, %v811
        %v892 = vmul.f32 %v516, %v812
        %v893 = vmul.f32 %v517, %v813
        %v894 = vmul.f32 %v518, %v814
        %v895 = vmul.f32 %v519, %v815
        %v896 = vmul.f32 %v520, %v816
        %v897 = vmul.f32 %v521, %v817
        %v898 = vmul.f32 %v522, %v722
        %v899 = vmul.f32 %v523, %v723
        %v900 = vmul.f32 %v524, %v724
        %v901 = vmul.f32 %v525, %v725
        %v902 = vmul.f32 %v526, %v726
        %v903 = vmul.f32 %v527, %v727
        %v904 = vmul.f32 %v528, %v728
        %v905 = vmul.f32 %v529, %v729
        %v906 = vmul.f32 %v530, %v730
        %v907 = vmul.f32 %v531, %v731
        %v908 = vmul.f32 %v532, %v732
        %v909 = vmul.f32 %v533, %v733
        %v910 = vmul.f32 %v534, %v734
        %v911 = vmul.f32 %v535, %v735
        %v912 = vmul.f32 %v536, %v736
        %v913 = vmul.f32 %v537, %v737
        %v914 = vmul.f32 %v522, %v754
        %v915 = vmul.f32 %v523, %v755
        %v916 = vmul.f32 %v524, %v756
        %v917 = vmul.f32 %v525, %v757
        %v918 = vmul.f32 %v526, %v758
        %v919 = vmul.f32 %v527, %v759
        %v920 = vmul.f32 %v528, %v760
        %v921 = vmul.f32 %v529, %v761
        %v922 = vmul.f32 %v530, %v762
        %v923 = vmul.f32 %v531, %v763
        %v924 = vmul.f32 %v532, %v764
        %v925 = vmul.f32 %v533, %v765
        %v926 = vmul.f32 %v534, %v766
        %v927 = vmul.f32 %v535, %v767
        %v928 = vmul.f32 %v536, %v768
        %v929 = vmul.f32 %v537, %v769
        %v930 = vmul.f32 %v522, %v786
        %v931 = vmul.f32 %v523, %v787
        %v932 = vmul.f32 %v524, %v788
        %v933 = vmul.f32 %v525, %v789
        %v934 = vmul.f32 %v526, %v790
        %v935 = vmul.f32 %v527, %v791
        %v936 = vmul.f32 %v528, %v792
        %v937 = vmul.f32 %v529, %v793
        %v938 = vmul.f32 %v530, %v794
        %v939 = vmul.f32 %v531, %v795
        %v940 = vmul.f32 %v532, %v796
        %v941 = vmul.f32 %v533, %v797
        %v942 = vmul.f32 %v534, %v798
        %v943 = vmul.f32 %v535, %v799
        %v944 = vmul.f32 %v536, %v800
        %v945 = vmul.f32 %v537, %v801
        %v946 = vmul.f32 %v522, %v818
        %v947 = vmul.f32 %v523, %v819
        %v948 = vmul.f32 %v524, %v820
        %v949 = vmul.f32 %v525, %v821
        %v950 = vmul.f32 %v526, %v822
        %v951 = vmul.f32 %v527, %v823
        %v952 = vmul.f32 %v528, %v824
        %v953 = vmul.f32 %v529, %v825
        %v954 = vmul.f32 %v530, %v826
        %v955 = vmul.f32 %v531, %v827
        %v956 = vmul.f32 %v532, %v828
        %v957 = vmul.f32 %v533, %v829
        %v958 = vmul.f32 %v534, %v830
        %v959 = vmul.f32 %v535, %v831
        %v960 = vmul.f32 %v536, %v832
        %v961 = vmul.f32 %v537, %v833
        %v962 = vsub.f32 %v834, %v898
        %v963 = vsub.f32 %v835, %v899
        %v964 = vsub.f32 %v836, %v900
        %v965 = vsub.f32 %v837, %v901
        %v966 = vsub.f32 %v838, %v902
        %v967 = vsub.f32 %v839, %v903
        %v968 = vsub.f32 %v840, %v904
        %v969 = vsub.f32 %v841, %v905
        %v970 = vsub.f32 %v842, %v906
        %v971 = vsub.f32 %v843, %v907
        %v972 = vsub.f32 %v844, %v908
        %v973 = vsub.f32 %v845, %v909
        %v974 = vsub.f32 %v846, %v910
        %v975 = vsub.f32 %v847, %v911
        %v976 = vsub.f32 %v848, %v912
        %v977 = vsub.f32 %v849, %v913
        %v978 = vsub.f32 %v850, %v914
        %v979 = vsub.f32 %v851, %v915
        %v980 = vsub.f32 %v852, %v916
        %v981 = vsub.f32 %v853, %v917
        %v982 = vsub.f32 %v854, %v918
        %v983 = vsub.f32 %v855, %v919
        %v984 = vsub.f32 %v856, %v920
        %v985 = vsub.f32 %v857, %v921
        %v986 = vsub.f32 %v858, %v922
        %v987 = vsub.f32 %v859, %v923
        %v988 = vsub.f32 %v860, %v924
        %v989 = vsub.f32 %v861, %v925
        %v990 = vsub.f32 %v862, %v926
        %v991 = vsub.f32 %v863, %v927
        %v992 = vsub.f32 %v864, %v928
        %v993 = vsub.f32 %v865, %v929
        %v994 = vsub.f32 %v866, %v930
        %v995 = vsub.f32 %v867, %v931
        %v996 = vsub.f32 %v868, %v932
        %v997 = vsub.f32 %v869, %v933
        %v998 = vsub.f32 %v870, %v934
        %v999 = vsub.f32 %v871, %v935
        %v1000 = vsub.f32 %v872, %v936
        %v1001 = vsub.f32 %v873, %v937
        %v1002 = vsub.f32 %v874, %v938
        %v1003 = vsub.f32 %v875, %v939
        %v1004 = vsub.f32 %v876, %v940
        %v1005 = vsub.f32 %v877, %v941
        %v1006 = vsub.f32 %v878, %v942
        %v1007 = vsub.f32 %v879, %v943
        %v1008 = vsub.f32 %v880, %v944
        %v1009 = vsub.f32 %v881, %v945
        %v1010 = vsub.f32 %v882, %v946
        %v1011 = vsub.f32 %v883, %v947
        %v1012 = vsub.f32 %v884, %v948
        %v1013 = vsub.f32 %v885, %v949
        %v1014 = vsub.f32 %v886, %v950
        %v1015 = vsub.f32 %v887, %v951
        %v1016 = vsub.f32 %v888, %v952
        %v1017 = vsub.f32 %v889, %v953
        %v1018 = vsub.f32 %v890, %v954
        %v1019 = vsub.f32 %v891, %v955
        %v1020 = vsub.f32 %v892, %v956
        %v1021 = vsub.f32 %v893, %v957
        %v1022 = vsub.f32 %v894, %v958
        %v1023 = vsub.f32 %v895, %v959
        %v1024 = vsub.f32 %v896, %v960
        %v1025 = vsub.f32 %v897, %v961
        %v1026 = vmul.f32 %v506, %v722
        %v1027 = vmul.f32 %v507, %v723
        %v1028 = vmul.f32 %v508, %v724
        %v1029 = vmul.f32 %v509, %v725
        %v1030 = vmul.f32 %v510, %v726
        %v1031 = vmul.f32 %v511, %v727
        %v1032 = vmul.f32 %v512, %v728
        %v1033 = vmul.f32 %v513, %v729
        %v1034 = vmul.f32 %v514, %v730
        %v1035 = vmul.f32 %v515, %v731
        %v1036 = vmul.f32 %v516, %v732
        %v1037 = vmul.f32 %v517, %v733
        %v1038 = vmul.f32 %v518, %v734
        %v1039 = vmul.f32 %v519, %v735
        %v1040 = vmul.f32 %v520, %v736
        %v1041 = vmul.f32 %v521, %v737
        %v1042 = vmul.f32 %v506, %v754
        %v1043 = vmul.f32 %v507, %v755
        %v1044 = vmul.f32 %v508, %v756
        %v1045 = vmul.f32 %v509, %v757
        %v1046 = vmul.f32 %v510, %v758
        %v1047 = vmul.f32 %v511, %v759
        %v1048 = vmul.f32 %v512, %v760
        %v1049 = vmul.f32 %v513, %v761
        %v1050 = vmul.f32 %v514, %v762
        %v1051 = vmul.f32 %v515, %v763
        %v1052 = vmul.f32 %v516, %v764
        %v1053 = vmul.f32 %v517, %v765
        %v1054 = vmul.f32 %v518, %v766
        %v1055 = vmul.f32 %v519, %v767
        %v1056 = vmul.f32 %v520, %v768
        %v1057 = vmul.f32 %v521, %v769
        %v1058 = vmul.f32 %v506, %v786
        %v1059 = vmul.f32 %v507, %v787
        %v1060 = vmul.f32 %v508, %v788
        %v1061 = vmul.f32 %v509, %v789
        %v1062 = vmul.f32 %v510, %v790
        %v1063 = vmul.f32 %v511, %v791
        %v1064 = vmul.f32 %v512, %v792
        %v1065 = vmul.f32 %v513, %v793
        %v1066 = vmul.f32 %v514, %v794
        %v1067 = vmul.f32 %v515, %v795
        %v1068 = vmul.f32 %v516, %v796
        %v1069 = vmul.f32 %v517, %v797
        %v1070 = vmul.f32 %v518, %v798
        %v1071 = vmul.f32 %v519, %v799
        %v1072 = vmul.f32 %v520, %v800
        %v1073 = vmul.f32 %v521, %v801
        %v1074 = vmul.f32 %v506, %v818
        %v1075 = vmul.f32 %v507, %v819
        %v1076 = vmul.f32 %v508, %v820
        %v1077 = vmul.f32 %v509, %v821
        %v1078 = vmul.f32 %v510, %v822
        %v1079 = vmul.f32 %v511, %v823
        %v1080 = vmul.f32 %v512, %v824
        %v1081 = vmul.f32 %v513, %v825
        %v1082 = vmul.f32 %v514, %v826
        %v1083 = vmul.f32 %v515, %v827
        %v1084 = vmul.f32 %v516, %v828
        %v1085 = vmul.f32 %v517, %v829
        %v1086 = vmul.f32 %v518, %v830
        %v1087 = vmul.f32 %v519, %v831
        %v1088 = vmul.f32 %v520, %v832
        %v1089 = vmul.f32 %v521, %v833
        %v1090 = vmul.f32 %v522, %v706
        %v1091 = vmul.f32 %v523, %v707
        %v1092 = vmul.f32 %v524, %v708
        %v1093 = vmul.f32 %v525, %v709
        %v1094 = vmul.f32 %v526, %v710
        %v1095 = vmul.f32 %v527, %v711
        %v1096 = vmul.f32 %v528, %v712
        %v1097 = vmul.f32 %v529, %v713
        %v1098 = vmul.f32 %v530, %v714
        %v1099 = vmul.f32 %v531, %v715
        %v1100 = vmul.f32 %v532, %v716
        %v1101 = vmul.f32 %v533, %v717
        %v1102 = vmul.f32 %v534, %v718
        %v1103 = vmul.f32 %v535, %v719
        %v1104 = vmul.f32 %v536, %v720
        %v1105 = vmul.f32 %v537, %v721
        %v1106 = vmul.f32 %v522, %v738
        %v1107 = vmul.f32 %v523, %v739
        %v1108 = vmul.f32 %v524, %v740
        %v1109 = vmul.f32 %v525, %v741
        %v1110 = vmul.f32 %v526, %v742
        %v1111 = vmul.f32 %v527, %v743
        %v1112 = vmul.f32 %v528, %v744
        %v1113 = vmul.f32 %v529, %v745
        %v1114 = vmul.f32 %v530, %v746
        %v1115 = vmul.f32 %v531, %v747
        %v1116 = vmul.f32 %v532, %v748
        %v1117 = vmul.f32 %v533, %v749
        %v1118 = vmul.f32 %v534, %v750
        %v1119 = vmul.f32 %v535, %v751
        %v1120 = vmul.f32 %v536, %v752
        %v1121 = vmul.f32 %v537, %v753
        %v1122 = vmul.f32 %v522, %v770
        %v1123 = vmul.f32 %v523, %v771
        %v1124 = vmul.f32 %v524, %v772
        %v1125 = vmul.f32 %v525, %v773
        %v1126 = vmul.f32 %v526, %v774
        %v1127 = vmul.f32 %v527, %v775
        %v1128 = vmul.f32 %v528, %v776
        %v1129 = vmul.f32 %v529, %v777
        %v1130 = vmul.f32 %v530, %v778
        %v1131 = vmul.f32 %v531, %v779
        %v1132 = vmul.f32 %v532, %v780
        %v1133 = vmul.f32 %v533, %v781
        %v1134 = vmul.f32 %v534, %v782
        %v1135 = vmul.f32 %v535, %v783
        %v1136 = vmul.f32 %v536, %v784
        %v1137 = vmul.f32 %v537, %v785
        %v1138 = vmul.f32 %v522, %v802
        %v1139 = vmul.f32 %v523, %v803
        %v1140 = vmul.f32 %v524, %v804
        %v1141 = vmul.f32 %v525, %v805
        %v1142 = vmul.f32 %v526, %v806
        %v1143 = vmul.f32 %v527, %v807
        %v1144 = vmul.f32 %v528, %v808
        %v1145 = vmul.f32 %v529, %v809
        %v1146 = vmul.f32 %v530, %v810
        %v1147 = vmul.f32 %v531, %v811
        %v1148 = vmul.f32 %v532, %v812
        %v1149 = vmul.f32 %v533, %v813
        %v1150 = vmul.f32 %v534, %v814
        %v1151 = vmul.f32 %v535, %v815
        %v1152 = vmul.f32 %v536, %v816
        %v1153 = vmul.f32 %v537, %v817
        %v1154 = vadd.f32 %v1026, %v1090
        %v1155 = vadd.f32 %v1027, %v1091
        %v1156 = vadd.f32 %v1028, %v1092
        %v1157 = vadd.f32 %v1029, %v1093
        %v1158 = vadd.f32 %v1030, %v1094
        %v1159 = vadd.f32 %v1031, %v1095
        %v1160 = vadd.f32 %v1032, %v1096
        %v1161 = vadd.f32 %v1033, %v1097
        %v1162 = vadd.f32 %v1034, %v1098
        %v1163 = vadd.f32 %v1035, %v1099
        %v1164 = vadd.f32 %v1036, %v1100
        %v1165 = vadd.f32 %v1037, %v1101
        %v1166 = vadd.f32 %v1038, %v1102
        %v1167 = vadd.f32 %v1039, %v1103
        %v1168 = vadd.f32 %v1040, %v1104
        %v1169 = vadd.f32 %v1041, %v1105
        %v1170 = vadd.f32 %v1042, %v1106
        %v1171 = vadd.f32 %v1043, %v1107
        %v1172 = vadd.f32 %v1044, %v1108
        %v1173 = vadd.f32 %v1045, %v1109
        %v1174 = vadd.f32 %v1046, %v1110
        %v1175 = vadd.f32 %v1047, %v1111
        %v1176 = vadd.f32 %v1048, %v1112
        %v1177 = vadd.f32 %v1049, %v1113
        %v1178 = vadd.f32 %v1050, %v1114
        %v1179 = vadd.f32 %v1051, %v1115
        %v1180 = vadd.f32 %v1052, %v1116
        %v1181 = vadd.f32 %v1053, %v1117
        %v1182 = vadd.f32 %v1054, %v1118
        %v1183 = vadd.f32 %v1055, %v1119
        %v1184 = vadd.f32 %v1056, %v1120
        %v1185 = vadd.f32 %v1057, %v1121
        %v1186 = vadd.f32 %v1058, %v1122
        %v1187 = vadd.f32 %v1059, %v1123
        %v1188 = vadd.f32 %v1060, %v1124
        %v1189 = vadd.f32 %v1061, %v1125
        %v1190 = vadd.f32 %v1062, %v1126
        %v1191 = vadd.f32 %v1063, %v1127
        %v1192 = vadd.f32 %v1064, %v1128
        %v1193 = vadd.f32 %v1065, %v1129
        %v1194 = vadd.f32 %v1066, %v1130
        %v1195 = vadd.f32 %v1067, %v1131
        %v1196 = vadd.f32 %v1068, %v1132
        %v1197 = vadd.f32 %v1069, %v1133
        %v1198 = vadd.f32 %v1070, %v1134
        %v1199 = vadd.f32 %v1071, %v1135
        %v1200 = vadd.f32 %v1072, %v1136
        %v1201 = vadd.f32 %v1073, %v1137
        %v1202 = vadd.f32 %v1074, %v1138
        %v1203 = vadd.f32 %v1075, %v1139
        %v1204 = vadd.f32 %v1076, %v1140
        %v1205 = vadd.f32 %v1077, %v1141
        %v1206 = vadd.f32 %v1078, %v1142
        %v1207 = vadd.f32 %v1079, %v1143
        %v1208 = vadd.f32 %v1080, %v1144
        %v1209 = vadd.f32 %v1081, %v1145
        %v1210 = vadd.f32 %v1082, %v1146
        %v1211 = vadd.f32 %v1083, %v1147
        %v1212 = vadd.f32 %v1084, %v1148
        %v1213 = vadd.f32 %v1085, %v1149
        %v1214 = vadd.f32 %v1086, %v1150
        %v1215 = vadd.f32 %v1087, %v1151
        %v1216 = vadd.f32 %v1088, %v1152
        %v1217 = vadd.f32 %v1089, %v1153
        %v1218 = vpack.c.bf16 %v963, %v962
        %v1219 = vpack.c.bf16 %v965, %v964
        %v1220 = vpack.c.bf16 %v967, %v966
        %v1221 = vpack.c.bf16 %v969, %v968
        %v1222 = vpack.c.bf16 %v971, %v970
        %v1223 = vpack.c.bf16 %v973, %v972
        %v1224 = vpack.c.bf16 %v975, %v974
        %v1225 = vpack.c.bf16 %v977, %v976
        %v1226 = vpack.c.bf16 %v979, %v978
        %v1227 = vpack.c.bf16 %v981, %v980
        %v1228 = vpack.c.bf16 %v983, %v982
        %v1229 = vpack.c.bf16 %v985, %v984
        %v1230 = vpack.c.bf16 %v987, %v986
        %v1231 = vpack.c.bf16 %v989, %v988
        %v1232 = vpack.c.bf16 %v991, %v990
        %v1233 = vpack.c.bf16 %v993, %v992
        %v1234 = vpack.c.bf16 %v995, %v994
        %v1235 = vpack.c.bf16 %v997, %v996
        %v1236 = vpack.c.bf16 %v999, %v998
        %v1237 = vpack.c.bf16 %v1001, %v1000
        %v1238 = vpack.c.bf16 %v1003, %v1002
        %v1239 = vpack.c.bf16 %v1005, %v1004
        %v1240 = vpack.c.bf16 %v1007, %v1006
        %v1241 = vpack.c.bf16 %v1009, %v1008
        %v1242 = vpack.c.bf16 %v1011, %v1010
        %v1243 = vpack.c.bf16 %v1013, %v1012
        %v1244 = vpack.c.bf16 %v1015, %v1014
        %v1245 = vpack.c.bf16 %v1017, %v1016
        %v1246 = vpack.c.bf16 %v1019, %v1018
        %v1247 = vpack.c.bf16 %v1021, %v1020
        %v1248 = vpack.c.bf16 %v1023, %v1022
        %v1249 = vpack.c.bf16 %v1025, %v1024
        %v1250 = vpack.c.bf16 %v1155, %v1154
        %v1251 = vpack.c.bf16 %v1157, %v1156
        %v1252 = vpack.c.bf16 %v1159, %v1158
        %v1253 = vpack.c.bf16 %v1161, %v1160
        %v1254 = vpack.c.bf16 %v1163, %v1162
        %v1255 = vpack.c.bf16 %v1165, %v1164
        %v1256 = vpack.c.bf16 %v1167, %v1166
        %v1257 = vpack.c.bf16 %v1169, %v1168
        %v1258 = vpack.c.bf16 %v1171, %v1170
        %v1259 = vpack.c.bf16 %v1173, %v1172
        %v1260 = vpack.c.bf16 %v1175, %v1174
        %v1261 = vpack.c.bf16 %v1177, %v1176
        %v1262 = vpack.c.bf16 %v1179, %v1178
        %v1263 = vpack.c.bf16 %v1181, %v1180
        %v1264 = vpack.c.bf16 %v1183, %v1182
        %v1265 = vpack.c.bf16 %v1185, %v1184
        %v1266 = vpack.c.bf16 %v1187, %v1186
        %v1267 = vpack.c.bf16 %v1189, %v1188
        %v1268 = vpack.c.bf16 %v1191, %v1190
        %v1269 = vpack.c.bf16 %v1193, %v1192
        %v1270 = vpack.c.bf16 %v1195, %v1194
        %v1271 = vpack.c.bf16 %v1197, %v1196
        %v1272 = vpack.c.bf16 %v1199, %v1198
        %v1273 = vpack.c.bf16 %v1201, %v1200
        %v1274 = vpack.c.bf16 %v1203, %v1202
        %v1275 = vpack.c.bf16 %v1205, %v1204
        %v1276 = vpack.c.bf16 %v1207, %v1206
        %v1277 = vpack.c.bf16 %v1209, %v1208
        %v1278 = vpack.c.bf16 %v1211, %v1210
        %v1279 = vpack.c.bf16 %v1213, %v1212
        %v1280 = vpack.c.bf16 %v1215, %v1214
        %v1281 = vpack.c.bf16 %v1217, %v1216
        %v1298 = vunpack.c.l.b16 %v602
        %v1299 = vunpack.c.l.b16 %v603
        %v1300 = vunpack.c.l.b16 %v604
        %v1301 = vunpack.c.l.b16 %v605
        %v1302 = vunpack.c.l.b16 %v606
        %v1303 = vunpack.c.l.b16 %v607
        %v1304 = vunpack.c.l.b16 %v608
        %v1305 = vunpack.c.l.b16 %v609
        %v1306 = vunpack.c.l.b16 %v610
        %v1307 = vunpack.c.l.b16 %v611
        %v1308 = vunpack.c.l.b16 %v612
        %v1309 = vunpack.c.l.b16 %v613
        %v1310 = vunpack.c.l.b16 %v614
        %v1311 = vunpack.c.l.b16 %v615
        %v1312 = vunpack.c.l.b16 %v616
        %v1313 = vunpack.c.l.b16 %v617
        %v1314 = vpack.c.b16 %v1299, %v1298
        %v1315 = vpack.c.b16 %v1301, %v1300
        %v1316 = vpack.c.b16 %v1303, %v1302
        %v1317 = vpack.c.b16 %v1305, %v1304
        %v1318 = vpack.c.b16 %v1307, %v1306
        %v1319 = vpack.c.b16 %v1309, %v1308
        %v1320 = vpack.c.b16 %v1311, %v1310
        %v1321 = vpack.c.b16 %v1313, %v1312
        %1330 = vmatpush.bf16.msra.mxu0 %v1321
        %1331 = vmatpush.bf16.msra.mxu0 %v1320
        %1332 = vmatpush.bf16.msra.mxu0 %v1319
        %1333 = vmatpush.bf16.msra.mxu0 %v1318
        %1334 = vmatpush.bf16.msra.mxu0 %v1317
        %1335 = vmatpush.bf16.msra.mxu0 %v1316
        %1336 = vmatpush.bf16.msra.mxu0 %v1315
        %1337 = vmatpush.bf16.msra.mxu0 %v1314
        %1338 = vmatmul.bf16.gmra.mxu0 %v1218
        %v1339 = vpop.f32.mrf.mxu0
        %v1340 = vadd.f32 0.0, %v1339
        %v1341 = vpop.f32.mrf.mxu0
        %v1342 = vadd.f32 0.0, %v1341
        %1343 = vmatmul.bf16.gmra.mxu0 %v1219
        %v1344 = vpop.f32.mrf.mxu0
        %v1345 = vadd.f32 0.0, %v1344
        %v1346 = vpop.f32.mrf.mxu0
        %v1347 = vadd.f32 0.0, %v1346
        %1348 = vmatmul.bf16.gmra.mxu0 %v1220
        %v1349 = vpop.f32.mrf.mxu0
        %v1350 = vadd.f32 0.0, %v1349
        %v1351 = vpop.f32.mrf.mxu0
        %v1352 = vadd.f32 0.0, %v1351
        %1353 = vmatmul.bf16.gmra.mxu0 %v1221
        %v1354 = vpop.f32.mrf.mxu0
        %v1355 = vadd.f32 0.0, %v1354
        %v1356 = vpop.f32.mrf.mxu0
        %v1357 = vadd.f32 0.0, %v1356
        %1358 = vmatmul.bf16.gmra.mxu0 %v1222
        %v1359 = vpop.f32.mrf.mxu0
        %v1360 = vadd.f32 0.0, %v1359
        %v1361 = vpop.f32.mrf.mxu0
        %v1362 = vadd.f32 0.0, %v1361
        %1363 = vmatmul.bf16.gmra.mxu0 %v1223
        %v1364 = vpop.f32.mrf.mxu0
        %v1365 = vadd.f32 0.0, %v1364
        %v1366 = vpop.f32.mrf.mxu0
        %v1367 = vadd.f32 0.0, %v1366
        %1368 = vmatmul.bf16.gmra.mxu0 %v1224
        %v1369 = vpop.f32.mrf.mxu0
        %v1370 = vadd.f32 0.0, %v1369
        %v1371 = vpop.f32.mrf.mxu0
        %v1372 = vadd.f32 0.0, %v1371
        %1373 = vmatmul.bf16.gmra.mxu0 %v1225
        %v1374 = vpop.f32.mrf.mxu0
        %v1375 = vadd.f32 0.0, %v1374
        %v1376 = vpop.f32.mrf.mxu0
        %v1377 = vadd.f32 0.0, %v1376
        %1378 = vmatmul.bf16.gmra.mxu0 %v1226
        %v1379 = vpop.f32.mrf.mxu0
        %v1380 = vadd.f32 0.0, %v1379
        %v1381 = vpop.f32.mrf.mxu0
        %v1382 = vadd.f32 0.0, %v1381
        %1383 = vmatmul.bf16.gmra.mxu0 %v1227
        %v1384 = vpop.f32.mrf.mxu0
        %v1385 = vadd.f32 0.0, %v1384
        %v1386 = vpop.f32.mrf.mxu0
        %v1387 = vadd.f32 0.0, %v1386
        %1388 = vmatmul.bf16.gmra.mxu0 %v1228
        %v1389 = vpop.f32.mrf.mxu0
        %v1390 = vadd.f32 0.0, %v1389
        %v1391 = vpop.f32.mrf.mxu0
        %v1392 = vadd.f32 0.0, %v1391
        %1393 = vmatmul.bf16.gmra.mxu0 %v1229
        %v1394 = vpop.f32.mrf.mxu0
        %v1395 = vadd.f32 0.0, %v1394
        %v1396 = vpop.f32.mrf.mxu0
        %v1397 = vadd.f32 0.0, %v1396
        %1398 = vmatmul.bf16.gmra.mxu0 %v1230
        %v1399 = vpop.f32.mrf.mxu0
        %v1400 = vadd.f32 0.0, %v1399
        %v1401 = vpop.f32.mrf.mxu0
        %v1402 = vadd.f32 0.0, %v1401
        %1403 = vmatmul.bf16.gmra.mxu0 %v1231
        %v1404 = vpop.f32.mrf.mxu0
        %v1405 = vadd.f32 0.0, %v1404
        %v1406 = vpop.f32.mrf.mxu0
        %v1407 = vadd.f32 0.0, %v1406
        %1408 = vmatmul.bf16.gmra.mxu0 %v1232
        %v1409 = vpop.f32.mrf.mxu0
        %v1410 = vadd.f32 0.0, %v1409
        %v1411 = vpop.f32.mrf.mxu0
        %v1412 = vadd.f32 0.0, %v1411
        %1413 = vmatmul.bf16.gmra.mxu0 %v1233
        %v1414 = vpop.f32.mrf.mxu0
        %v1415 = vadd.f32 0.0, %v1414
        %v1416 = vpop.f32.mrf.mxu0
        %v1417 = vadd.f32 0.0, %v1416
        %1418 = vmatmul.bf16.gmra.mxu0 %v1234
        %v1419 = vpop.f32.mrf.mxu0
        %v1420 = vadd.f32 0.0, %v1419
        %v1421 = vpop.f32.mrf.mxu0
        %v1422 = vadd.f32 0.0, %v1421
        %1423 = vmatmul.bf16.gmra.mxu0 %v1235
        %v1424 = vpop.f32.mrf.mxu0
        %v1425 = vadd.f32 0.0, %v1424
        %v1426 = vpop.f32.mrf.mxu0
        %v1427 = vadd.f32 0.0, %v1426
        %1428 = vmatmul.bf16.gmra.mxu0 %v1236
        %v1429 = vpop.f32.mrf.mxu0
        %v1430 = vadd.f32 0.0, %v1429
        %v1431 = vpop.f32.mrf.mxu0
        %v1432 = vadd.f32 0.0, %v1431
        %1433 = vmatmul.bf16.gmra.mxu0 %v1237
        %v1434 = vpop.f32.mrf.mxu0
        %v1435 = vadd.f32 0.0, %v1434
        %v1436 = vpop.f32.mrf.mxu0
        %v1437 = vadd.f32 0.0, %v1436
        %1438 = vmatmul.bf16.gmra.mxu0 %v1238
        %v1439 = vpop.f32.mrf.mxu0
        %v1440 = vadd.f32 0.0, %v1439
        %v1441 = vpop.f32.mrf.mxu0
        %v1442 = vadd.f32 0.0, %v1441
        %1443 = vmatmul.bf16.gmra.mxu0 %v1239
        %v1444 = vpop.f32.mrf.mxu0
        %v1445 = vadd.f32 0.0, %v1444
        %v1446 = vpop.f32.mrf.mxu0
        %v1447 = vadd.f32 0.0, %v1446
        %1448 = vmatmul.bf16.gmra.mxu0 %v1240
        %v1449 = vpop.f32.mrf.mxu0
        %v1450 = vadd.f32 0.0, %v1449
        %v1451 = vpop.f32.mrf.mxu0
        %v1452 = vadd.f32 0.0, %v1451
        %1453 = vmatmul.bf16.gmra.mxu0 %v1241
        %v1454 = vpop.f32.mrf.mxu0
        %v1455 = vadd.f32 0.0, %v1454
        %v1456 = vpop.f32.mrf.mxu0
        %v1457 = vadd.f32 0.0, %v1456
        %1458 = vmatmul.bf16.gmra.mxu0 %v1242
        %v1459 = vpop.f32.mrf.mxu0
        %v1460 = vadd.f32 0.0, %v1459
        %v1461 = vpop.f32.mrf.mxu0
        %v1462 = vadd.f32 0.0, %v1461
        %1463 = vmatmul.bf16.gmra.mxu0 %v1243
        %v1464 = vpop.f32.mrf.mxu0
        %v1465 = vadd.f32 0.0, %v1464
        %v1466 = vpop.f32.mrf.mxu0
        %v1467 = vadd.f32 0.0, %v1466
        %1468 = vmatmul.bf16.gmra.mxu0 %v1244
        %v1469 = vpop.f32.mrf.mxu0
        %v1470 = vadd.f32 0.0, %v1469
        %v1471 = vpop.f32.mrf.mxu0
        %v1472 = vadd.f32 0.0, %v1471
        %1473 = vmatmul.bf16.gmra.mxu0 %v1245
        %v1474 = vpop.f32.mrf.mxu0
        %v1475 = vadd.f32 0.0, %v1474
        %v1476 = vpop.f32.mrf.mxu0
        %v1477 = vadd.f32 0.0, %v1476
        %1478 = vmatmul.bf16.gmra.mxu0 %v1246
        %v1479 = vpop.f32.mrf.mxu0
        %v1480 = vadd.f32 0.0, %v1479
        %v1481 = vpop.f32.mrf.mxu0
        %v1482 = vadd.f32 0.0, %v1481
        %1483 = vmatmul.bf16.gmra.mxu0 %v1247
        %v1484 = vpop.f32.mrf.mxu0
        %v1485 = vadd.f32 0.0, %v1484
        %v1486 = vpop.f32.mrf.mxu0
        %v1487 = vadd.f32 0.0, %v1486
        %1488 = vmatmul.bf16.gmra.mxu0 %v1248
        %v1489 = vpop.f32.mrf.mxu0
        %v1490 = vadd.f32 0.0, %v1489
        %v1491 = vpop.f32.mrf.mxu0
        %v1492 = vadd.f32 0.0, %v1491
        %1493 = vmatmul.bf16.gmra.mxu0 %v1249
        %v1494 = vpop.f32.mrf.mxu0
        %v1495 = vadd.f32 0.0, %v1494
        %v1496 = vpop.f32.mrf.mxu0
        %v1497 = vadd.f32 0.0, %v1496
        %1498 = vdwg.mxu0
        %v1515 = vunpack.c.l.b16 %v618
        %v1516 = vunpack.c.l.b16 %v619
        %v1517 = vunpack.c.l.b16 %v620
        %v1518 = vunpack.c.l.b16 %v621
        %v1519 = vunpack.c.l.b16 %v622
        %v1520 = vunpack.c.l.b16 %v623
        %v1521 = vunpack.c.l.b16 %v624
        %v1522 = vunpack.c.l.b16 %v625
        %v1523 = vunpack.c.l.b16 %v626
        %v1524 = vunpack.c.l.b16 %v627
        %v1525 = vunpack.c.l.b16 %v628
        %v1526 = vunpack.c.l.b16 %v629
        %v1527 = vunpack.c.l.b16 %v630
        %v1528 = vunpack.c.l.b16 %v631
        %v1529 = vunpack.c.l.b16 %v632
        %v1530 = vunpack.c.l.b16 %v633
        %v1531 = vpack.c.b16 %v1516, %v1515
        %v1532 = vpack.c.b16 %v1518, %v1517
        %v1533 = vpack.c.b16 %v1520, %v1519
        %v1534 = vpack.c.b16 %v1522, %v1521
        %v1535 = vpack.c.b16 %v1524, %v1523
        %v1536 = vpack.c.b16 %v1526, %v1525
        %v1537 = vpack.c.b16 %v1528, %v1527
        %v1538 = vpack.c.b16 %v1530, %v1529
        %1547 = vmatpush.bf16.msra.mxu0 %v1538
        %1548 = vmatpush.bf16.msra.mxu0 %v1537
        %1549 = vmatpush.bf16.msra.mxu0 %v1536
        %1550 = vmatpush.bf16.msra.mxu0 %v1535
        %1551 = vmatpush.bf16.msra.mxu0 %v1534
        %1552 = vmatpush.bf16.msra.mxu0 %v1533
        %1553 = vmatpush.bf16.msra.mxu0 %v1532
        %1554 = vmatpush.bf16.msra.mxu0 %v1531
        %1555 = vmatmul.bf16.gmra.mxu0 %v1250
        %v1556 = vpop.f32.mrf.mxu0
        %v1557 = vadd.f32 0.0, %v1556
        %v1558 = vpop.f32.mrf.mxu0
        %v1559 = vadd.f32 0.0, %v1558
        %1560 = vmatmul.bf16.gmra.mxu0 %v1251
        %v1561 = vpop.f32.mrf.mxu0
        %v1562 = vadd.f32 0.0, %v1561
        %v1563 = vpop.f32.mrf.mxu0
        %v1564 = vadd.f32 0.0, %v1563
        %1565 = vmatmul.bf16.gmra.mxu0 %v1252
        %v1566 = vpop.f32.mrf.mxu0
        %v1567 = vadd.f32 0.0, %v1566
        %v1568 = vpop.f32.mrf.mxu0
        %v1569 = vadd.f32 0.0, %v1568
        %1570 = vmatmul.bf16.gmra.mxu0 %v1253
        %v1571 = vpop.f32.mrf.mxu0
        %v1572 = vadd.f32 0.0, %v1571
        %v1573 = vpop.f32.mrf.mxu0
        %v1574 = vadd.f32 0.0, %v1573
        %1575 = vmatmul.bf16.gmra.mxu0 %v1254
        %v1576 = vpop.f32.mrf.mxu0
        %v1577 = vadd.f32 0.0, %v1576
        %v1578 = vpop.f32.mrf.mxu0
        %v1579 = vadd.f32 0.0, %v1578
        %1580 = vmatmul.bf16.gmra.mxu0 %v1255
        %v1581 = vpop.f32.mrf.mxu0
        %v1582 = vadd.f32 0.0, %v1581
        %v1583 = vpop.f32.mrf.mxu0
        %v1584 = vadd.f32 0.0, %v1583
        %1585 = vmatmul.bf16.gmra.mxu0 %v1256
        %v1586 = vpop.f32.mrf.mxu0
        %v1587 = vadd.f32 0.0, %v1586
        %v1588 = vpop.f32.mrf.mxu0
        %v1589 = vadd.f32 0.0, %v1588
        %1590 = vmatmul.bf16.gmra.mxu0 %v1257
        %v1591 = vpop.f32.mrf.mxu0
        %v1592 = vadd.f32 0.0, %v1591
        %v1593 = vpop.f32.mrf.mxu0
        %v1594 = vadd.f32 0.0, %v1593
        %1595 = vmatmul.bf16.gmra.mxu0 %v1258
        %v1596 = vpop.f32.mrf.mxu0
        %v1597 = vadd.f32 0.0, %v1596
        %v1598 = vpop.f32.mrf.mxu0
        %v1599 = vadd.f32 0.0, %v1598
        %1600 = vmatmul.bf16.gmra.mxu0 %v1259
        %v1601 = vpop.f32.mrf.mxu0
        %v1602 = vadd.f32 0.0, %v1601
        %v1603 = vpop.f32.mrf.mxu0
        %v1604 = vadd.f32 0.0, %v1603
        %1605 = vmatmul.bf16.gmra.mxu0 %v1260
        %v1606 = vpop.f32.mrf.mxu0
        %v1607 = vadd.f32 0.0, %v1606
        %v1608 = vpop.f32.mrf.mxu0
        %v1609 = vadd.f32 0.0, %v1608
        %1610 = vmatmul.bf16.gmra.mxu0 %v1261
        %v1611 = vpop.f32.mrf.mxu0
        %v1612 = vadd.f32 0.0, %v1611
        %v1613 = vpop.f32.mrf.mxu0
        %v1614 = vadd.f32 0.0, %v1613
        %1615 = vmatmul.bf16.gmra.mxu0 %v1262
        %v1616 = vpop.f32.mrf.mxu0
        %v1617 = vadd.f32 0.0, %v1616
        %v1618 = vpop.f32.mrf.mxu0
        %v1619 = vadd.f32 0.0, %v1618
        %1620 = vmatmul.bf16.gmra.mxu0 %v1263
        %v1621 = vpop.f32.mrf.mxu0
        %v1622 = vadd.f32 0.0, %v1621
        %v1623 = vpop.f32.mrf.mxu0
        %v1624 = vadd.f32 0.0, %v1623
        %1625 = vmatmul.bf16.gmra.mxu0 %v1264
        %v1626 = vpop.f32.mrf.mxu0
        %v1627 = vadd.f32 0.0, %v1626
        %v1628 = vpop.f32.mrf.mxu0
        %v1629 = vadd.f32 0.0, %v1628
        %1630 = vmatmul.bf16.gmra.mxu0 %v1265
        %v1631 = vpop.f32.mrf.mxu0
        %v1632 = vadd.f32 0.0, %v1631
        %v1633 = vpop.f32.mrf.mxu0
        %v1634 = vadd.f32 0.0, %v1633
        %1635 = vmatmul.bf16.gmra.mxu0 %v1266
        %v1636 = vpop.f32.mrf.mxu0
        %v1637 = vadd.f32 0.0, %v1636
        %v1638 = vpop.f32.mrf.mxu0
        %v1639 = vadd.f32 0.0, %v1638
        %1640 = vmatmul.bf16.gmra.mxu0 %v1267
        %v1641 = vpop.f32.mrf.mxu0
        %v1642 = vadd.f32 0.0, %v1641
        %v1643 = vpop.f32.mrf.mxu0
        %v1644 = vadd.f32 0.0, %v1643
        %1645 = vmatmul.bf16.gmra.mxu0 %v1268
        %v1646 = vpop.f32.mrf.mxu0
        %v1647 = vadd.f32 0.0, %v1646
        %v1648 = vpop.f32.mrf.mxu0
        %v1649 = vadd.f32 0.0, %v1648
        %1650 = vmatmul.bf16.gmra.mxu0 %v1269
        %v1651 = vpop.f32.mrf.mxu0
        %v1652 = vadd.f32 0.0, %v1651
        %v1653 = vpop.f32.mrf.mxu0
        %v1654 = vadd.f32 0.0, %v1653
        %1655 = vmatmul.bf16.gmra.mxu0 %v1270
        %v1656 = vpop.f32.mrf.mxu0
        %v1657 = vadd.f32 0.0, %v1656
        %v1658 = vpop.f32.mrf.mxu0
        %v1659 = vadd.f32 0.0, %v1658
        %1660 = vmatmul.bf16.gmra.mxu0 %v1271
        %v1661 = vpop.f32.mrf.mxu0
        %v1662 = vadd.f32 0.0, %v1661
        %v1663 = vpop.f32.mrf.mxu0
        %v1664 = vadd.f32 0.0, %v1663
        %1665 = vmatmul.bf16.gmra.mxu0 %v1272
        %v1666 = vpop.f32.mrf.mxu0
        %v1667 = vadd.f32 0.0, %v1666
        %v1668 = vpop.f32.mrf.mxu0
        %v1669 = vadd.f32 0.0, %v1668
        %1670 = vmatmul.bf16.gmra.mxu0 %v1273
        %v1671 = vpop.f32.mrf.mxu0
        %v1672 = vadd.f32 0.0, %v1671
        %v1673 = vpop.f32.mrf.mxu0
        %v1674 = vadd.f32 0.0, %v1673
        %1675 = vmatmul.bf16.gmra.mxu0 %v1274
        %v1676 = vpop.f32.mrf.mxu0
        %v1677 = vadd.f32 0.0, %v1676
        %v1678 = vpop.f32.mrf.mxu0
        %v1679 = vadd.f32 0.0, %v1678
        %1680 = vmatmul.bf16.gmra.mxu0 %v1275
        %v1681 = vpop.f32.mrf.mxu0
        %v1682 = vadd.f32 0.0, %v1681
        %v1683 = vpop.f32.mrf.mxu0
        %v1684 = vadd.f32 0.0, %v1683
        %1685 = vmatmul.bf16.gmra.mxu0 %v1276
        %v1686 = vpop.f32.mrf.mxu0
        %v1687 = vadd.f32 0.0, %v1686
        %v1688 = vpop.f32.mrf.mxu0
        %v1689 = vadd.f32 0.0, %v1688
        %1690 = vmatmul.bf16.gmra.mxu0 %v1277
        %v1691 = vpop.f32.mrf.mxu0
        %v1692 = vadd.f32 0.0, %v1691
        %v1693 = vpop.f32.mrf.mxu0
        %v1694 = vadd.f32 0.0, %v1693
        %1695 = vmatmul.bf16.gmra.mxu0 %v1278
        %v1696 = vpop.f32.mrf.mxu0
        %v1697 = vadd.f32 0.0, %v1696
        %v1698 = vpop.f32.mrf.mxu0
        %v1699 = vadd.f32 0.0, %v1698
        %1700 = vmatmul.bf16.gmra.mxu0 %v1279
        %v1701 = vpop.f32.mrf.mxu0
        %v1702 = vadd.f32 0.0, %v1701
        %v1703 = vpop.f32.mrf.mxu0
        %v1704 = vadd.f32 0.0, %v1703
        %1705 = vmatmul.bf16.gmra.mxu0 %v1280
        %v1706 = vpop.f32.mrf.mxu0
        %v1707 = vadd.f32 0.0, %v1706
        %v1708 = vpop.f32.mrf.mxu0
        %v1709 = vadd.f32 0.0, %v1708
        %1710 = vmatmul.bf16.gmra.mxu0 %v1281
        %v1711 = vpop.f32.mrf.mxu0
        %v1712 = vadd.f32 0.0, %v1711
        %v1713 = vpop.f32.mrf.mxu0
        %v1714 = vadd.f32 0.0, %v1713
        %1715 = vdwg.mxu0
        %v1716 = vsub.f32 %v1340, %v1557
        %v1717 = vsub.f32 %v1342, %v1559
        %v1718 = vsub.f32 %v1345, %v1562
        %v1719 = vsub.f32 %v1347, %v1564
        %v1720 = vsub.f32 %v1350, %v1567
        %v1721 = vsub.f32 %v1352, %v1569
        %v1722 = vsub.f32 %v1355, %v1572
        %v1723 = vsub.f32 %v1357, %v1574
        %v1724 = vsub.f32 %v1360, %v1577
        %v1725 = vsub.f32 %v1362, %v1579
        %v1726 = vsub.f32 %v1365, %v1582
        %v1727 = vsub.f32 %v1367, %v1584
        %v1728 = vsub.f32 %v1370, %v1587
        %v1729 = vsub.f32 %v1372, %v1589
        %v1730 = vsub.f32 %v1375, %v1592
        %v1731 = vsub.f32 %v1377, %v1594
        %v1732 = vsub.f32 %v1380, %v1597
        %v1733 = vsub.f32 %v1382, %v1599
        %v1734 = vsub.f32 %v1385, %v1602
        %v1735 = vsub.f32 %v1387, %v1604
        %v1736 = vsub.f32 %v1390, %v1607
        %v1737 = vsub.f32 %v1392, %v1609
        %v1738 = vsub.f32 %v1395, %v1612
        %v1739 = vsub.f32 %v1397, %v1614
        %v1740 = vsub.f32 %v1400, %v1617
        %v1741 = vsub.f32 %v1402, %v1619
        %v1742 = vsub.f32 %v1405, %v1622
        %v1743 = vsub.f32 %v1407, %v1624
        %v1744 = vsub.f32 %v1410, %v1627
        %v1745 = vsub.f32 %v1412, %v1629
        %v1746 = vsub.f32 %v1415, %v1632
        %v1747 = vsub.f32 %v1417, %v1634
        %v1748 = vsub.f32 %v1420, %v1637
        %v1749 = vsub.f32 %v1422, %v1639
        %v1750 = vsub.f32 %v1425, %v1642
        %v1751 = vsub.f32 %v1427, %v1644
        %v1752 = vsub.f32 %v1430, %v1647
        %v1753 = vsub.f32 %v1432, %v1649
        %v1754 = vsub.f32 %v1435, %v1652
        %v1755 = vsub.f32 %v1437, %v1654
        %v1756 = vsub.f32 %v1440, %v1657
        %v1757 = vsub.f32 %v1442, %v1659
        %v1758 = vsub.f32 %v1445, %v1662
        %v1759 = vsub.f32 %v1447, %v1664
        %v1760 = vsub.f32 %v1450, %v1667
        %v1761 = vsub.f32 %v1452, %v1669
        %v1762 = vsub.f32 %v1455, %v1672
        %v1763 = vsub.f32 %v1457, %v1674
        %v1764 = vsub.f32 %v1460, %v1677
        %v1765 = vsub.f32 %v1462, %v1679
        %v1766 = vsub.f32 %v1465, %v1682
        %v1767 = vsub.f32 %v1467, %v1684
        %v1768 = vsub.f32 %v1470, %v1687
        %v1769 = vsub.f32 %v1472, %v1689
        %v1770 = vsub.f32 %v1475, %v1692
        %v1771 = vsub.f32 %v1477, %v1694
        %v1772 = vsub.f32 %v1480, %v1697
        %v1773 = vsub.f32 %v1482, %v1699
        %v1774 = vsub.f32 %v1485, %v1702
        %v1775 = vsub.f32 %v1487, %v1704
        %v1776 = vsub.f32 %v1490, %v1707
        %v1777 = vsub.f32 %v1492, %v1709
        %v1778 = vsub.f32 %v1495, %v1712
        %v1779 = vsub.f32 %v1497, %v1714
        %1780 = vmatpush.bf16.msra.mxu0 %v1321
        %1781 = vmatpush.bf16.msra.mxu0 %v1320
        %1782 = vmatpush.bf16.msra.mxu0 %v1319
        %1783 = vmatpush.bf16.msra.mxu0 %v1318
        %1784 = vmatpush.bf16.msra.mxu0 %v1317
        %1785 = vmatpush.bf16.msra.mxu0 %v1316
        %1786 = vmatpush.bf16.msra.mxu0 %v1315
        %1787 = vmatpush.bf16.msra.mxu0 %v1314
        %1788 = vmatmul.bf16.gmra.mxu0 %v1250
        %v1789 = vpop.f32.mrf.mxu0
        %v1790 = vadd.f32 0.0, %v1789
        %v1791 = vpop.f32.mrf.mxu0
        %v1792 = vadd.f32 0.0, %v1791
        %1793 = vmatmul.bf16.gmra.mxu0 %v1251
        %v1794 = vpop.f32.mrf.mxu0
        %v1795 = vadd.f32 0.0, %v1794
        %v1796 = vpop.f32.mrf.mxu0
        %v1797 = vadd.f32 0.0, %v1796
        %1798 = vmatmul.bf16.gmra.mxu0 %v1252
        %v1799 = vpop.f32.mrf.mxu0
        %v1800 = vadd.f32 0.0, %v1799
        %v1801 = vpop.f32.mrf.mxu0
        %v1802 = vadd.f32 0.0, %v1801
        %1803 = vmatmul.bf16.gmra.mxu0 %v1253
        %v1804 = vpop.f32.mrf.mxu0
        %v1805 = vadd.f32 0.0, %v1804
        %v1806 = vpop.f32.mrf.mxu0
        %v1807 = vadd.f32 0.0, %v1806
        %1808 = vmatmul.bf16.gmra.mxu0 %v1254
        %v1809 = vpop.f32.mrf.mxu0
        %v1810 = vadd.f32 0.0, %v1809
        %v1811 = vpop.f32.mrf.mxu0
        %v1812 = vadd.f32 0.0, %v1811
        %1813 = vmatmul.bf16.gmra.mxu0 %v1255
        %v1814 = vpop.f32.mrf.mxu0
        %v1815 = vadd.f32 0.0, %v1814
        %v1816 = vpop.f32.mrf.mxu0
        %v1817 = vadd.f32 0.0, %v1816
        %1818 = vmatmul.bf16.gmra.mxu0 %v1256
        %v1819 = vpop.f32.mrf.mxu0
        %v1820 = vadd.f32 0.0, %v1819
        %v1821 = vpop.f32.mrf.mxu0
        %v1822 = vadd.f32 0.0, %v1821
        %1823 = vmatmul.bf16.gmra.mxu0 %v1257
        %v1824 = vpop.f32.mrf.mxu0
        %v1825 = vadd.f32 0.0, %v1824
        %v1826 = vpop.f32.mrf.mxu0
        %v1827 = vadd.f32 0.0, %v1826
        %1828 = vmatmul.bf16.gmra.mxu0 %v1258
        %v1829 = vpop.f32.mrf.mxu0
        %v1830 = vadd.f32 0.0, %v1829
        %v1831 = vpop.f32.mrf.mxu0
        %v1832 = vadd.f32 0.0, %v1831
        %1833 = vmatmul.bf16.gmra.mxu0 %v1259
        %v1834 = vpop.f32.mrf.mxu0
        %v1835 = vadd.f32 0.0, %v1834
        %v1836 = vpop.f32.mrf.mxu0
        %v1837 = vadd.f32 0.0, %v1836
        %1838 = vmatmul.bf16.gmra.mxu0 %v1260
        %v1839 = vpop.f32.mrf.mxu0
        %v1840 = vadd.f32 0.0, %v1839
        %v1841 = vpop.f32.mrf.mxu0
        %v1842 = vadd.f32 0.0, %v1841
        %1843 = vmatmul.bf16.gmra.mxu0 %v1261
        %v1844 = vpop.f32.mrf.mxu0
        %v1845 = vadd.f32 0.0, %v1844
        %v1846 = vpop.f32.mrf.mxu0
        %v1847 = vadd.f32 0.0, %v1846
        %1848 = vmatmul.bf16.gmra.mxu0 %v1262
        %v1849 = vpop.f32.mrf.mxu0
        %v1850 = vadd.f32 0.0, %v1849
        %v1851 = vpop.f32.mrf.mxu0
        %v1852 = vadd.f32 0.0, %v1851
        %1853 = vmatmul.bf16.gmra.mxu0 %v1263
        %v1854 = vpop.f32.mrf.mxu0
        %v1855 = vadd.f32 0.0, %v1854
        %v1856 = vpop.f32.mrf.mxu0
        %v1857 = vadd.f32 0.0, %v1856
        %1858 = vmatmul.bf16.gmra.mxu0 %v1264
        %v1859 = vpop.f32.mrf.mxu0
        %v1860 = vadd.f32 0.0, %v1859
        %v1861 = vpop.f32.mrf.mxu0
        %v1862 = vadd.f32 0.0, %v1861
        %1863 = vmatmul.bf16.gmra.mxu0 %v1265
        %v1864 = vpop.f32.mrf.mxu0
        %v1865 = vadd.f32 0.0, %v1864
        %v1866 = vpop.f32.mrf.mxu0
        %v1867 = vadd.f32 0.0, %v1866
        %1868 = vmatmul.bf16.gmra.mxu0 %v1266
        %v1869 = vpop.f32.mrf.mxu0
        %v1870 = vadd.f32 0.0, %v1869
        %v1871 = vpop.f32.mrf.mxu0
        %v1872 = vadd.f32 0.0, %v1871
        %1873 = vmatmul.bf16.gmra.mxu0 %v1267
        %v1874 = vpop.f32.mrf.mxu0
        %v1875 = vadd.f32 0.0, %v1874
        %v1876 = vpop.f32.mrf.mxu0
        %v1877 = vadd.f32 0.0, %v1876
        %1878 = vmatmul.bf16.gmra.mxu0 %v1268
        %v1879 = vpop.f32.mrf.mxu0
        %v1880 = vadd.f32 0.0, %v1879
        %v1881 = vpop.f32.mrf.mxu0
        %v1882 = vadd.f32 0.0, %v1881
        %1883 = vmatmul.bf16.gmra.mxu0 %v1269
        %v1884 = vpop.f32.mrf.mxu0
        %v1885 = vadd.f32 0.0, %v1884
        %v1886 = vpop.f32.mrf.mxu0
        %v1887 = vadd.f32 0.0, %v1886
        %1888 = vmatmul.bf16.gmra.mxu0 %v1270
        %v1889 = vpop.f32.mrf.mxu0
        %v1890 = vadd.f32 0.0, %v1889
        %v1891 = vpop.f32.mrf.mxu0
        %v1892 = vadd.f32 0.0, %v1891
        %1893 = vmatmul.bf16.gmra.mxu0 %v1271
        %v1894 = vpop.f32.mrf.mxu0
        %v1895 = vadd.f32 0.0, %v1894
        %v1896 = vpop.f32.mrf.mxu0
        %v1897 = vadd.f32 0.0, %v1896
        %1898 = vmatmul.bf16.gmra.mxu0 %v1272
        %v1899 = vpop.f32.mrf.mxu0
        %v1900 = vadd.f32 0.0, %v1899
        %v1901 = vpop.f32.mrf.mxu0
        %v1902 = vadd.f32 0.0, %v1901
        %1903 = vmatmul.bf16.gmra.mxu0 %v1273
        %v1904 = vpop.f32.mrf.mxu0
        %v1905 = vadd.f32 0.0, %v1904
        %v1906 = vpop.f32.mrf.mxu0
        %v1907 = vadd.f32 0.0, %v1906
        %1908 = vmatmul.bf16.gmra.mxu0 %v1274
        %v1909 = vpop.f32.mrf.mxu0
        %v1910 = vadd.f32 0.0, %v1909
        %v1911 = vpop.f32.mrf.mxu0
        %v1912 = vadd.f32 0.0, %v1911
        %1913 = vmatmul.bf16.gmra.mxu0 %v1275
        %v1914 = vpop.f32.mrf.mxu0
        %v1915 = vadd.f32 0.0, %v1914
        %v1916 = vpop.f32.mrf.mxu0
        %v1917 = vadd.f32 0.0, %v1916
        %1918 = vmatmul.bf16.gmra.mxu0 %v1276
        %v1919 = vpop.f32.mrf.mxu0
        %v1920 = vadd.f32 0.0, %v1919
        %v1921 = vpop.f32.mrf.mxu0
        %v1922 = vadd.f32 0.0, %v1921
        %1923 = vmatmul.bf16.gmra.mxu0 %v1277
        %v1924 = vpop.f32.mrf.mxu0
        %v1925 = vadd.f32 0.0, %v1924
        %v1926 = vpop.f32.mrf.mxu0
        %v1927 = vadd.f32 0.0, %v1926
        %1928 = vmatmul.bf16.gmra.mxu0 %v1278
        %v1929 = vpop.f32.mrf.mxu0
        %v1930 = vadd.f32 0.0, %v1929
        %v1931 = vpop.f32.mrf.mxu0
        %v1932 = vadd.f32 0.0, %v1931
        %1933 = vmatmul.bf16.gmra.mxu0 %v1279
        %v1934 = vpop.f32.mrf.mxu0
        %v1935 = vadd.f32 0.0, %v1934
        %v1936 = vpop.f32.mrf.mxu0
        %v1937 = vadd.f32 0.0, %v1936
        %1938 = vmatmul.bf16.gmra.mxu0 %v1280
        %v1939 = vpop.f32.mrf.mxu0
        %v1940 = vadd.f32 0.0, %v1939
        %v1941 = vpop.f32.mrf.mxu0
        %v1942 = vadd.f32 0.0, %v1941
        %1943 = vmatmul.bf16.gmra.mxu0 %v1281
        %v1944 = vpop.f32.mrf.mxu0
        %v1945 = vadd.f32 0.0, %v1944
        %v1946 = vpop.f32.mrf.mxu0
        %v1947 = vadd.f32 0.0, %v1946
        %1948 = vdwg.mxu0
        %1949 = vmatpush.bf16.msra.mxu0 %v1538
        %1950 = vmatpush.bf16.msra.mxu0 %v1537
        %1951 = vmatpush.bf16.msra.mxu0 %v1536
        %1952 = vmatpush.bf16.msra.mxu0 %v1535
        %1953 = vmatpush.bf16.msra.mxu0 %v1534
        %1954 = vmatpush.bf16.msra.mxu0 %v1533
        %1955 = vmatpush.bf16.msra.mxu0 %v1532
        %1956 = vmatpush.bf16.msra.mxu0 %v1531
        %1957 = vmatmul.bf16.gmra.mxu0 %v1218
        %v1958 = vpop.f32.mrf.mxu0
        %v1959 = vadd.f32 %v1790, %v1958
        %v1960 = vpop.f32.mrf.mxu0
        %v1961 = vadd.f32 %v1792, %v1960
        %1962 = vmatmul.bf16.gmra.mxu0 %v1219
        %v1963 = vpop.f32.mrf.mxu0
        %v1964 = vadd.f32 %v1795, %v1963
        %v1965 = vpop.f32.mrf.mxu0
        %v1966 = vadd.f32 %v1797, %v1965
        %1967 = vmatmul.bf16.gmra.mxu0 %v1220
        %v1968 = vpop.f32.mrf.mxu0
        %v1969 = vadd.f32 %v1800, %v1968
        %v1970 = vpop.f32.mrf.mxu0
        %v1971 = vadd.f32 %v1802, %v1970
        %1972 = vmatmul.bf16.gmra.mxu0 %v1221
        %v1973 = vpop.f32.mrf.mxu0
        %v1974 = vadd.f32 %v1805, %v1973
        %v1975 = vpop.f32.mrf.mxu0
        %v1976 = vadd.f32 %v1807, %v1975
        %1977 = vmatmul.bf16.gmra.mxu0 %v1222
        %v1978 = vpop.f32.mrf.mxu0
        %v1979 = vadd.f32 %v1810, %v1978
        %v1980 = vpop.f32.mrf.mxu0
        %v1981 = vadd.f32 %v1812, %v1980
        %1982 = vmatmul.bf16.gmra.mxu0 %v1223
        %v1983 = vpop.f32.mrf.mxu0
        %v1984 = vadd.f32 %v1815, %v1983
        %v1985 = vpop.f32.mrf.mxu0
        %v1986 = vadd.f32 %v1817, %v1985
        %1987 = vmatmul.bf16.gmra.mxu0 %v1224
        %v1988 = vpop.f32.mrf.mxu0
        %v1989 = vadd.f32 %v1820, %v1988
        %v1990 = vpop.f32.mrf.mxu0
        %v1991 = vadd.f32 %v1822, %v1990
        %1992 = vmatmul.bf16.gmra.mxu0 %v1225
        %v1993 = vpop.f32.mrf.mxu0
        %v1994 = vadd.f32 %v1825, %v1993
        %v1995 = vpop.f32.mrf.mxu0
        %v1996 = vadd.f32 %v1827, %v1995
        %1997 = vmatmul.bf16.gmra.mxu0 %v1226
        %v1998 = vpop.f32.mrf.mxu0
        %v1999 = vadd.f32 %v1830, %v1998
        %v2000 = vpop.f32.mrf.mxu0
        %v2001 = vadd.f32 %v1832, %v2000
        %2002 = vmatmul.bf16.gmra.mxu0 %v1227
        %v2003 = vpop.f32.mrf.mxu0
        %v2004 = vadd.f32 %v1835, %v2003
        %v2005 = vpop.f32.mrf.mxu0
        %v2006 = vadd.f32 %v1837, %v2005
        %2007 = vmatmul.bf16.gmra.mxu0 %v1228
        %v2008 = vpop.f32.mrf.mxu0
        %v2009 = vadd.f32 %v1840, %v2008
        %v2010 = vpop.f32.mrf.mxu0
        %v2011 = vadd.f32 %v1842, %v2010
        %2012 = vmatmul.bf16.gmra.mxu0 %v1229
        %v2013 = vpop.f32.mrf.mxu0
        %v2014 = vadd.f32 %v1845, %v2013
        %v2015 = vpop.f32.mrf.mxu0
        %v2016 = vadd.f32 %v1847, %v2015
        %2017 = vmatmul.bf16.gmra.mxu0 %v1230
        %v2018 = vpop.f32.mrf.mxu0
        %v2019 = vadd.f32 %v1850, %v2018
        %v2020 = vpop.f32.mrf.mxu0
        %v2021 = vadd.f32 %v1852, %v2020
        %2022 = vmatmul.bf16.gmra.mxu0 %v1231
        %v2023 = vpop.f32.mrf.mxu0
        %v2024 = vadd.f32 %v1855, %v2023
        %v2025 = vpop.f32.mrf.mxu0
        %v2026 = vadd.f32 %v1857, %v2025
        %2027 = vmatmul.bf16.gmra.mxu0 %v1232
        %v2028 = vpop.f32.mrf.mxu0
        %v2029 = vadd.f32 %v1860, %v2028
        %v2030 = vpop.f32.mrf.mxu0
        %v2031 = vadd.f32 %v1862, %v2030
        %2032 = vmatmul.bf16.gmra.mxu0 %v1233
        %v2033 = vpop.f32.mrf.mxu0
        %v2034 = vadd.f32 %v1865, %v2033
        %v2035 = vpop.f32.mrf.mxu0
        %v2036 = vadd.f32 %v1867, %v2035
        %2037 = vmatmul.bf16.gmra.mxu0 %v1234
        %v2038 = vpop.f32.mrf.mxu0
        %v2039 = vadd.f32 %v1870, %v2038
        %v2040 = vpop.f32.mrf.mxu0
        %v2041 = vadd.f32 %v1872, %v2040
        %2042 = vmatmul.bf16.gmra.mxu0 %v1235
        %v2043 = vpop.f32.mrf.mxu0
        %v2044 = vadd.f32 %v1875, %v2043
        %v2045 = vpop.f32.mrf.mxu0
        %v2046 = vadd.f32 %v1877, %v2045
        %2047 = vmatmul.bf16.gmra.mxu0 %v1236
        %v2048 = vpop.f32.mrf.mxu0
        %v2049 = vadd.f32 %v1880, %v2048
        %v2050 = vpop.f32.mrf.mxu0
        %v2051 = vadd.f32 %v1882, %v2050
        %2052 = vmatmul.bf16.gmra.mxu0 %v1237
        %v2053 = vpop.f32.mrf.mxu0
        %v2054 = vadd.f32 %v1885, %v2053
        %v2055 = vpop.f32.mrf.mxu0
        %v2056 = vadd.f32 %v1887, %v2055
        %2057 = vmatmul.bf16.gmra.mxu0 %v1238
        %v2058 = vpop.f32.mrf.mxu0
        %v2059 = vadd.f32 %v1890, %v2058
        %v2060 = vpop.f32.mrf.mxu0
        %v2061 = vadd.f32 %v1892, %v2060
        %2062 = vmatmul.bf16.gmra.mxu0 %v1239
        %v2063 = vpop.f32.mrf.mxu0
        %v2064 = vadd.f32 %v1895, %v2063
        %v2065 = vpop.f32.mrf.mxu0
        %v2066 = vadd.f32 %v1897, %v2065
        %2067 = vmatmul.bf16.gmra.mxu0 %v1240
        %v2068 = vpop.f32.mrf.mxu0
        %v2069 = vadd.f32 %v1900, %v2068
        %v2070 = vpop.f32.mrf.mxu0
        %v2071 = vadd.f32 %v1902, %v2070
        %2072 = vmatmul.bf16.gmra.mxu0 %v1241
        %v2073 = vpop.f32.mrf.mxu0
        %v2074 = vadd.f32 %v1905, %v2073
        %v2075 = vpop.f32.mrf.mxu0
        %v2076 = vadd.f32 %v1907, %v2075
        %2077 = vmatmul.bf16.gmra.mxu0 %v1242
        %v2078 = vpop.f32.mrf.mxu0
        %v2079 = vadd.f32 %v1910, %v2078
        %v2080 = vpop.f32.mrf.mxu0
        %v2081 = vadd.f32 %v1912, %v2080
        %2082 = vmatmul.bf16.gmra.mxu0 %v1243
        %v2083 = vpop.f32.mrf.mxu0
        %v2084 = vadd.f32 %v1915, %v2083
        %v2085 = vpop.f32.mrf.mxu0
        %v2086 = vadd.f32 %v1917, %v2085
        %2087 = vmatmul.bf16.gmra.mxu0 %v1244
        %v2088 = vpop.f32.mrf.mxu0
        %v2089 = vadd.f32 %v1920, %v2088
        %v2090 = vpop.f32.mrf.mxu0
        %v2091 = vadd.f32 %v1922, %v2090
        %2092 = vmatmul.bf16.gmra.mxu0 %v1245
        %v2093 = vpop.f32.mrf.mxu0
        %v2094 = vadd.f32 %v1925, %v2093
        %v2095 = vpop.f32.mrf.mxu0
        %v2096 = vadd.f32 %v1927, %v2095
        %2097 = vmatmul.bf16.gmra.mxu0 %v1246
        %v2098 = vpop.f32.mrf.mxu0
        %v2099 = vadd.f32 %v1930, %v2098
        %v2100 = vpop.f32.mrf.mxu0
        %v2101 = vadd.f32 %v1932, %v2100
        %2102 = vmatmul.bf16.gmra.mxu0 %v1247
        %v2103 = vpop.f32.mrf.mxu0
        %v2104 = vadd.f32 %v1935, %v2103
        %v2105 = vpop.f32.mrf.mxu0
        %v2106 = vadd.f32 %v1937, %v2105
        %2107 = vmatmul.bf16.gmra.mxu0 %v1248
        %v2108 = vpop.f32.mrf.mxu0
        %v2109 = vadd.f32 %v1940, %v2108
        %v2110 = vpop.f32.mrf.mxu0
        %v2111 = vadd.f32 %v1942, %v2110
        %2112 = vmatmul.bf16.gmra.mxu0 %v1249
        %v2113 = vpop.f32.mrf.mxu0
        %v2114 = vadd.f32 %v1945, %v2113
        %v2115 = vpop.f32.mrf.mxu0
        %v2116 = vadd.f32 %v1947, %v2115
        %2117 = vdwg.mxu0
        %2118 = vst [vmem:[#allocation2] sm:$0xff] %v1716
        %2119 = vst [vmem:[#allocation2 + $0x8] sm:$0xff] %v1717
        %2120 = vst [vmem:[#allocation2 + $0x10] sm:$0xff] %v1718
        %2121 = vst [vmem:[#allocation2 + $0x18] sm:$0xff] %v1719
        %2122 = vst [vmem:[#allocation2 + $0x20] sm:$0xff] %v1720
        %2123 = vst [vmem:[#allocation2 + $0x28] sm:$0xff] %v1721
        %2124 = vst [vmem:[#allocation2 + $0x30] sm:$0xff] %v1722
        %2125 = vst [vmem:[#allocation2 + $0x38] sm:$0xff] %v1723
        %2126 = vst [vmem:[#allocation2 + $0x40] sm:$0xff] %v1724
        %2127 = vst [vmem:[#allocation2 + $0x48] sm:$0xff] %v1725
        %2128 = vst [vmem:[#allocation2 + $0x50] sm:$0xff] %v1726
        %2129 = vst [vmem:[#allocation2 + $0x58] sm:$0xff] %v1727
        %2130 = vst [vmem:[#allocation2 + $0x60] sm:$0xff] %v1728
        %2131 = vst [vmem:[#allocation2 + $0x68] sm:$0xff] %v1729
        %2132 = vst [vmem:[#allocation2 + $0x70] sm:$0xff] %v1730
        %2133 = vst [vmem:[#allocation2 + $0x78] sm:$0xff] %v1731
        %2134 = vst [vmem:[#allocation2 + $0x80] sm:$0xff] %v1732
        %2135 = vst [vmem:[#allocation2 + $0x88] sm:$0xff] %v1733
        %2136 = vst [vmem:[#allocation2 + $0x90] sm:$0xff] %v1734
        %2137 = vst [vmem:[#allocation2 + $0x98] sm:$0xff] %v1735
        %2138 = vst [vmem:[#allocation2 + $0xa0] sm:$0xff] %v1736
        %2139 = vst [vmem:[#allocation2 + $0xa8] sm:$0xff] %v1737
        %2140 = vst [vmem:[#allocation2 + $0xb0] sm:$0xff] %v1738
        %2141 = vst [vmem:[#allocation2 + $0xb8] sm:$0xff] %v1739
        %2142 = vst [vmem:[#allocation2 + $0xc0] sm:$0xff] %v1740
        %2143 = vst [vmem:[#allocation2 + $0xc8] sm:$0xff] %v1741
        %2144 = vst [vmem:[#allocation2 + $0xd0] sm:$0xff] %v1742
        %2145 = vst [vmem:[#allocation2 + $0xd8] sm:$0xff] %v1743
        %2146 = vst [vmem:[#allocation2 + $0xe0] sm:$0xff] %v1744
        %2147 = vst [vmem:[#allocation2 + $0xe8] sm:$0xff] %v1745
        %2148 = vst [vmem:[#allocation2 + $0xf0] sm:$0xff] %v1746
        %2149 = vst [vmem:[#allocation2 + $0xf8] sm:$0xff] %v1747
        %2150 = vst [vmem:[#allocation2 + $0x100] sm:$0xff] %v1748
        %2151 = vst [vmem:[#allocation2 + $0x108] sm:$0xff] %v1749
        %2152 = vst [vmem:[#allocation2 + $0x110] sm:$0xff] %v1750
        %2153 = vst [vmem:[#allocation2 + $0x118] sm:$0xff] %v1751
        %2154 = vst [vmem:[#allocation2 + $0x120] sm:$0xff] %v1752
        %2155 = vst [vmem:[#allocation2 + $0x128] sm:$0xff] %v1753
        %2156 = vst [vmem:[#allocation2 + $0x130] sm:$0xff] %v1754
        %2157 = vst [vmem:[#allocation2 + $0x138] sm:$0xff] %v1755
        %2158 = vst [vmem:[#allocation2 + $0x140] sm:$0xff] %v1756
        %2159 = vst [vmem:[#allocation2 + $0x148] sm:$0xff] %v1757
        %2160 = vst [vmem:[#allocation2 + $0x150] sm:$0xff] %v1758
        %2161 = vst [vmem:[#allocation2 + $0x158] sm:$0xff] %v1759
        %2162 = vst [vmem:[#allocation2 + $0x160] sm:$0xff] %v1760
        %2163 = vst [vmem:[#allocation2 + $0x168] sm:$0xff] %v1761
        %2164 = vst [vmem:[#allocation2 + $0x170] sm:$0xff] %v1762
        %2165 = vst [vmem:[#allocation2 + $0x178] sm:$0xff] %v1763
        %2166 = vst [vmem:[#allocation2 + $0x180] sm:$0xff] %v1764
        %2167 = vst [vmem:[#allocation2 + $0x188] sm:$0xff] %v1765
        %2168 = vst [vmem:[#allocation2 + $0x190] sm:$0xff] %v1766
        %2169 = vst [vmem:[#allocation2 + $0x198] sm:$0xff] %v1767
        %2170 = vst [vmem:[#allocation2 + $0x1a0] sm:$0xff] %v1768
        %2171 = vst [vmem:[#allocation2 + $0x1a8] sm:$0xff] %v1769
        %2172 = vst [vmem:[#allocation2 + $0x1b0] sm:$0xff] %v1770
        %2173 = vst [vmem:[#allocation2 + $0x1b8] sm:$0xff] %v1771
        %2174 = vst [vmem:[#allocation2 + $0x1c0] sm:$0xff] %v1772
        %2175 = vst [vmem:[#allocation2 + $0x1c8] sm:$0xff] %v1773
        %2176 = vst [vmem:[#allocation2 + $0x1d0] sm:$0xff] %v1774
        %2177 = vst [vmem:[#allocation2 + $0x1d8] sm:$0xff] %v1775
        %2178 = vst [vmem:[#allocation2 + $0x1e0] sm:$0xff] %v1776
        %2179 = vst [vmem:[#allocation2 + $0x1e8] sm:$0xff] %v1777
        %2180 = vst [vmem:[#allocation2 + $0x1f0] sm:$0xff] %v1778
        %2181 = vst [vmem:[#allocation2 + $0x1f8] sm:$0xff] %v1779
        %2182 = vst [vmem:[#allocation3] sm:$0xff] %v1959
        %2183 = vst [vmem:[#allocation3 + $0x8] sm:$0xff] %v1961
        %2184 = vst [vmem:[#allocation3 + $0x10] sm:$0xff] %v1964
        %2185 = vst [vmem:[#allocation3 + $0x18] sm:$0xff] %v1966
        %2186 = vst [vmem:[#allocation3 + $0x20] sm:$0xff] %v1969
        %2187 = vst [vmem:[#allocation3 + $0x28] sm:$0xff] %v1971
        %2188 = vst [vmem:[#allocation3 + $0x30] sm:$0xff] %v1974
        %2189 = vst [vmem:[#allocation3 + $0x38] sm:$0xff] %v1976
        %2190 = vst [vmem:[#allocation3 + $0x40] sm:$0xff] %v1979
        %2191 = vst [vmem:[#allocation3 + $0x48] sm:$0xff] %v1981
        %2192 = vst [vmem:[#allocation3 + $0x50] sm:$0xff] %v1984
        %2193 = vst [vmem:[#allocation3 + $0x58] sm:$0xff] %v1986
        %2194 = vst [vmem:[#allocation3 + $0x60] sm:$0xff] %v1989
        %2195 = vst [vmem:[#allocation3 + $0x68] sm:$0xff] %v1991
        %2196 = vst [vmem:[#allocation3 + $0x70] sm:$0xff] %v1994
        %2197 = vst [vmem:[#allocation3 + $0x78] sm:$0xff] %v1996
        %2198 = vst [vmem:[#allocation3 + $0x80] sm:$0xff] %v1999
        %2199 = vst [vmem:[#allocation3 + $0x88] sm:$0xff] %v2001
        %2200 = vst [vmem:[#allocation3 + $0x90] sm:$0xff] %v2004
        %2201 = vst [vmem:[#allocation3 + $0x98] sm:$0xff] %v2006
        %2202 = vst [vmem:[#allocation3 + $0xa0] sm:$0xff] %v2009
        %2203 = vst [vmem:[#allocation3 + $0xa8] sm:$0xff] %v2011
        %2204 = vst [vmem:[#allocation3 + $0xb0] sm:$0xff] %v2014
        %2205 = vst [vmem:[#allocation3 + $0xb8] sm:$0xff] %v2016
        %2206 = vst [vmem:[#allocation3 + $0xc0] sm:$0xff] %v2019
        %2207 = vst [vmem:[#allocation3 + $0xc8] sm:$0xff] %v2021
        %2208 = vst [vmem:[#allocation3 + $0xd0] sm:$0xff] %v2024
        %2209 = vst [vmem:[#allocation3 + $0xd8] sm:$0xff] %v2026
        %2210 = vst [vmem:[#allocation3 + $0xe0] sm:$0xff] %v2029
        %2211 = vst [vmem:[#allocation3 + $0xe8] sm:$0xff] %v2031
        %2212 = vst [vmem:[#allocation3 + $0xf0] sm:$0xff] %v2034
        %2213 = vst [vmem:[#allocation3 + $0xf8] sm:$0xff] %v2036
        %2214 = vst [vmem:[#allocation3 + $0x100] sm:$0xff] %v2039
        %2215 = vst [vmem:[#allocation3 + $0x108] sm:$0xff] %v2041
        %2216 = vst [vmem:[#allocation3 + $0x110] sm:$0xff] %v2044
        %2217 = vst [vmem:[#allocation3 + $0x118] sm:$0xff] %v2046
        %2218 = vst [vmem:[#allocation3 + $0x120] sm:$0xff] %v2049
        %2219 = vst [vmem:[#allocation3 + $0x128] sm:$0xff] %v2051
        %2220 = vst [vmem:[#allocation3 + $0x130] sm:$0xff] %v2054
        %2221 = vst [vmem:[#allocation3 + $0x138] sm:$0xff] %v2056
        %2222 = vst [vmem:[#allocation3 + $0x140] sm:$0xff] %v2059
        %2223 = vst [vmem:[#allocation3 + $0x148] sm:$0xff] %v2061
        %2224 = vst [vmem:[#allocation3 + $0x150] sm:$0xff] %v2064
        %2225 = vst [vmem:[#allocation3 + $0x158] sm:$0xff] %v2066
        %2226 = vst [vmem:[#allocation3 + $0x160] sm:$0xff] %v2069
        %2227 = vst [vmem:[#allocation3 + $0x168] sm:$0xff] %v2071
        %2228 = vst [vmem:[#allocation3 + $0x170] sm:$0xff] %v2074
        %2229 = vst [vmem:[#allocation3 + $0x178] sm:$0xff] %v2076
        %2230 = vst [vmem:[#allocation3 + $0x180] sm:$0xff] %v2079
        %2231 = vst [vmem:[#allocation3 + $0x188] sm:$0xff] %v2081
        %2232 = vst [vmem:[#allocation3 + $0x190] sm:$0xff] %v2084
        %2233 = vst [vmem:[#allocation3 + $0x198] sm:$0xff] %v2086
        %2234 = vst [vmem:[#allocation3 + $0x1a0] sm:$0xff] %v2089
        %2235 = vst [vmem:[#allocation3 + $0x1a8] sm:$0xff] %v2091
        %2236 = vst [vmem:[#allocation3 + $0x1b0] sm:$0xff] %v2094
        %2237 = vst [vmem:[#allocation3 + $0x1b8] sm:$0xff] %v2096
        %2238 = vst [vmem:[#allocation3 + $0x1c0] sm:$0xff] %v2099
        %2239 = vst [vmem:[#allocation3 + $0x1c8] sm:$0xff] %v2101
        %2240 = vst [vmem:[#allocation3 + $0x1d0] sm:$0xff] %v2104
        %2241 = vst [vmem:[#allocation3 + $0x1d8] sm:$0xff] %v2106
        %2242 = vst [vmem:[#allocation3 + $0x1e0] sm:$0xff] %v2109
        %2243 = vst [vmem:[#allocation3 + $0x1e8] sm:$0xff] %v2111
        %2244 = vst [vmem:[#allocation3 + $0x1f0] sm:$0xff] %v2114
        %2245 = vst [vmem:[#allocation3 + $0x1f8] sm:$0xff] %v2116
        loop: start=0, step=1, limit=4
        $region85: #{tpu_custom_call.1} parent=51 // loop_pre_header
          _
        $region86: #{tpu_custom_call.1} parent=51 // loop_header
          %s2247 = sphi 0, %s2251
          %p2248 = scmp.ge.s32.totalorder %s2247, 4
        $region87: #{tpu_custom_call.1} parent=51 // loop_header_branch
          %2250 = sbr.rel (%p2248) target = $region91
        $region88: #{tpu_custom_call.1} parent=51 // loop_body
          %s2252 = smul.u32 %s2247, 128
          %s2253 = scalar_lea.vmem [#allocation2], %s2252
          %v2254 = vld [vmem:[%s2253] sm:$0xff]
          %v2255 = vld [vmem:[%s2253 + $0x8] sm:$0xff]
          %v2256 = vld [vmem:[%s2253 + $0x10] sm:$0xff]
          %v2257 = vld [vmem:[%s2253 + $0x18] sm:$0xff]
          %v2258 = vld [vmem:[%s2253 + $0x20] sm:$0xff]
          %v2259 = vld [vmem:[%s2253 + $0x28] sm:$0xff]
          %v2260 = vld [vmem:[%s2253 + $0x30] sm:$0xff]
          %v2261 = vld [vmem:[%s2253 + $0x38] sm:$0xff]
          %v2262 = vld [vmem:[%s2253 + $0x40] sm:$0xff]
          %v2263 = vld [vmem:[%s2253 + $0x48] sm:$0xff]
          %v2264 = vld [vmem:[%s2253 + $0x50] sm:$0xff]
          %v2265 = vld [vmem:[%s2253 + $0x58] sm:$0xff]
          %v2266 = vld [vmem:[%s2253 + $0x60] sm:$0xff]
          %v2267 = vld [vmem:[%s2253 + $0x68] sm:$0xff]
          %v2268 = vld [vmem:[%s2253 + $0x70] sm:$0xff]
          %v2269 = vld [vmem:[%s2253 + $0x78] sm:$0xff]
          %v2270 = vpack.c.bf16 %v2255, %v2254
          %v2271 = vpack.c.bf16 %v2257, %v2256
          %v2272 = vpack.c.bf16 %v2259, %v2258
          %v2273 = vpack.c.bf16 %v2261, %v2260
          %v2274 = vpack.c.bf16 %v2263, %v2262
          %v2275 = vpack.c.bf16 %v2265, %v2264
          %v2276 = vpack.c.bf16 %v2267, %v2266
          %v2277 = vpack.c.bf16 %v2269, %v2268
          %s2278 = scalar_lea.vmem [#allocation3], %s2252
          %v2279 = vld [vmem:[%s2278] sm:$0xff]
          %v2280 = vld [vmem:[%s2278 + $0x8] sm:$0xff]
          %v2281 = vld [vmem:[%s2278 + $0x10] sm:$0xff]
          %v2282 = vld [vmem:[%s2278 + $0x18] sm:$0xff]
          %v2283 = vld [vmem:[%s2278 + $0x20] sm:$0xff]
          %v2284 = vld [vmem:[%s2278 + $0x28] sm:$0xff]
          %v2285 = vld [vmem:[%s2278 + $0x30] sm:$0xff]
          %v2286 = vld [vmem:[%s2278 + $0x38] sm:$0xff]
          %v2287 = vld [vmem:[%s2278 + $0x40] sm:$0xff]
          %v2288 = vld [vmem:[%s2278 + $0x48] sm:$0xff]
          %v2289 = vld [vmem:[%s2278 + $0x50] sm:$0xff]
          %v2290 = vld [vmem:[%s2278 + $0x58] sm:$0xff]
          %v2291 = vld [vmem:[%s2278 + $0x60] sm:$0xff]
          %v2292 = vld [vmem:[%s2278 + $0x68] sm:$0xff]
          %v2293 = vld [vmem:[%s2278 + $0x70] sm:$0xff]
          %v2294 = vld [vmem:[%s2278 + $0x78] sm:$0xff]
          %v2295 = vpack.c.bf16 %v2280, %v2279
          %v2296 = vpack.c.bf16 %v2282, %v2281
          %v2297 = vpack.c.bf16 %v2284, %v2283
          %v2298 = vpack.c.bf16 %v2286, %v2285
          %v2299 = vpack.c.bf16 %v2288, %v2287
          %v2300 = vpack.c.bf16 %v2290, %v2289
          %v2301 = vpack.c.bf16 %v2292, %v2291
          %v2302 = vpack.c.bf16 %v2294, %v2293
          %v2319 = vunpack.c.l.b16 %v570
          %v2320 = vunpack.c.l.b16 %v571
          %v2321 = vunpack.c.l.b16 %v572
          %v2322 = vunpack.c.l.b16 %v573
          %v2323 = vunpack.c.l.b16 %v574
          %v2324 = vunpack.c.l.b16 %v575
          %v2325 = vunpack.c.l.b16 %v576
          %v2326 = vunpack.c.l.b16 %v577
          %v2327 = vunpack.c.l.b16 %v578
          %v2328 = vunpack.c.l.b16 %v579
          %v2329 = vunpack.c.l.b16 %v580
          %v2330 = vunpack.c.l.b16 %v581
          %v2331 = vunpack.c.l.b16 %v582
          %v2332 = vunpack.c.l.b16 %v583
          %v2333 = vunpack.c.l.b16 %v584
          %v2334 = vunpack.c.l.b16 %v585
          %v2335 = vpack.c.b16 %v2320, %v2319
          %v2336 = vpack.c.b16 %v2322, %v2321
          %v2337 = vpack.c.b16 %v2324, %v2323
          %v2338 = vpack.c.b16 %v2326, %v2325
          %v2339 = vpack.c.b16 %v2328, %v2327
          %v2340 = vpack.c.b16 %v2330, %v2329
          %v2341 = vpack.c.b16 %v2332, %v2331
          %v2342 = vpack.c.b16 %v2334, %v2333
          %2351 = vmatpush.bf16.msra.mxu0 %v2277
          %2352 = vmatpush.bf16.msra.mxu0 %v2276
          %2353 = vmatpush.bf16.msra.mxu0 %v2275
          %2354 = vmatpush.bf16.msra.mxu0 %v2274
          %2355 = vmatpush.bf16.msra.mxu0 %v2273
          %2356 = vmatpush.bf16.msra.mxu0 %v2272
          %2357 = vmatpush.bf16.msra.mxu0 %v2271
          %2358 = vmatpush.bf16.msra.mxu0 %v2270
          %2359 = vmatmul.bf16.gmra.mxu0 %v2335
          %v2360 = vpop.f32.mrf.mxu0
          %v2361 = vadd.f32 0.0, %v2360
          %v2362 = vpop.f32.mrf.mxu0
          %v2363 = vadd.f32 0.0, %v2362
          %2364 = vmatmul.bf16.gmra.mxu0 %v2336
          %v2365 = vpop.f32.mrf.mxu0
          %v2366 = vadd.f32 0.0, %v2365
          %v2367 = vpop.f32.mrf.mxu0
          %v2368 = vadd.f32 0.0, %v2367
          %2369 = vmatmul.bf16.gmra.mxu0 %v2337
          %v2370 = vpop.f32.mrf.mxu0
          %v2371 = vadd.f32 0.0, %v2370
          %v2372 = vpop.f32.mrf.mxu0
          %v2373 = vadd.f32 0.0, %v2372
          %2374 = vmatmul.bf16.gmra.mxu0 %v2338
          %v2375 = vpop.f32.mrf.mxu0
          %v2376 = vadd.f32 0.0, %v2375
          %v2377 = vpop.f32.mrf.mxu0
          %v2378 = vadd.f32 0.0, %v2377
          %2379 = vmatmul.bf16.gmra.mxu0 %v2339
          %v2380 = vpop.f32.mrf.mxu0
          %v2381 = vadd.f32 0.0, %v2380
          %v2382 = vpop.f32.mrf.mxu0
          %v2383 = vadd.f32 0.0, %v2382
          %2384 = vmatmul.bf16.gmra.mxu0 %v2340
          %v2385 = vpop.f32.mrf.mxu0
          %v2386 = vadd.f32 0.0, %v2385
          %v2387 = vpop.f32.mrf.mxu0
          %v2388 = vadd.f32 0.0, %v2387
          %2389 = vmatmul.bf16.gmra.mxu0 %v2341
          %v2390 = vpop.f32.mrf.mxu0
          %v2391 = vadd.f32 0.0, %v2390
          %v2392 = vpop.f32.mrf.mxu0
          %v2393 = vadd.f32 0.0, %v2392
          %2394 = vmatmul.bf16.gmra.mxu0 %v2342
          %v2395 = vpop.f32.mrf.mxu0
          %v2396 = vadd.f32 0.0, %v2395
          %v2397 = vpop.f32.mrf.mxu0
          %v2398 = vadd.f32 0.0, %v2397
          %2399 = vdwg.mxu0
          %v2416 = vunpack.c.l.b16 %v586
          %v2417 = vunpack.c.l.b16 %v587
          %v2418 = vunpack.c.l.b16 %v588
          %v2419 = vunpack.c.l.b16 %v589
          %v2420 = vunpack.c.l.b16 %v590
          %v2421 = vunpack.c.l.b16 %v591
          %v2422 = vunpack.c.l.b16 %v592
          %v2423 = vunpack.c.l.b16 %v593
          %v2424 = vunpack.c.l.b16 %v594
          %v2425 = vunpack.c.l.b16 %v595
          %v2426 = vunpack.c.l.b16 %v596
          %v2427 = vunpack.c.l.b16 %v597
          %v2428 = vunpack.c.l.b16 %v598
          %v2429 = vunpack.c.l.b16 %v599
          %v2430 = vunpack.c.l.b16 %v600
          %v2431 = vunpack.c.l.b16 %v601
          %v2432 = vpack.c.b16 %v2417, %v2416
          %v2433 = vpack.c.b16 %v2419, %v2418
          %v2434 = vpack.c.b16 %v2421, %v2420
          %v2435 = vpack.c.b16 %v2423, %v2422
          %v2436 = vpack.c.b16 %v2425, %v2424
          %v2437 = vpack.c.b16 %v2427, %v2426
          %v2438 = vpack.c.b16 %v2429, %v2428
          %v2439 = vpack.c.b16 %v2431, %v2430
          %2448 = vmatpush.bf16.msra.mxu0 %v2302
          %2449 = vmatpush.bf16.msra.mxu0 %v2301
          %2450 = vmatpush.bf16.msra.mxu0 %v2300
          %2451 = vmatpush.bf16.msra.mxu0 %v2299
          %2452 = vmatpush.bf16.msra.mxu0 %v2298
          %2453 = vmatpush.bf16.msra.mxu0 %v2297
          %2454 = vmatpush.bf16.msra.mxu0 %v2296
          %2455 = vmatpush.bf16.msra.mxu0 %v2295
          %2456 = vmatmul.bf16.gmra.mxu0 %v2432
          %v2457 = vpop.f32.mrf.mxu0
          %v2458 = vadd.f32 0.0, %v2457
          %v2459 = vpop.f32.mrf.mxu0
          %v2460 = vadd.f32 0.0, %v2459
          %2461 = vmatmul.bf16.gmra.mxu0 %v2433
          %v2462 = vpop.f32.mrf.mxu0
          %v2463 = vadd.f32 0.0, %v2462
          %v2464 = vpop.f32.mrf.mxu0
          %v2465 = vadd.f32 0.0, %v2464
          %2466 = vmatmul.bf16.gmra.mxu0 %v2434
          %v2467 = vpop.f32.mrf.mxu0
          %v2468 = vadd.f32 0.0, %v2467
          %v2469 = vpop.f32.mrf.mxu0
          %v2470 = vadd.f32 0.0, %v2469
          %2471 = vmatmul.bf16.gmra.mxu0 %v2435
          %v2472 = vpop.f32.mrf.mxu0
          %v2473 = vadd.f32 0.0, %v2472
          %v2474 = vpop.f32.mrf.mxu0
          %v2475 = vadd.f32 0.0, %v2474
          %2476 = vmatmul.bf16.gmra.mxu0 %v2436
          %v2477 = vpop.f32.mrf.mxu0
          %v2478 = vadd.f32 0.0, %v2477
          %v2479 = vpop.f32.mrf.mxu0
          %v2480 = vadd.f32 0.0, %v2479
          %2481 = vmatmul.bf16.gmra.mxu0 %v2437
          %v2482 = vpop.f32.mrf.mxu0
          %v2483 = vadd.f32 0.0, %v2482
          %v2484 = vpop.f32.mrf.mxu0
          %v2485 = vadd.f32 0.0, %v2484
          %2486 = vmatmul.bf16.gmra.mxu0 %v2438
          %v2487 = vpop.f32.mrf.mxu0
          %v2488 = vadd.f32 0.0, %v2487
          %v2489 = vpop.f32.mrf.mxu0
          %v2490 = vadd.f32 0.0, %v2489
          %2491 = vmatmul.bf16.gmra.mxu0 %v2439
          %v2492 = vpop.f32.mrf.mxu0
          %v2493 = vadd.f32 0.0, %v2492
          %v2494 = vpop.f32.mrf.mxu0
          %v2495 = vadd.f32 0.0, %v2494
          %2496 = vdwg.mxu0
          %v2497 = vsub.f32 %v2361, %v2458
          %v2498 = vsub.f32 %v2363, %v2460
          %v2499 = vsub.f32 %v2366, %v2463
          %v2500 = vsub.f32 %v2368, %v2465
          %v2501 = vsub.f32 %v2371, %v2468
          %v2502 = vsub.f32 %v2373, %v2470
          %v2503 = vsub.f32 %v2376, %v2473
          %v2504 = vsub.f32 %v2378, %v2475
          %v2505 = vsub.f32 %v2381, %v2478
          %v2506 = vsub.f32 %v2383, %v2480
          %v2507 = vsub.f32 %v2386, %v2483
          %v2508 = vsub.f32 %v2388, %v2485
          %v2509 = vsub.f32 %v2391, %v2488
          %v2510 = vsub.f32 %v2393, %v2490
          %v2511 = vsub.f32 %v2396, %v2493
          %v2512 = vsub.f32 %v2398, %v2495
          %2513 = vmatpush.bf16.msra.mxu0 %v2277
          %2514 = vmatpush.bf16.msra.mxu0 %v2276
          %2515 = vmatpush.bf16.msra.mxu0 %v2275
          %2516 = vmatpush.bf16.msra.mxu0 %v2274
          %2517 = vmatpush.bf16.msra.mxu0 %v2273
          %2518 = vmatpush.bf16.msra.mxu0 %v2272
          %2519 = vmatpush.bf16.msra.mxu0 %v2271
          %2520 = vmatpush.bf16.msra.mxu0 %v2270
          %2521 = vmatmul.bf16.gmra.mxu0 %v2432
          %v2522 = vpop.f32.mrf.mxu0
          %v2523 = vadd.f32 0.0, %v2522
          %v2524 = vpop.f32.mrf.mxu0
          %v2525 = vadd.f32 0.0, %v2524
          %2526 = vmatmul.bf16.gmra.mxu0 %v2433
          %v2527 = vpop.f32.mrf.mxu0
          %v2528 = vadd.f32 0.0, %v2527
          %v2529 = vpop.f32.mrf.mxu0
          %v2530 = vadd.f32 0.0, %v2529
          %2531 = vmatmul.bf16.gmra.mxu0 %v2434
          %v2532 = vpop.f32.mrf.mxu0
          %v2533 = vadd.f32 0.0, %v2532
          %v2534 = vpop.f32.mrf.mxu0
          %v2535 = vadd.f32 0.0, %v2534
          %2536 = vmatmul.bf16.gmra.mxu0 %v2435
          %v2537 = vpop.f32.mrf.mxu0
          %v2538 = vadd.f32 0.0, %v2537
          %v2539 = vpop.f32.mrf.mxu0
          %v2540 = vadd.f32 0.0, %v2539
          %2541 = vmatmul.bf16.gmra.mxu0 %v2436
          %v2542 = vpop.f32.mrf.mxu0
          %v2543 = vadd.f32 0.0, %v2542
          %v2544 = vpop.f32.mrf.mxu0
          %v2545 = vadd.f32 0.0, %v2544
          %2546 = vmatmul.bf16.gmra.mxu0 %v2437
          %v2547 = vpop.f32.mrf.mxu0
          %v2548 = vadd.f32 0.0, %v2547
          %v2549 = vpop.f32.mrf.mxu0
          %v2550 = vadd.f32 0.0, %v2549
          %2551 = vmatmul.bf16.gmra.mxu0 %v2438
          %v2552 = vpop.f32.mrf.mxu0
          %v2553 = vadd.f32 0.0, %v2552
          %v2554 = vpop.f32.mrf.mxu0
          %v2555 = vadd.f32 0.0, %v2554
          %2556 = vmatmul.bf16.gmra.mxu0 %v2439
          %v2557 = vpop.f32.mrf.mxu0
          %v2558 = vadd.f32 0.0, %v2557
          %v2559 = vpop.f32.mrf.mxu0
          %v2560 = vadd.f32 0.0, %v2559
          %2561 = vdwg.mxu0
          %2562 = vmatpush.bf16.msra.mxu0 %v2302
          %2563 = vmatpush.bf16.msra.mxu0 %v2301
          %2564 = vmatpush.bf16.msra.mxu0 %v2300
          %2565 = vmatpush.bf16.msra.mxu0 %v2299
          %2566 = vmatpush.bf16.msra.mxu0 %v2298
          %2567 = vmatpush.bf16.msra.mxu0 %v2297
          %2568 = vmatpush.bf16.msra.mxu0 %v2296
          %2569 = vmatpush.bf16.msra.mxu0 %v2295
          %2570 = vmatmul.bf16.gmra.mxu0 %v2335
          %v2571 = vpop.f32.mrf.mxu0
          %v2572 = vadd.f32 %v2523, %v2571
          %v2573 = vpop.f32.mrf.mxu0
          %v2574 = vadd.f32 %v2525, %v2573
          %2575 = vmatmul.bf16.gmra.mxu0 %v2336
          %v2576 = vpop.f32.mrf.mxu0
          %v2577 = vadd.f32 %v2528, %v2576
          %v2578 = vpop.f32.mrf.mxu0
          %v2579 = vadd.f32 %v2530, %v2578
          %2580 = vmatmul.bf16.gmra.mxu0 %v2337
          %v2581 = vpop.f32.mrf.mxu0
          %v2582 = vadd.f32 %v2533, %v2581
          %v2583 = vpop.f32.mrf.mxu0
          %v2584 = vadd.f32 %v2535, %v2583
          %2585 = vmatmul.bf16.gmra.mxu0 %v2338
          %v2586 = vpop.f32.mrf.mxu0
          %v2587 = vadd.f32 %v2538, %v2586
          %v2588 = vpop.f32.mrf.mxu0
          %v2589 = vadd.f32 %v2540, %v2588
          %2590 = vmatmul.bf16.gmra.mxu0 %v2339
          %v2591 = vpop.f32.mrf.mxu0
          %v2592 = vadd.f32 %v2543, %v2591
          %v2593 = vpop.f32.mrf.mxu0
          %v2594 = vadd.f32 %v2545, %v2593
          %2595 = vmatmul.bf16.gmra.mxu0 %v2340
          %v2596 = vpop.f32.mrf.mxu0
          %v2597 = vadd.f32 %v2548, %v2596
          %v2598 = vpop.f32.mrf.mxu0
          %v2599 = vadd.f32 %v2550, %v2598
          %2600 = vmatmul.bf16.gmra.mxu0 %v2341
          %v2601 = vpop.f32.mrf.mxu0
          %v2602 = vadd.f32 %v2553, %v2601
          %v2603 = vpop.f32.mrf.mxu0
          %v2604 = vadd.f32 %v2555, %v2603
          %2605 = vmatmul.bf16.gmra.mxu0 %v2342
          %v2606 = vpop.f32.mrf.mxu0
          %v2607 = vadd.f32 %v2558, %v2606
          %v2608 = vpop.f32.mrf.mxu0
          %v2609 = vadd.f32 %v2560, %v2608
          %2610 = vdwg.mxu0
          %v2611 = vmul.f32 %v2497, %v538
          %v2612 = vmul.f32 %v2498, %v539
          %v2613 = vmul.f32 %v2499, %v540
          %v2614 = vmul.f32 %v2500, %v541
          %v2615 = vmul.f32 %v2501, %v542
          %v2616 = vmul.f32 %v2502, %v543
          %v2617 = vmul.f32 %v2503, %v544
          %v2618 = vmul.f32 %v2504, %v545
          %v2619 = vmul.f32 %v2505, %v546
          %v2620 = vmul.f32 %v2506, %v547
          %v2621 = vmul.f32 %v2507, %v548
          %v2622 = vmul.f32 %v2508, %v549
          %v2623 = vmul.f32 %v2509, %v550
          %v2624 = vmul.f32 %v2510, %v551
          %v2625 = vmul.f32 %v2511, %v552
          %v2626 = vmul.f32 %v2512, %v553
          %v2627 = vpack.c.bf16 %v2612, %v2611
          %v2628 = vpack.c.bf16 %v2614, %v2613
          %v2629 = vpack.c.bf16 %v2616, %v2615
          %v2630 = vpack.c.bf16 %v2618, %v2617
          %v2631 = vpack.c.bf16 %v2620, %v2619
          %v2632 = vpack.c.bf16 %v2622, %v2621
          %v2633 = vpack.c.bf16 %v2624, %v2623
          %v2634 = vpack.c.bf16 %v2626, %v2625
          %v2635 = vmul.f32 %v2572, %v554
          %v2636 = vmul.f32 %v2574, %v555
          %v2637 = vmul.f32 %v2577, %v556
          %v2638 = vmul.f32 %v2579, %v557
          %v2639 = vmul.f32 %v2582, %v558
          %v2640 = vmul.f32 %v2584, %v559
          %v2641 = vmul.f32 %v2587, %v560
          %v2642 = vmul.f32 %v2589, %v561
          %v2643 = vmul.f32 %v2592, %v562
          %v2644 = vmul.f32 %v2594, %v563
          %v2645 = vmul.f32 %v2597, %v564
          %v2646 = vmul.f32 %v2599, %v565
          %v2647 = vmul.f32 %v2602, %v566
          %v2648 = vmul.f32 %v2604, %v567
          %v2649 = vmul.f32 %v2607, %v568
          %v2650 = vmul.f32 %v2609, %v569
          %v2651 = vpack.c.bf16 %v2636, %v2635
          %v2652 = vpack.c.bf16 %v2638, %v2637
          %v2653 = vpack.c.bf16 %v2640, %v2639
          %v2654 = vpack.c.bf16 %v2642, %v2641
          %v2655 = vpack.c.bf16 %v2644, %v2643
          %v2656 = vpack.c.bf16 %v2646, %v2645
          %v2657 = vpack.c.bf16 %v2648, %v2647
          %v2658 = vpack.c.bf16 %v2650, %v2649
          %2659 = vmatpush.bf16.msra.mxu0 %v2658
          %2660 = vmatpush.bf16.msra.mxu0 %v2657
          %2661 = vmatpush.bf16.msra.mxu0 %v2656
          %2662 = vmatpush.bf16.msra.mxu0 %v2655
          %2663 = vmatpush.bf16.msra.mxu0 %v2654
          %2664 = vmatpush.bf16.msra.mxu0 %v2653
          %2665 = vmatpush.bf16.msra.mxu0 %v2652
          %2666 = vmatpush.bf16.msra.mxu0 %v2651
          %2667 = vmatmul.bf16.gmra.mxu0 %v2432
          %v2668 = vpop.f32.mrf.mxu0
          %v2669 = vadd.f32 0.0, %v2668
          %v2670 = vpop.f32.mrf.mxu0
          %v2671 = vadd.f32 0.0, %v2670
          %2672 = vmatmul.bf16.gmra.mxu0 %v2433
          %v2673 = vpop.f32.mrf.mxu0
          %v2674 = vadd.f32 0.0, %v2673
          %v2675 = vpop.f32.mrf.mxu0
          %v2676 = vadd.f32 0.0, %v2675
          %2677 = vmatmul.bf16.gmra.mxu0 %v2434
          %v2678 = vpop.f32.mrf.mxu0
          %v2679 = vadd.f32 0.0, %v2678
          %v2680 = vpop.f32.mrf.mxu0
          %v2681 = vadd.f32 0.0, %v2680
          %2682 = vmatmul.bf16.gmra.mxu0 %v2435
          %v2683 = vpop.f32.mrf.mxu0
          %v2684 = vadd.f32 0.0, %v2683
          %v2685 = vpop.f32.mrf.mxu0
          %v2686 = vadd.f32 0.0, %v2685
          %2687 = vmatmul.bf16.gmra.mxu0 %v2436
          %v2688 = vpop.f32.mrf.mxu0
          %v2689 = vadd.f32 0.0, %v2688
          %v2690 = vpop.f32.mrf.mxu0
          %v2691 = vadd.f32 0.0, %v2690
          %2692 = vmatmul.bf16.gmra.mxu0 %v2437
          %v2693 = vpop.f32.mrf.mxu0
          %v2694 = vadd.f32 0.0, %v2693
          %v2695 = vpop.f32.mrf.mxu0
          %v2696 = vadd.f32 0.0, %v2695
          %2697 = vmatmul.bf16.gmra.mxu0 %v2438
          %v2698 = vpop.f32.mrf.mxu0
          %v2699 = vadd.f32 0.0, %v2698
          %v2700 = vpop.f32.mrf.mxu0
          %v2701 = vadd.f32 0.0, %v2700
          %2702 = vmatmul.bf16.gmra.mxu0 %v2439
          %v2703 = vpop.f32.mrf.mxu0
          %v2704 = vadd.f32 0.0, %v2703
          %v2705 = vpop.f32.mrf.mxu0
          %v2706 = vadd.f32 0.0, %v2705
          %2707 = vdwg.mxu0
          %2708 = vmatpush.bf16.msra.mxu0 %v2634
          %2709 = vmatpush.bf16.msra.mxu0 %v2633
          %2710 = vmatpush.bf16.msra.mxu0 %v2632
          %2711 = vmatpush.bf16.msra.mxu0 %v2631
          %2712 = vmatpush.bf16.msra.mxu0 %v2630
          %2713 = vmatpush.bf16.msra.mxu0 %v2629
          %2714 = vmatpush.bf16.msra.mxu0 %v2628
          %2715 = vmatpush.bf16.msra.mxu0 %v2627
          %2716 = vmatmul.bf16.gmra.mxu0 %v2335
          %v2717 = vpop.f32.mrf.mxu0
          %v2718 = vadd.f32 %v2669, %v2717
          %v2719 = vpop.f32.mrf.mxu0
          %v2720 = vadd.f32 %v2671, %v2719
          %2721 = vmatmul.bf16.gmra.mxu0 %v2336
          %v2722 = vpop.f32.mrf.mxu0
          %v2723 = vadd.f32 %v2674, %v2722
          %v2724 = vpop.f32.mrf.mxu0
          %v2725 = vadd.f32 %v2676, %v2724
          %2726 = vmatmul.bf16.gmra.mxu0 %v2337
          %v2727 = vpop.f32.mrf.mxu0
          %v2728 = vadd.f32 %v2679, %v2727
          %v2729 = vpop.f32.mrf.mxu0
          %v2730 = vadd.f32 %v2681, %v2729
          %2731 = vmatmul.bf16.gmra.mxu0 %v2338
          %v2732 = vpop.f32.mrf.mxu0
          %v2733 = vadd.f32 %v2684, %v2732
          %v2734 = vpop.f32.mrf.mxu0
          %v2735 = vadd.f32 %v2686, %v2734
          %2736 = vmatmul.bf16.gmra.mxu0 %v2339
          %v2737 = vpop.f32.mrf.mxu0
          %v2738 = vadd.f32 %v2689, %v2737
          %v2739 = vpop.f32.mrf.mxu0
          %v2740 = vadd.f32 %v2691, %v2739
          %2741 = vmatmul.bf16.gmra.mxu0 %v2340
          %v2742 = vpop.f32.mrf.mxu0
          %v2743 = vadd.f32 %v2694, %v2742
          %v2744 = vpop.f32.mrf.mxu0
          %v2745 = vadd.f32 %v2696, %v2744
          %2746 = vmatmul.bf16.gmra.mxu0 %v2341
          %v2747 = vpop.f32.mrf.mxu0
          %v2748 = vadd.f32 %v2699, %v2747
          %v2749 = vpop.f32.mrf.mxu0
          %v2750 = vadd.f32 %v2701, %v2749
          %2751 = vmatmul.bf16.gmra.mxu0 %v2342
          %v2752 = vpop.f32.mrf.mxu0
          %v2753 = vadd.f32 %v2704, %v2752
          %v2754 = vpop.f32.mrf.mxu0
          %v2755 = vadd.f32 %v2706, %v2754
          %2756 = vdwg.mxu0
          %2757 = vmatpush.bf16.msra.mxu0 %v2634
          %2758 = vmatpush.bf16.msra.mxu0 %v2633
          %2759 = vmatpush.bf16.msra.mxu0 %v2632
          %2760 = vmatpush.bf16.msra.mxu0 %v2631
          %2761 = vmatpush.bf16.msra.mxu0 %v2630
          %2762 = vmatpush.bf16.msra.mxu0 %v2629
          %2763 = vmatpush.bf16.msra.mxu0 %v2628
          %2764 = vmatpush.bf16.msra.mxu0 %v2627
          %2765 = vmatmul.bf16.gmra.mxu0 %v2432
          %v2766 = vpop.f32.mrf.mxu0
          %v2767 = vadd.f32 0.0, %v2766
          %v2768 = vpop.f32.mrf.mxu0
          %v2769 = vadd.f32 0.0, %v2768
          %2770 = vmatmul.bf16.gmra.mxu0 %v2433
          %v2771 = vpop.f32.mrf.mxu0
          %v2772 = vadd.f32 0.0, %v2771
          %v2773 = vpop.f32.mrf.mxu0
          %v2774 = vadd.f32 0.0, %v2773
          %2775 = vmatmul.bf16.gmra.mxu0 %v2434
          %v2776 = vpop.f32.mrf.mxu0
          %v2777 = vadd.f32 0.0, %v2776
          %v2778 = vpop.f32.mrf.mxu0
          %v2779 = vadd.f32 0.0, %v2778
          %2780 = vmatmul.bf16.gmra.mxu0 %v2435
          %v2781 = vpop.f32.mrf.mxu0
          %v2782 = vadd.f32 0.0, %v2781
          %v2783 = vpop.f32.mrf.mxu0
          %v2784 = vadd.f32 0.0, %v2783
          %2785 = vmatmul.bf16.gmra.mxu0 %v2436
          %v2786 = vpop.f32.mrf.mxu0
          %v2787 = vadd.f32 0.0, %v2786
          %v2788 = vpop.f32.mrf.mxu0
          %v2789 = vadd.f32 0.0, %v2788
          %2790 = vmatmul.bf16.gmra.mxu0 %v2437
          %v2791 = vpop.f32.mrf.mxu0
          %v2792 = vadd.f32 0.0, %v2791
          %v2793 = vpop.f32.mrf.mxu0
          %v2794 = vadd.f32 0.0, %v2793
          %2795 = vmatmul.bf16.gmra.mxu0 %v2438
          %v2796 = vpop.f32.mrf.mxu0
          %v2797 = vadd.f32 0.0, %v2796
          %v2798 = vpop.f32.mrf.mxu0
          %v2799 = vadd.f32 0.0, %v2798
          %2800 = vmatmul.bf16.gmra.mxu0 %v2439
          %v2801 = vpop.f32.mrf.mxu0
          %v2802 = vadd.f32 0.0, %v2801
          %v2803 = vpop.f32.mrf.mxu0
          %v2804 = vadd.f32 0.0, %v2803
          %2805 = vdwg.mxu0
          %2806 = vmatpush.bf16.msra.mxu0 %v2658
          %2807 = vmatpush.bf16.msra.mxu0 %v2657
          %2808 = vmatpush.bf16.msra.mxu0 %v2656
          %2809 = vmatpush.bf16.msra.mxu0 %v2655
          %2810 = vmatpush.bf16.msra.mxu0 %v2654
          %2811 = vmatpush.bf16.msra.mxu0 %v2653
          %2812 = vmatpush.bf16.msra.mxu0 %v2652
          %2813 = vmatpush.bf16.msra.mxu0 %v2651
          %2814 = vmatmul.bf16.gmra.mxu0 %v2335
          %v2815 = vpop.f32.mrf.mxu0
          %v2816 = vadd.f32 0.0, %v2815
          %v2817 = vpop.f32.mrf.mxu0
          %v2818 = vadd.f32 0.0, %v2817
          %2819 = vmatmul.bf16.gmra.mxu0 %v2336
          %v2820 = vpop.f32.mrf.mxu0
          %v2821 = vadd.f32 0.0, %v2820
          %v2822 = vpop.f32.mrf.mxu0
          %v2823 = vadd.f32 0.0, %v2822
          %2824 = vmatmul.bf16.gmra.mxu0 %v2337
          %v2825 = vpop.f32.mrf.mxu0
          %v2826 = vadd.f32 0.0, %v2825
          %v2827 = vpop.f32.mrf.mxu0
          %v2828 = vadd.f32 0.0, %v2827
          %2829 = vmatmul.bf16.gmra.mxu0 %v2338
          %v2830 = vpop.f32.mrf.mxu0
          %v2831 = vadd.f32 0.0, %v2830
          %v2832 = vpop.f32.mrf.mxu0
          %v2833 = vadd.f32 0.0, %v2832
          %2834 = vmatmul.bf16.gmra.mxu0 %v2339
          %v2835 = vpop.f32.mrf.mxu0
          %v2836 = vadd.f32 0.0, %v2835
          %v2837 = vpop.f32.mrf.mxu0
          %v2838 = vadd.f32 0.0, %v2837
          %2839 = vmatmul.bf16.gmra.mxu0 %v2340
          %v2840 = vpop.f32.mrf.mxu0
          %v2841 = vadd.f32 0.0, %v2840
          %v2842 = vpop.f32.mrf.mxu0
          %v2843 = vadd.f32 0.0, %v2842
          %2844 = vmatmul.bf16.gmra.mxu0 %v2341
          %v2845 = vpop.f32.mrf.mxu0
          %v2846 = vadd.f32 0.0, %v2845
          %v2847 = vpop.f32.mrf.mxu0
          %v2848 = vadd.f32 0.0, %v2847
          %2849 = vmatmul.bf16.gmra.mxu0 %v2342
          %v2850 = vpop.f32.mrf.mxu0
          %v2851 = vadd.f32 0.0, %v2850
          %v2852 = vpop.f32.mrf.mxu0
          %v2853 = vadd.f32 0.0, %v2852
          %2854 = vdwg.mxu0
          %v2855 = vsub.f32 %v2767, %v2816
          %v2856 = vsub.f32 %v2769, %v2818
          %v2857 = vsub.f32 %v2772, %v2821
          %v2858 = vsub.f32 %v2774, %v2823
          %v2859 = vsub.f32 %v2777, %v2826
          %v2860 = vsub.f32 %v2779, %v2828
          %v2861 = vsub.f32 %v2782, %v2831
          %v2862 = vsub.f32 %v2784, %v2833
          %v2863 = vsub.f32 %v2787, %v2836
          %v2864 = vsub.f32 %v2789, %v2838
          %v2865 = vsub.f32 %v2792, %v2841
          %v2866 = vsub.f32 %v2794, %v2843
          %v2867 = vsub.f32 %v2797, %v2846
          %v2868 = vsub.f32 %v2799, %v2848
          %v2869 = vsub.f32 %v2802, %v2851
          %v2870 = vsub.f32 %v2804, %v2853
          %2871 = vst [vmem:[%s2253] sm:$0xff] %v2718
          %2872 = vst [vmem:[%s2253 + $0x8] sm:$0xff] %v2720
          %2873 = vst [vmem:[%s2253 + $0x10] sm:$0xff] %v2723
          %2874 = vst [vmem:[%s2253 + $0x18] sm:$0xff] %v2725
          %2875 = vst [vmem:[%s2253 + $0x20] sm:$0xff] %v2728
          %2876 = vst [vmem:[%s2253 + $0x28] sm:$0xff] %v2730
          %2877 = vst [vmem:[%s2253 + $0x30] sm:$0xff] %v2733
          %2878 = vst [vmem:[%s2253 + $0x38] sm:$0xff] %v2735
          %2879 = vst [vmem:[%s2253 + $0x40] sm:$0xff] %v2738
          %2880 = vst [vmem:[%s2253 + $0x48] sm:$0xff] %v2740
          %2881 = vst [vmem:[%s2253 + $0x50] sm:$0xff] %v2743
          %2882 = vst [vmem:[%s2253 + $0x58] sm:$0xff] %v2745
          %2883 = vst [vmem:[%s2253 + $0x60] sm:$0xff] %v2748
          %2884 = vst [vmem:[%s2253 + $0x68] sm:$0xff] %v2750
          %2885 = vst [vmem:[%s2253 + $0x70] sm:$0xff] %v2753
          %2886 = vst [vmem:[%s2253 + $0x78] sm:$0xff] %v2755
          %2887 = vst [vmem:[%s2278] sm:$0xff] %v2855
          %2888 = vst [vmem:[%s2278 + $0x8] sm:$0xff] %v2856
          %2889 = vst [vmem:[%s2278 + $0x10] sm:$0xff] %v2857
          %2890 = vst [vmem:[%s2278 + $0x18] sm:$0xff] %v2858
          %2891 = vst [vmem:[%s2278 + $0x20] sm:$0xff] %v2859
          %2892 = vst [vmem:[%s2278 + $0x28] sm:$0xff] %v2860
          %2893 = vst [vmem:[%s2278 + $0x30] sm:$0xff] %v2861
          %2894 = vst [vmem:[%s2278 + $0x38] sm:$0xff] %v2862
          %2895 = vst [vmem:[%s2278 + $0x40] sm:$0xff] %v2863
          %2896 = vst [vmem:[%s2278 + $0x48] sm:$0xff] %v2864
          %2897 = vst [vmem:[%s2278 + $0x50] sm:$0xff] %v2865
          %2898 = vst [vmem:[%s2278 + $0x58] sm:$0xff] %v2866
          %2899 = vst [vmem:[%s2278 + $0x60] sm:$0xff] %v2867
          %2900 = vst [vmem:[%s2278 + $0x68] sm:$0xff] %v2868
          %2901 = vst [vmem:[%s2278 + $0x70] sm:$0xff] %v2869
          %2902 = vst [vmem:[%s2278 + $0x78] sm:$0xff] %v2870
        $region89: #{tpu_custom_call.1} parent=51 // loop_footer
          %s2251 = sadd.s32 1, %s2247
        $region90: #{tpu_custom_call.1} parent=51 // loop_footer_branch
          %2246 = sbr.rel target = $region86
        $region91: #{tpu_custom_call.1} parent=51 // loop_exit
          _
        %v2903 = vld [vmem:[#allocation2] sm:$0xff]
        %v2904 = vld [vmem:[#allocation2 + $0x8] sm:$0xff]
        %v2905 = vld [vmem:[#allocation2 + $0x10] sm:$0xff]
        %v2906 = vld [vmem:[#allocation2 + $0x18] sm:$0xff]
        %v2907 = vld [vmem:[#allocation2 + $0x20] sm:$0xff]
        %v2908 = vld [vmem:[#allocation2 + $0x28] sm:$0xff]
        %v2909 = vld [vmem:[#allocation2 + $0x30] sm:$0xff]
        %v2910 = vld [vmem:[#allocation2 + $0x38] sm:$0xff]
        %v2911 = vld [vmem:[#allocation2 + $0x40] sm:$0xff]
        %v2912 = vld [vmem:[#allocation2 + $0x48] sm:$0xff]
        %v2913 = vld [vmem:[#allocation2 + $0x50] sm:$0xff]
        %v2914 = vld [vmem:[#allocation2 + $0x58] sm:$0xff]
        %v2915 = vld [vmem:[#allocation2 + $0x60] sm:$0xff]
        %v2916 = vld [vmem:[#allocation2 + $0x68] sm:$0xff]
        %v2917 = vld [vmem:[#allocation2 + $0x70] sm:$0xff]
        %v2918 = vld [vmem:[#allocation2 + $0x78] sm:$0xff]
        %v2919 = vld [vmem:[#allocation2 + $0x80] sm:$0xff]
        %v2920 = vld [vmem:[#allocation2 + $0x88] sm:$0xff]
        %v2921 = vld [vmem:[#allocation2 + $0x90] sm:$0xff]
        %v2922 = vld [vmem:[#allocation2 + $0x98] sm:$0xff]
        %v2923 = vld [vmem:[#allocation2 + $0xa0] sm:$0xff]
        %v2924 = vld [vmem:[#allocation2 + $0xa8] sm:$0xff]
        %v2925 = vld [vmem:[#allocation2 + $0xb0] sm:$0xff]
        %v2926 = vld [vmem:[#allocation2 + $0xb8] sm:$0xff]
        %v2927 = vld [vmem:[#allocation2 + $0xc0] sm:$0xff]
        %v2928 = vld [vmem:[#allocation2 + $0xc8] sm:$0xff]
        %v2929 = vld [vmem:[#allocation2 + $0xd0] sm:$0xff]
        %v2930 = vld [vmem:[#allocation2 + $0xd8] sm:$0xff]
        %v2931 = vld [vmem:[#allocation2 + $0xe0] sm:$0xff]
        %v2932 = vld [vmem:[#allocation2 + $0xe8] sm:$0xff]
        %v2933 = vld [vmem:[#allocation2 + $0xf0] sm:$0xff]
        %v2934 = vld [vmem:[#allocation2 + $0xf8] sm:$0xff]
        %v2935 = vld [vmem:[#allocation2 + $0x100] sm:$0xff]
        %v2936 = vld [vmem:[#allocation2 + $0x108] sm:$0xff]
        %v2937 = vld [vmem:[#allocation2 + $0x110] sm:$0xff]
        %v2938 = vld [vmem:[#allocation2 + $0x118] sm:$0xff]
        %v2939 = vld [vmem:[#allocation2 + $0x120] sm:$0xff]
        %v2940 = vld [vmem:[#allocation2 + $0x128] sm:$0xff]
        %v2941 = vld [vmem:[#allocation2 + $0x130] sm:$0xff]
        %v2942 = vld [vmem:[#allocation2 + $0x138] sm:$0xff]
        %v2943 = vld [vmem:[#allocation2 + $0x140] sm:$0xff]
        %v2944 = vld [vmem:[#allocation2 + $0x148] sm:$0xff]
        %v2945 = vld [vmem:[#allocation2 + $0x150] sm:$0xff]
        %v2946 = vld [vmem:[#allocation2 + $0x158] sm:$0xff]
        %v2947 = vld [vmem:[#allocation2 + $0x160] sm:$0xff]
        %v2948 = vld [vmem:[#allocation2 + $0x168] sm:$0xff]
        %v2949 = vld [vmem:[#allocation2 + $0x170] sm:$0xff]
        %v2950 = vld [vmem:[#allocation2 + $0x178] sm:$0xff]
        %v2951 = vld [vmem:[#allocation2 + $0x180] sm:$0xff]
        %v2952 = vld [vmem:[#allocation2 + $0x188] sm:$0xff]
        %v2953 = vld [vmem:[#allocation2 + $0x190] sm:$0xff]
        %v2954 = vld [vmem:[#allocation2 + $0x198] sm:$0xff]
        %v2955 = vld [vmem:[#allocation2 + $0x1a0] sm:$0xff]
        %v2956 = vld [vmem:[#allocation2 + $0x1a8] sm:$0xff]
        %v2957 = vld [vmem:[#allocation2 + $0x1b0] sm:$0xff]
        %v2958 = vld [vmem:[#allocation2 + $0x1b8] sm:$0xff]
        %v2959 = vld [vmem:[#allocation2 + $0x1c0] sm:$0xff]
        %v2960 = vld [vmem:[#allocation2 + $0x1c8] sm:$0xff]
        %v2961 = vld [vmem:[#allocation2 + $0x1d0] sm:$0xff]
        %v2962 = vld [vmem:[#allocation2 + $0x1d8] sm:$0xff]
        %v2963 = vld [vmem:[#allocation2 + $0x1e0] sm:$0xff]
        %v2964 = vld [vmem:[#allocation2 + $0x1e8] sm:$0xff]
        %v2965 = vld [vmem:[#allocation2 + $0x1f0] sm:$0xff]
        %v2966 = vld [vmem:[#allocation2 + $0x1f8] sm:$0xff]
        %v2967 = vld [vmem:[#allocation3] sm:$0xff]
        %v2968 = vld [vmem:[#allocation3 + $0x8] sm:$0xff]
        %v2969 = vld [vmem:[#allocation3 + $0x10] sm:$0xff]
        %v2970 = vld [vmem:[#allocation3 + $0x18] sm:$0xff]
        %v2971 = vld [vmem:[#allocation3 + $0x20] sm:$0xff]
        %v2972 = vld [vmem:[#allocation3 + $0x28] sm:$0xff]
        %v2973 = vld [vmem:[#allocation3 + $0x30] sm:$0xff]
        %v2974 = vld [vmem:[#allocation3 + $0x38] sm:$0xff]
        %v2975 = vld [vmem:[#allocation3 + $0x40] sm:$0xff]
        %v2976 = vld [vmem:[#allocation3 + $0x48] sm:$0xff]
        %v2977 = vld [vmem:[#allocation3 + $0x50] sm:$0xff]
        %v2978 = vld [vmem:[#allocation3 + $0x58] sm:$0xff]
        %v2979 = vld [vmem:[#allocation3 + $0x60] sm:$0xff]
        %v2980 = vld [vmem:[#allocation3 + $0x68] sm:$0xff]
        %v2981 = vld [vmem:[#allocation3 + $0x70] sm:$0xff]
        %v2982 = vld [vmem:[#allocation3 + $0x78] sm:$0xff]
        %v2983 = vld [vmem:[#allocation3 + $0x80] sm:$0xff]
        %v2984 = vld [vmem:[#allocation3 + $0x88] sm:$0xff]
        %v2985 = vld [vmem:[#allocation3 + $0x90] sm:$0xff]
        %v2986 = vld [vmem:[#allocation3 + $0x98] sm:$0xff]
        %v2987 = vld [vmem:[#allocation3 + $0xa0] sm:$0xff]
        %v2988 = vld [vmem:[#allocation3 + $0xa8] sm:$0xff]
        %v2989 = vld [vmem:[#allocation3 + $0xb0] sm:$0xff]
        %v2990 = vld [vmem:[#allocation3 + $0xb8] sm:$0xff]
        %v2991 = vld [vmem:[#allocation3 + $0xc0] sm:$0xff]
        %v2992 = vld [vmem:[#allocation3 + $0xc8] sm:$0xff]
        %v2993 = vld [vmem:[#allocation3 + $0xd0] sm:$0xff]
        %v2994 = vld [vmem:[#allocation3 + $0xd8] sm:$0xff]
        %v2995 = vld [vmem:[#allocation3 + $0xe0] sm:$0xff]
        %v2996 = vld [vmem:[#allocation3 + $0xe8] sm:$0xff]
        %v2997 = vld [vmem:[#allocation3 + $0xf0] sm:$0xff]
        %v2998 = vld [vmem:[#allocation3 + $0xf8] sm:$0xff]
        %v2999 = vld [vmem:[#allocation3 + $0x100] sm:$0xff]
        %v3000 = vld [vmem:[#allocation3 + $0x108] sm:$0xff]
        %v3001 = vld [vmem:[#allocation3 + $0x110] sm:$0xff]
        %v3002 = vld [vmem:[#allocation3 + $0x118] sm:$0xff]
        %v3003 = vld [vmem:[#allocation3 + $0x120] sm:$0xff]
        %v3004 = vld [vmem:[#allocation3 + $0x128] sm:$0xff]
        %v3005 = vld [vmem:[#allocation3 + $0x130] sm:$0xff]
        %v3006 = vld [vmem:[#allocation3 + $0x138] sm:$0xff]
        %v3007 = vld [vmem:[#allocation3 + $0x140] sm:$0xff]
        %v3008 = vld [vmem:[#allocation3 + $0x148] sm:$0xff]
        %v3009 = vld [vmem:[#allocation3 + $0x150] sm:$0xff]
        %v3010 = vld [vmem:[#allocation3 + $0x158] sm:$0xff]
        %v3011 = vld [vmem:[#allocation3 + $0x160] sm:$0xff]
        %v3012 = vld [vmem:[#allocation3 + $0x168] sm:$0xff]
        %v3013 = vld [vmem:[#allocation3 + $0x170] sm:$0xff]
        %v3014 = vld [vmem:[#allocation3 + $0x178] sm:$0xff]
        %v3015 = vld [vmem:[#allocation3 + $0x180] sm:$0xff]
        %v3016 = vld [vmem:[#allocation3 + $0x188] sm:$0xff]
        %v3017 = vld [vmem:[#allocation3 + $0x190] sm:$0xff]
        %v3018 = vld [vmem:[#allocation3 + $0x198] sm:$0xff]
        %v3019 = vld [vmem:[#allocation3 + $0x1a0] sm:$0xff]
        %v3020 = vld [vmem:[#allocation3 + $0x1a8] sm:$0xff]
        %v3021 = vld [vmem:[#allocation3 + $0x1b0] sm:$0xff]
        %v3022 = vld [vmem:[#allocation3 + $0x1b8] sm:$0xff]
        %v3023 = vld [vmem:[#allocation3 + $0x1c0] sm:$0xff]
        %v3024 = vld [vmem:[#allocation3 + $0x1c8] sm:$0xff]
        %v3025 = vld [vmem:[#allocation3 + $0x1d0] sm:$0xff]
        %v3026 = vld [vmem:[#allocation3 + $0x1d8] sm:$0xff]
        %v3027 = vld [vmem:[#allocation3 + $0x1e0] sm:$0xff]
        %v3028 = vld [vmem:[#allocation3 + $0x1e8] sm:$0xff]
        %v3029 = vld [vmem:[#allocation3 + $0x1f0] sm:$0xff]
        %v3030 = vld [vmem:[#allocation3 + $0x1f8] sm:$0xff]
        %v3031 = vpack.c.bf16 %v2904, %v2903
        %v3032 = vpack.c.bf16 %v2906, %v2905
        %v3033 = vpack.c.bf16 %v2908, %v2907
        %v3034 = vpack.c.bf16 %v2910, %v2909
        %v3035 = vpack.c.bf16 %v2912, %v2911
        %v3036 = vpack.c.bf16 %v2914, %v2913
        %v3037 = vpack.c.bf16 %v2916, %v2915
        %v3038 = vpack.c.bf16 %v2918, %v2917
        %v3039 = vpack.c.bf16 %v2920, %v2919
        %v3040 = vpack.c.bf16 %v2922, %v2921
        %v3041 = vpack.c.bf16 %v2924, %v2923
        %v3042 = vpack.c.bf16 %v2926, %v2925
        %v3043 = vpack.c.bf16 %v2928, %v2927
        %v3044 = vpack.c.bf16 %v2930, %v2929
        %v3045 = vpack.c.bf16 %v2932, %v2931
        %v3046 = vpack.c.bf16 %v2934, %v2933
        %v3047 = vpack.c.bf16 %v2936, %v2935
        %v3048 = vpack.c.bf16 %v2938, %v2937
        %v3049 = vpack.c.bf16 %v2940, %v2939
        %v3050 = vpack.c.bf16 %v2942, %v2941
        %v3051 = vpack.c.bf16 %v2944, %v2943
        %v3052 = vpack.c.bf16 %v2946, %v2945
        %v3053 = vpack.c.bf16 %v2948, %v2947
        %v3054 = vpack.c.bf16 %v2950, %v2949
        %v3055 = vpack.c.bf16 %v2952, %v2951
        %v3056 = vpack.c.bf16 %v2954, %v2953
        %v3057 = vpack.c.bf16 %v2956, %v2955
        %v3058 = vpack.c.bf16 %v2958, %v2957
        %v3059 = vpack.c.bf16 %v2960, %v2959
        %v3060 = vpack.c.bf16 %v2962, %v2961
        %v3061 = vpack.c.bf16 %v2964, %v2963
        %v3062 = vpack.c.bf16 %v2966, %v2965
        %v3063 = vpack.c.bf16 %v2968, %v2967
        %v3064 = vpack.c.bf16 %v2970, %v2969
        %v3065 = vpack.c.bf16 %v2972, %v2971
        %v3066 = vpack.c.bf16 %v2974, %v2973
        %v3067 = vpack.c.bf16 %v2976, %v2975
        %v3068 = vpack.c.bf16 %v2978, %v2977
        %v3069 = vpack.c.bf16 %v2980, %v2979
        %v3070 = vpack.c.bf16 %v2982, %v2981
        %v3071 = vpack.c.bf16 %v2984, %v2983
        %v3072 = vpack.c.bf16 %v2986, %v2985
        %v3073 = vpack.c.bf16 %v2988, %v2987
        %v3074 = vpack.c.bf16 %v2990, %v2989
        %v3075 = vpack.c.bf16 %v2992, %v2991
        %v3076 = vpack.c.bf16 %v2994, %v2993
        %v3077 = vpack.c.bf16 %v2996, %v2995
        %v3078 = vpack.c.bf16 %v2998, %v2997
        %v3079 = vpack.c.bf16 %v3000, %v2999
        %v3080 = vpack.c.bf16 %v3002, %v3001
        %v3081 = vpack.c.bf16 %v3004, %v3003
        %v3082 = vpack.c.bf16 %v3006, %v3005
        %v3083 = vpack.c.bf16 %v3008, %v3007
        %v3084 = vpack.c.bf16 %v3010, %v3009
        %v3085 = vpack.c.bf16 %v3012, %v3011
        %v3086 = vpack.c.bf16 %v3014, %v3013
        %v3087 = vpack.c.bf16 %v3016, %v3015
        %v3088 = vpack.c.bf16 %v3018, %v3017
        %v3089 = vpack.c.bf16 %v3020, %v3019
        %v3090 = vpack.c.bf16 %v3022, %v3021
        %v3091 = vpack.c.bf16 %v3024, %v3023
        %v3092 = vpack.c.bf16 %v3026, %v3025
        %v3093 = vpack.c.bf16 %v3028, %v3027
        %v3094 = vpack.c.bf16 %v3030, %v3029
        %3095 = vmatpush.bf16.msra.mxu0 %v1321
        %3096 = vmatpush.bf16.msra.mxu0 %v1320
        %3097 = vmatpush.bf16.msra.mxu0 %v1319
        %3098 = vmatpush.bf16.msra.mxu0 %v1318
        %3099 = vmatpush.bf16.msra.mxu0 %v1317
        %3100 = vmatpush.bf16.msra.mxu0 %v1316
        %3101 = vmatpush.bf16.msra.mxu0 %v1315
        %3102 = vmatpush.bf16.msra.mxu0 %v1314
        %3103 = vmatmul.bf16.gmra.mxu0 %v3031
        %v3104 = vpop.f32.mrf.mxu0
        %v3105 = vadd.f32 0.0, %v3104
        %v3106 = vpop.f32.mrf.mxu0
        %v3107 = vadd.f32 0.0, %v3106
        %3108 = vmatmul.bf16.gmra.mxu0 %v3032
        %v3109 = vpop.f32.mrf.mxu0
        %v3110 = vadd.f32 0.0, %v3109
        %v3111 = vpop.f32.mrf.mxu0
        %v3112 = vadd.f32 0.0, %v3111
        %3113 = vmatmul.bf16.gmra.mxu0 %v3033
        %v3114 = vpop.f32.mrf.mxu0
        %v3115 = vadd.f32 0.0, %v3114
        %v3116 = vpop.f32.mrf.mxu0
        %v3117 = vadd.f32 0.0, %v3116
        %3118 = vmatmul.bf16.gmra.mxu0 %v3034
        %v3119 = vpop.f32.mrf.mxu0
        %v3120 = vadd.f32 0.0, %v3119
        %v3121 = vpop.f32.mrf.mxu0
        %v3122 = vadd.f32 0.0, %v3121
        %3123 = vmatmul.bf16.gmra.mxu0 %v3035
        %v3124 = vpop.f32.mrf.mxu0
        %v3125 = vadd.f32 0.0, %v3124
        %v3126 = vpop.f32.mrf.mxu0
        %v3127 = vadd.f32 0.0, %v3126
        %3128 = vmatmul.bf16.gmra.mxu0 %v3036
        %v3129 = vpop.f32.mrf.mxu0
        %v3130 = vadd.f32 0.0, %v3129
        %v3131 = vpop.f32.mrf.mxu0
        %v3132 = vadd.f32 0.0, %v3131
        %3133 = vmatmul.bf16.gmra.mxu0 %v3037
        %v3134 = vpop.f32.mrf.mxu0
        %v3135 = vadd.f32 0.0, %v3134
        %v3136 = vpop.f32.mrf.mxu0
        %v3137 = vadd.f32 0.0, %v3136
        %3138 = vmatmul.bf16.gmra.mxu0 %v3038
        %v3139 = vpop.f32.mrf.mxu0
        %v3140 = vadd.f32 0.0, %v3139
        %v3141 = vpop.f32.mrf.mxu0
        %v3142 = vadd.f32 0.0, %v3141
        %3143 = vmatmul.bf16.gmra.mxu0 %v3039
        %v3144 = vpop.f32.mrf.mxu0
        %v3145 = vadd.f32 0.0, %v3144
        %v3146 = vpop.f32.mrf.mxu0
        %v3147 = vadd.f32 0.0, %v3146
        %3148 = vmatmul.bf16.gmra.mxu0 %v3040
        %v3149 = vpop.f32.mrf.mxu0
        %v3150 = vadd.f32 0.0, %v3149
        %v3151 = vpop.f32.mrf.mxu0
        %v3152 = vadd.f32 0.0, %v3151
        %3153 = vmatmul.bf16.gmra.mxu0 %v3041
        %v3154 = vpop.f32.mrf.mxu0
        %v3155 = vadd.f32 0.0, %v3154
        %v3156 = vpop.f32.mrf.mxu0
        %v3157 = vadd.f32 0.0, %v3156
        %3158 = vmatmul.bf16.gmra.mxu0 %v3042
        %v3159 = vpop.f32.mrf.mxu0
        %v3160 = vadd.f32 0.0, %v3159
        %v3161 = vpop.f32.mrf.mxu0
        %v3162 = vadd.f32 0.0, %v3161
        %3163 = vmatmul.bf16.gmra.mxu0 %v3043
        %v3164 = vpop.f32.mrf.mxu0
        %v3165 = vadd.f32 0.0, %v3164
        %v3166 = vpop.f32.mrf.mxu0
        %v3167 = vadd.f32 0.0, %v3166
        %3168 = vmatmul.bf16.gmra.mxu0 %v3044
        %v3169 = vpop.f32.mrf.mxu0
        %v3170 = vadd.f32 0.0, %v3169
        %v3171 = vpop.f32.mrf.mxu0
        %v3172 = vadd.f32 0.0, %v3171
        %3173 = vmatmul.bf16.gmra.mxu0 %v3045
        %v3174 = vpop.f32.mrf.mxu0
        %v3175 = vadd.f32 0.0, %v3174
        %v3176 = vpop.f32.mrf.mxu0
        %v3177 = vadd.f32 0.0, %v3176
        %3178 = vmatmul.bf16.gmra.mxu0 %v3046
        %v3179 = vpop.f32.mrf.mxu0
        %v3180 = vadd.f32 0.0, %v3179
        %v3181 = vpop.f32.mrf.mxu0
        %v3182 = vadd.f32 0.0, %v3181
        %3183 = vmatmul.bf16.gmra.mxu0 %v3047
        %v3184 = vpop.f32.mrf.mxu0
        %v3185 = vadd.f32 0.0, %v3184
        %v3186 = vpop.f32.mrf.mxu0
        %v3187 = vadd.f32 0.0, %v3186
        %3188 = vmatmul.bf16.gmra.mxu0 %v3048
        %v3189 = vpop.f32.mrf.mxu0
        %v3190 = vadd.f32 0.0, %v3189
        %v3191 = vpop.f32.mrf.mxu0
        %v3192 = vadd.f32 0.0, %v3191
        %3193 = vmatmul.bf16.gmra.mxu0 %v3049
        %v3194 = vpop.f32.mrf.mxu0
        %v3195 = vadd.f32 0.0, %v3194
        %v3196 = vpop.f32.mrf.mxu0
        %v3197 = vadd.f32 0.0, %v3196
        %3198 = vmatmul.bf16.gmra.mxu0 %v3050
        %v3199 = vpop.f32.mrf.mxu0
        %v3200 = vadd.f32 0.0, %v3199
        %v3201 = vpop.f32.mrf.mxu0
        %v3202 = vadd.f32 0.0, %v3201
        %3203 = vmatmul.bf16.gmra.mxu0 %v3051
        %v3204 = vpop.f32.mrf.mxu0
        %v3205 = vadd.f32 0.0, %v3204
        %v3206 = vpop.f32.mrf.mxu0
        %v3207 = vadd.f32 0.0, %v3206
        %3208 = vmatmul.bf16.gmra.mxu0 %v3052
        %v3209 = vpop.f32.mrf.mxu0
        %v3210 = vadd.f32 0.0, %v3209
        %v3211 = vpop.f32.mrf.mxu0
        %v3212 = vadd.f32 0.0, %v3211
        %3213 = vmatmul.bf16.gmra.mxu0 %v3053
        %v3214 = vpop.f32.mrf.mxu0
        %v3215 = vadd.f32 0.0, %v3214
        %v3216 = vpop.f32.mrf.mxu0
        %v3217 = vadd.f32 0.0, %v3216
        %3218 = vmatmul.bf16.gmra.mxu0 %v3054
        %v3219 = vpop.f32.mrf.mxu0
        %v3220 = vadd.f32 0.0, %v3219
        %v3221 = vpop.f32.mrf.mxu0
        %v3222 = vadd.f32 0.0, %v3221
        %3223 = vmatmul.bf16.gmra.mxu0 %v3055
        %v3224 = vpop.f32.mrf.mxu0
        %v3225 = vadd.f32 0.0, %v3224
        %v3226 = vpop.f32.mrf.mxu0
        %v3227 = vadd.f32 0.0, %v3226
        %3228 = vmatmul.bf16.gmra.mxu0 %v3056
        %v3229 = vpop.f32.mrf.mxu0
        %v3230 = vadd.f32 0.0, %v3229
        %v3231 = vpop.f32.mrf.mxu0
        %v3232 = vadd.f32 0.0, %v3231
        %3233 = vmatmul.bf16.gmra.mxu0 %v3057
        %v3234 = vpop.f32.mrf.mxu0
        %v3235 = vadd.f32 0.0, %v3234
        %v3236 = vpop.f32.mrf.mxu0
        %v3237 = vadd.f32 0.0, %v3236
        %3238 = vmatmul.bf16.gmra.mxu0 %v3058
        %v3239 = vpop.f32.mrf.mxu0
        %v3240 = vadd.f32 0.0, %v3239
        %v3241 = vpop.f32.mrf.mxu0
        %v3242 = vadd.f32 0.0, %v3241
        %3243 = vmatmul.bf16.gmra.mxu0 %v3059
        %v3244 = vpop.f32.mrf.mxu0
        %v3245 = vadd.f32 0.0, %v3244
        %v3246 = vpop.f32.mrf.mxu0
        %v3247 = vadd.f32 0.0, %v3246
        %3248 = vmatmul.bf16.gmra.mxu0 %v3060
        %v3249 = vpop.f32.mrf.mxu0
        %v3250 = vadd.f32 0.0, %v3249
        %v3251 = vpop.f32.mrf.mxu0
        %v3252 = vadd.f32 0.0, %v3251
        %3253 = vmatmul.bf16.gmra.mxu0 %v3061
        %v3254 = vpop.f32.mrf.mxu0
        %v3255 = vadd.f32 0.0, %v3254
        %v3256 = vpop.f32.mrf.mxu0
        %v3257 = vadd.f32 0.0, %v3256
        %3258 = vmatmul.bf16.gmra.mxu0 %v3062
        %v3259 = vpop.f32.mrf.mxu0
        %v3260 = vadd.f32 0.0, %v3259
        %v3261 = vpop.f32.mrf.mxu0
        %v3262 = vadd.f32 0.0, %v3261
        %3263 = vdwg.mxu0
        %3264 = vmatpush.bf16.msra.mxu0 %v1538
        %3265 = vmatpush.bf16.msra.mxu0 %v1537
        %3266 = vmatpush.bf16.msra.mxu0 %v1536
        %3267 = vmatpush.bf16.msra.mxu0 %v1535
        %3268 = vmatpush.bf16.msra.mxu0 %v1534
        %3269 = vmatpush.bf16.msra.mxu0 %v1533
        %3270 = vmatpush.bf16.msra.mxu0 %v1532
        %3271 = vmatpush.bf16.msra.mxu0 %v1531
        %3272 = vmatmul.bf16.gmra.mxu0 %v3063
        %v3273 = vpop.f32.mrf.mxu0
        %v3274 = vadd.f32 0.0, %v3273
        %v3275 = vpop.f32.mrf.mxu0
        %v3276 = vadd.f32 0.0, %v3275
        %3277 = vmatmul.bf16.gmra.mxu0 %v3064
        %v3278 = vpop.f32.mrf.mxu0
        %v3279 = vadd.f32 0.0, %v3278
        %v3280 = vpop.f32.mrf.mxu0
        %v3281 = vadd.f32 0.0, %v3280
        %3282 = vmatmul.bf16.gmra.mxu0 %v3065
        %v3283 = vpop.f32.mrf.mxu0
        %v3284 = vadd.f32 0.0, %v3283
        %v3285 = vpop.f32.mrf.mxu0
        %v3286 = vadd.f32 0.0, %v3285
        %3287 = vmatmul.bf16.gmra.mxu0 %v3066
        %v3288 = vpop.f32.mrf.mxu0
        %v3289 = vadd.f32 0.0, %v3288
        %v3290 = vpop.f32.mrf.mxu0
        %v3291 = vadd.f32 0.0, %v3290
        %3292 = vmatmul.bf16.gmra.mxu0 %v3067
        %v3293 = vpop.f32.mrf.mxu0
        %v3294 = vadd.f32 0.0, %v3293
        %v3295 = vpop.f32.mrf.mxu0
        %v3296 = vadd.f32 0.0, %v3295
        %3297 = vmatmul.bf16.gmra.mxu0 %v3068
        %v3298 = vpop.f32.mrf.mxu0
        %v3299 = vadd.f32 0.0, %v3298
        %v3300 = vpop.f32.mrf.mxu0
        %v3301 = vadd.f32 0.0, %v3300
        %3302 = vmatmul.bf16.gmra.mxu0 %v3069
        %v3303 = vpop.f32.mrf.mxu0
        %v3304 = vadd.f32 0.0, %v3303
        %v3305 = vpop.f32.mrf.mxu0
        %v3306 = vadd.f32 0.0, %v3305
        %3307 = vmatmul.bf16.gmra.mxu0 %v3070
        %v3308 = vpop.f32.mrf.mxu0
        %v3309 = vadd.f32 0.0, %v3308
        %v3310 = vpop.f32.mrf.mxu0
        %v3311 = vadd.f32 0.0, %v3310
        %3312 = vmatmul.bf16.gmra.mxu0 %v3071
        %v3313 = vpop.f32.mrf.mxu0
        %v3314 = vadd.f32 0.0, %v3313
        %v3315 = vpop.f32.mrf.mxu0
        %v3316 = vadd.f32 0.0, %v3315
        %3317 = vmatmul.bf16.gmra.mxu0 %v3072
        %v3318 = vpop.f32.mrf.mxu0
        %v3319 = vadd.f32 0.0, %v3318
        %v3320 = vpop.f32.mrf.mxu0
        %v3321 = vadd.f32 0.0, %v3320
        %3322 = vmatmul.bf16.gmra.mxu0 %v3073
        %v3323 = vpop.f32.mrf.mxu0
        %v3324 = vadd.f32 0.0, %v3323
        %v3325 = vpop.f32.mrf.mxu0
        %v3326 = vadd.f32 0.0, %v3325
        %3327 = vmatmul.bf16.gmra.mxu0 %v3074
        %v3328 = vpop.f32.mrf.mxu0
        %v3329 = vadd.f32 0.0, %v3328
        %v3330 = vpop.f32.mrf.mxu0
        %v3331 = vadd.f32 0.0, %v3330
        %3332 = vmatmul.bf16.gmra.mxu0 %v3075
        %v3333 = vpop.f32.mrf.mxu0
        %v3334 = vadd.f32 0.0, %v3333
        %v3335 = vpop.f32.mrf.mxu0
        %v3336 = vadd.f32 0.0, %v3335
        %3337 = vmatmul.bf16.gmra.mxu0 %v3076
        %v3338 = vpop.f32.mrf.mxu0
        %v3339 = vadd.f32 0.0, %v3338
        %v3340 = vpop.f32.mrf.mxu0
        %v3341 = vadd.f32 0.0, %v3340
        %3342 = vmatmul.bf16.gmra.mxu0 %v3077
        %v3343 = vpop.f32.mrf.mxu0
        %v3344 = vadd.f32 0.0, %v3343
        %v3345 = vpop.f32.mrf.mxu0
        %v3346 = vadd.f32 0.0, %v3345
        %3347 = vmatmul.bf16.gmra.mxu0 %v3078
        %v3348 = vpop.f32.mrf.mxu0
        %v3349 = vadd.f32 0.0, %v3348
        %v3350 = vpop.f32.mrf.mxu0
        %v3351 = vadd.f32 0.0, %v3350
        %3352 = vmatmul.bf16.gmra.mxu0 %v3079
        %v3353 = vpop.f32.mrf.mxu0
        %v3354 = vadd.f32 0.0, %v3353
        %v3355 = vpop.f32.mrf.mxu0
        %v3356 = vadd.f32 0.0, %v3355
        %3357 = vmatmul.bf16.gmra.mxu0 %v3080
        %v3358 = vpop.f32.mrf.mxu0
        %v3359 = vadd.f32 0.0, %v3358
        %v3360 = vpop.f32.mrf.mxu0
        %v3361 = vadd.f32 0.0, %v3360
        %3362 = vmatmul.bf16.gmra.mxu0 %v3081
        %v3363 = vpop.f32.mrf.mxu0
        %v3364 = vadd.f32 0.0, %v3363
        %v3365 = vpop.f32.mrf.mxu0
        %v3366 = vadd.f32 0.0, %v3365
        %3367 = vmatmul.bf16.gmra.mxu0 %v3082
        %v3368 = vpop.f32.mrf.mxu0
        %v3369 = vadd.f32 0.0, %v3368
        %v3370 = vpop.f32.mrf.mxu0
        %v3371 = vadd.f32 0.0, %v3370
        %3372 = vmatmul.bf16.gmra.mxu0 %v3083
        %v3373 = vpop.f32.mrf.mxu0
        %v3374 = vadd.f32 0.0, %v3373
        %v3375 = vpop.f32.mrf.mxu0
        %v3376 = vadd.f32 0.0, %v3375
        %3377 = vmatmul.bf16.gmra.mxu0 %v3084
        %v3378 = vpop.f32.mrf.mxu0
        %v3379 = vadd.f32 0.0, %v3378
        %v3380 = vpop.f32.mrf.mxu0
        %v3381 = vadd.f32 0.0, %v3380
        %3382 = vmatmul.bf16.gmra.mxu0 %v3085
        %v3383 = vpop.f32.mrf.mxu0
        %v3384 = vadd.f32 0.0, %v3383
        %v3385 = vpop.f32.mrf.mxu0
        %v3386 = vadd.f32 0.0, %v3385
        %3387 = vmatmul.bf16.gmra.mxu0 %v3086
        %v3388 = vpop.f32.mrf.mxu0
        %v3389 = vadd.f32 0.0, %v3388
        %v3390 = vpop.f32.mrf.mxu0
        %v3391 = vadd.f32 0.0, %v3390
        %3392 = vmatmul.bf16.gmra.mxu0 %v3087
        %v3393 = vpop.f32.mrf.mxu0
        %v3394 = vadd.f32 0.0, %v3393
        %v3395 = vpop.f32.mrf.mxu0
        %v3396 = vadd.f32 0.0, %v3395
        %3397 = vmatmul.bf16.gmra.mxu0 %v3088
        %v3398 = vpop.f32.mrf.mxu0
        %v3399 = vadd.f32 0.0, %v3398
        %v3400 = vpop.f32.mrf.mxu0
        %v3401 = vadd.f32 0.0, %v3400
        %3402 = vmatmul.bf16.gmra.mxu0 %v3089
        %v3403 = vpop.f32.mrf.mxu0
        %v3404 = vadd.f32 0.0, %v3403
        %v3405 = vpop.f32.mrf.mxu0
        %v3406 = vadd.f32 0.0, %v3405
        %3407 = vmatmul.bf16.gmra.mxu0 %v3090
        %v3408 = vpop.f32.mrf.mxu0
        %v3409 = vadd.f32 0.0, %v3408
        %v3410 = vpop.f32.mrf.mxu0
        %v3411 = vadd.f32 0.0, %v3410
        %3412 = vmatmul.bf16.gmra.mxu0 %v3091
        %v3413 = vpop.f32.mrf.mxu0
        %v3414 = vadd.f32 0.0, %v3413
        %v3415 = vpop.f32.mrf.mxu0
        %v3416 = vadd.f32 0.0, %v3415
        %3417 = vmatmul.bf16.gmra.mxu0 %v3092
        %v3418 = vpop.f32.mrf.mxu0
        %v3419 = vadd.f32 0.0, %v3418
        %v3420 = vpop.f32.mrf.mxu0
        %v3421 = vadd.f32 0.0, %v3420
        %3422 = vmatmul.bf16.gmra.mxu0 %v3093
        %v3423 = vpop.f32.mrf.mxu0
        %v3424 = vadd.f32 0.0, %v3423
        %v3425 = vpop.f32.mrf.mxu0
        %v3426 = vadd.f32 0.0, %v3425
        %3427 = vmatmul.bf16.gmra.mxu0 %v3094
        %v3428 = vpop.f32.mrf.mxu0
        %v3429 = vadd.f32 0.0, %v3428
        %v3430 = vpop.f32.mrf.mxu0
        %v3431 = vadd.f32 0.0, %v3430
        %3432 = vdwg.mxu0
        %v3433 = vsub.f32 %v3105, %v3274
        %v3434 = vsub.f32 %v3107, %v3276
        %v3435 = vsub.f32 %v3110, %v3279
        %v3436 = vsub.f32 %v3112, %v3281
        %v3437 = vsub.f32 %v3115, %v3284
        %v3438 = vsub.f32 %v3117, %v3286
        %v3439 = vsub.f32 %v3120, %v3289
        %v3440 = vsub.f32 %v3122, %v3291
        %v3441 = vsub.f32 %v3125, %v3294
        %v3442 = vsub.f32 %v3127, %v3296
        %v3443 = vsub.f32 %v3130, %v3299
        %v3444 = vsub.f32 %v3132, %v3301
        %v3445 = vsub.f32 %v3135, %v3304
        %v3446 = vsub.f32 %v3137, %v3306
        %v3447 = vsub.f32 %v3140, %v3309
        %v3448 = vsub.f32 %v3142, %v3311
        %v3449 = vsub.f32 %v3145, %v3314
        %v3450 = vsub.f32 %v3147, %v3316
        %v3451 = vsub.f32 %v3150, %v3319
        %v3452 = vsub.f32 %v3152, %v3321
        %v3453 = vsub.f32 %v3155, %v3324
        %v3454 = vsub.f32 %v3157, %v3326
        %v3455 = vsub.f32 %v3160, %v3329
        %v3456 = vsub.f32 %v3162, %v3331
        %v3457 = vsub.f32 %v3165, %v3334
        %v3458 = vsub.f32 %v3167, %v3336
        %v3459 = vsub.f32 %v3170, %v3339
        %v3460 = vsub.f32 %v3172, %v3341
        %v3461 = vsub.f32 %v3175, %v3344
        %v3462 = vsub.f32 %v3177, %v3346
        %v3463 = vsub.f32 %v3180, %v3349
        %v3464 = vsub.f32 %v3182, %v3351
        %v3465 = vsub.f32 %v3185, %v3354
        %v3466 = vsub.f32 %v3187, %v3356
        %v3467 = vsub.f32 %v3190, %v3359
        %v3468 = vsub.f32 %v3192, %v3361
        %v3469 = vsub.f32 %v3195, %v3364
        %v3470 = vsub.f32 %v3197, %v3366
        %v3471 = vsub.f32 %v3200, %v3369
        %v3472 = vsub.f32 %v3202, %v3371
        %v3473 = vsub.f32 %v3205, %v3374
        %v3474 = vsub.f32 %v3207, %v3376
        %v3475 = vsub.f32 %v3210, %v3379
        %v3476 = vsub.f32 %v3212, %v3381
        %v3477 = vsub.f32 %v3215, %v3384
        %v3478 = vsub.f32 %v3217, %v3386
        %v3479 = vsub.f32 %v3220, %v3389
        %v3480 = vsub.f32 %v3222, %v3391
        %v3481 = vsub.f32 %v3225, %v3394
        %v3482 = vsub.f32 %v3227, %v3396
        %v3483 = vsub.f32 %v3230, %v3399
        %v3484 = vsub.f32 %v3232, %v3401
        %v3485 = vsub.f32 %v3235, %v3404
        %v3486 = vsub.f32 %v3237, %v3406
        %v3487 = vsub.f32 %v3240, %v3409
        %v3488 = vsub.f32 %v3242, %v3411
        %v3489 = vsub.f32 %v3245, %v3414
        %v3490 = vsub.f32 %v3247, %v3416
        %v3491 = vsub.f32 %v3250, %v3419
        %v3492 = vsub.f32 %v3252, %v3421
        %v3493 = vsub.f32 %v3255, %v3424
        %v3494 = vsub.f32 %v3257, %v3426
        %v3495 = vsub.f32 %v3260, %v3429
        %v3496 = vsub.f32 %v3262, %v3431
        %3497 = vmatpush.bf16.msra.mxu0 %v1321
        %3498 = vmatpush.bf16.msra.mxu0 %v1320
        %3499 = vmatpush.bf16.msra.mxu0 %v1319
        %3500 = vmatpush.bf16.msra.mxu0 %v1318
        %3501 = vmatpush.bf16.msra.mxu0 %v1317
        %3502 = vmatpush.bf16.msra.mxu0 %v1316
        %3503 = vmatpush.bf16.msra.mxu0 %v1315
        %3504 = vmatpush.bf16.msra.mxu0 %v1314
        %3505 = vmatmul.bf16.gmra.mxu0 %v3063
        %v3506 = vpop.f32.mrf.mxu0
        %v3507 = vadd.f32 0.0, %v3506
        %v3508 = vpop.f32.mrf.mxu0
        %v3509 = vadd.f32 0.0, %v3508
        %3510 = vmatmul.bf16.gmra.mxu0 %v3064
        %v3511 = vpop.f32.mrf.mxu0
        %v3512 = vadd.f32 0.0, %v3511
        %v3513 = vpop.f32.mrf.mxu0
        %v3514 = vadd.f32 0.0, %v3513
        %3515 = vmatmul.bf16.gmra.mxu0 %v3065
        %v3516 = vpop.f32.mrf.mxu0
        %v3517 = vadd.f32 0.0, %v3516
        %v3518 = vpop.f32.mrf.mxu0
        %v3519 = vadd.f32 0.0, %v3518
        %3520 = vmatmul.bf16.gmra.mxu0 %v3066
        %v3521 = vpop.f32.mrf.mxu0
        %v3522 = vadd.f32 0.0, %v3521
        %v3523 = vpop.f32.mrf.mxu0
        %v3524 = vadd.f32 0.0, %v3523
        %3525 = vmatmul.bf16.gmra.mxu0 %v3067
        %v3526 = vpop.f32.mrf.mxu0
        %v3527 = vadd.f32 0.0, %v3526
        %v3528 = vpop.f32.mrf.mxu0
        %v3529 = vadd.f32 0.0, %v3528
        %3530 = vmatmul.bf16.gmra.mxu0 %v3068
        %v3531 = vpop.f32.mrf.mxu0
        %v3532 = vadd.f32 0.0, %v3531
        %v3533 = vpop.f32.mrf.mxu0
        %v3534 = vadd.f32 0.0, %v3533
        %3535 = vmatmul.bf16.gmra.mxu0 %v3069
        %v3536 = vpop.f32.mrf.mxu0
        %v3537 = vadd.f32 0.0, %v3536
        %v3538 = vpop.f32.mrf.mxu0
        %v3539 = vadd.f32 0.0, %v3538
        %3540 = vmatmul.bf16.gmra.mxu0 %v3070
        %v3541 = vpop.f32.mrf.mxu0
        %v3542 = vadd.f32 0.0, %v3541
        %v3543 = vpop.f32.mrf.mxu0
        %v3544 = vadd.f32 0.0, %v3543
        %3545 = vmatmul.bf16.gmra.mxu0 %v3071
        %v3546 = vpop.f32.mrf.mxu0
        %v3547 = vadd.f32 0.0, %v3546
        %v3548 = vpop.f32.mrf.mxu0
        %v3549 = vadd.f32 0.0, %v3548
        %3550 = vmatmul.bf16.gmra.mxu0 %v3072
        %v3551 = vpop.f32.mrf.mxu0
        %v3552 = vadd.f32 0.0, %v3551
        %v3553 = vpop.f32.mrf.mxu0
        %v3554 = vadd.f32 0.0, %v3553
        %3555 = vmatmul.bf16.gmra.mxu0 %v3073
        %v3556 = vpop.f32.mrf.mxu0
        %v3557 = vadd.f32 0.0, %v3556
        %v3558 = vpop.f32.mrf.mxu0
        %v3559 = vadd.f32 0.0, %v3558
        %3560 = vmatmul.bf16.gmra.mxu0 %v3074
        %v3561 = vpop.f32.mrf.mxu0
        %v3562 = vadd.f32 0.0, %v3561
        %v3563 = vpop.f32.mrf.mxu0
        %v3564 = vadd.f32 0.0, %v3563
        %3565 = vmatmul.bf16.gmra.mxu0 %v3075
        %v3566 = vpop.f32.mrf.mxu0
        %v3567 = vadd.f32 0.0, %v3566
        %v3568 = vpop.f32.mrf.mxu0
        %v3569 = vadd.f32 0.0, %v3568
        %3570 = vmatmul.bf16.gmra.mxu0 %v3076
        %v3571 = vpop.f32.mrf.mxu0
        %v3572 = vadd.f32 0.0, %v3571
        %v3573 = vpop.f32.mrf.mxu0
        %v3574 = vadd.f32 0.0, %v3573
        %3575 = vmatmul.bf16.gmra.mxu0 %v3077
        %v3576 = vpop.f32.mrf.mxu0
        %v3577 = vadd.f32 0.0, %v3576
        %v3578 = vpop.f32.mrf.mxu0
        %v3579 = vadd.f32 0.0, %v3578
        %3580 = vmatmul.bf16.gmra.mxu0 %v3078
        %v3581 = vpop.f32.mrf.mxu0
        %v3582 = vadd.f32 0.0, %v3581
        %v3583 = vpop.f32.mrf.mxu0
        %v3584 = vadd.f32 0.0, %v3583
        %3585 = vmatmul.bf16.gmra.mxu0 %v3079
        %v3586 = vpop.f32.mrf.mxu0
        %v3587 = vadd.f32 0.0, %v3586
        %v3588 = vpop.f32.mrf.mxu0
        %v3589 = vadd.f32 0.0, %v3588
        %3590 = vmatmul.bf16.gmra.mxu0 %v3080
        %v3591 = vpop.f32.mrf.mxu0
        %v3592 = vadd.f32 0.0, %v3591
        %v3593 = vpop.f32.mrf.mxu0
        %v3594 = vadd.f32 0.0, %v3593
        %3595 = vmatmul.bf16.gmra.mxu0 %v3081
        %v3596 = vpop.f32.mrf.mxu0
        %v3597 = vadd.f32 0.0, %v3596
        %v3598 = vpop.f32.mrf.mxu0
        %v3599 = vadd.f32 0.0, %v3598
        %3600 = vmatmul.bf16.gmra.mxu0 %v3082
        %v3601 = vpop.f32.mrf.mxu0
        %v3602 = vadd.f32 0.0, %v3601
        %v3603 = vpop.f32.mrf.mxu0
        %v3604 = vadd.f32 0.0, %v3603
        %3605 = vmatmul.bf16.gmra.mxu0 %v3083
        %v3606 = vpop.f32.mrf.mxu0
        %v3607 = vadd.f32 0.0, %v3606
        %v3608 = vpop.f32.mrf.mxu0
        %v3609 = vadd.f32 0.0, %v3608
        %3610 = vmatmul.bf16.gmra.mxu0 %v3084
        %v3611 = vpop.f32.mrf.mxu0
        %v3612 = vadd.f32 0.0, %v3611
        %v3613 = vpop.f32.mrf.mxu0
        %v3614 = vadd.f32 0.0, %v3613
        %3615 = vmatmul.bf16.gmra.mxu0 %v3085
        %v3616 = vpop.f32.mrf.mxu0
        %v3617 = vadd.f32 0.0, %v3616
        %v3618 = vpop.f32.mrf.mxu0
        %v3619 = vadd.f32 0.0, %v3618
        %3620 = vmatmul.bf16.gmra.mxu0 %v3086
        %v3621 = vpop.f32.mrf.mxu0
        %v3622 = vadd.f32 0.0, %v3621
        %v3623 = vpop.f32.mrf.mxu0
        %v3624 = vadd.f32 0.0, %v3623
        %3625 = vmatmul.bf16.gmra.mxu0 %v3087
        %v3626 = vpop.f32.mrf.mxu0
        %v3627 = vadd.f32 0.0, %v3626
        %v3628 = vpop.f32.mrf.mxu0
        %v3629 = vadd.f32 0.0, %v3628
        %3630 = vmatmul.bf16.gmra.mxu0 %v3088
        %v3631 = vpop.f32.mrf.mxu0
        %v3632 = vadd.f32 0.0, %v3631
        %v3633 = vpop.f32.mrf.mxu0
        %v3634 = vadd.f32 0.0, %v3633
        %3635 = vmatmul.bf16.gmra.mxu0 %v3089
        %v3636 = vpop.f32.mrf.mxu0
        %v3637 = vadd.f32 0.0, %v3636
        %v3638 = vpop.f32.mrf.mxu0
        %v3639 = vadd.f32 0.0, %v3638
        %3640 = vmatmul.bf16.gmra.mxu0 %v3090
        %v3641 = vpop.f32.mrf.mxu0
        %v3642 = vadd.f32 0.0, %v3641
        %v3643 = vpop.f32.mrf.mxu0
        %v3644 = vadd.f32 0.0, %v3643
        %3645 = vmatmul.bf16.gmra.mxu0 %v3091
        %v3646 = vpop.f32.mrf.mxu0
        %v3647 = vadd.f32 0.0, %v3646
        %v3648 = vpop.f32.mrf.mxu0
        %v3649 = vadd.f32 0.0, %v3648
        %3650 = vmatmul.bf16.gmra.mxu0 %v3092
        %v3651 = vpop.f32.mrf.mxu0
        %v3652 = vadd.f32 0.0, %v3651
        %v3653 = vpop.f32.mrf.mxu0
        %v3654 = vadd.f32 0.0, %v3653
        %3655 = vmatmul.bf16.gmra.mxu0 %v3093
        %v3656 = vpop.f32.mrf.mxu0
        %v3657 = vadd.f32 0.0, %v3656
        %v3658 = vpop.f32.mrf.mxu0
        %v3659 = vadd.f32 0.0, %v3658
        %3660 = vmatmul.bf16.gmra.mxu0 %v3094
        %v3661 = vpop.f32.mrf.mxu0
        %v3662 = vadd.f32 0.0, %v3661
        %v3663 = vpop.f32.mrf.mxu0
        %v3664 = vadd.f32 0.0, %v3663
        %3665 = vdwg.mxu0
        %3666 = vmatpush.bf16.msra.mxu0 %v1538
        %3667 = vmatpush.bf16.msra.mxu0 %v1537
        %3668 = vmatpush.bf16.msra.mxu0 %v1536
        %3669 = vmatpush.bf16.msra.mxu0 %v1535
        %3670 = vmatpush.bf16.msra.mxu0 %v1534
        %3671 = vmatpush.bf16.msra.mxu0 %v1533
        %3672 = vmatpush.bf16.msra.mxu0 %v1532
        %3673 = vmatpush.bf16.msra.mxu0 %v1531
        %3674 = vmatmul.bf16.gmra.mxu0 %v3031
        %v3675 = vpop.f32.mrf.mxu0
        %v3676 = vadd.f32 %v3507, %v3675
        %v3677 = vpop.f32.mrf.mxu0
        %v3678 = vadd.f32 %v3509, %v3677
        %3679 = vmatmul.bf16.gmra.mxu0 %v3032
        %v3680 = vpop.f32.mrf.mxu0
        %v3681 = vadd.f32 %v3512, %v3680
        %v3682 = vpop.f32.mrf.mxu0
        %v3683 = vadd.f32 %v3514, %v3682
        %3684 = vmatmul.bf16.gmra.mxu0 %v3033
        %v3685 = vpop.f32.mrf.mxu0
        %v3686 = vadd.f32 %v3517, %v3685
        %v3687 = vpop.f32.mrf.mxu0
        %v3688 = vadd.f32 %v3519, %v3687
        %3689 = vmatmul.bf16.gmra.mxu0 %v3034
        %v3690 = vpop.f32.mrf.mxu0
        %v3691 = vadd.f32 %v3522, %v3690
        %v3692 = vpop.f32.mrf.mxu0
        %v3693 = vadd.f32 %v3524, %v3692
        %3694 = vmatmul.bf16.gmra.mxu0 %v3035
        %v3695 = vpop.f32.mrf.mxu0
        %v3696 = vadd.f32 %v3527, %v3695
        %v3697 = vpop.f32.mrf.mxu0
        %v3698 = vadd.f32 %v3529, %v3697
        %3699 = vmatmul.bf16.gmra.mxu0 %v3036
        %v3700 = vpop.f32.mrf.mxu0
        %v3701 = vadd.f32 %v3532, %v3700
        %v3702 = vpop.f32.mrf.mxu0
        %v3703 = vadd.f32 %v3534, %v3702
        %3704 = vmatmul.bf16.gmra.mxu0 %v3037
        %v3705 = vpop.f32.mrf.mxu0
        %v3706 = vadd.f32 %v3537, %v3705
        %v3707 = vpop.f32.mrf.mxu0
        %v3708 = vadd.f32 %v3539, %v3707
        %3709 = vmatmul.bf16.gmra.mxu0 %v3038
        %v3710 = vpop.f32.mrf.mxu0
        %v3711 = vadd.f32 %v3542, %v3710
        %v3712 = vpop.f32.mrf.mxu0
        %v3713 = vadd.f32 %v3544, %v3712
        %3714 = vmatmul.bf16.gmra.mxu0 %v3039
        %v3715 = vpop.f32.mrf.mxu0
        %v3716 = vadd.f32 %v3547, %v3715
        %v3717 = vpop.f32.mrf.mxu0
        %v3718 = vadd.f32 %v3549, %v3717
        %3719 = vmatmul.bf16.gmra.mxu0 %v3040
        %v3720 = vpop.f32.mrf.mxu0
        %v3721 = vadd.f32 %v3552, %v3720
        %v3722 = vpop.f32.mrf.mxu0
        %v3723 = vadd.f32 %v3554, %v3722
        %3724 = vmatmul.bf16.gmra.mxu0 %v3041
        %v3725 = vpop.f32.mrf.mxu0
        %v3726 = vadd.f32 %v3557, %v3725
        %v3727 = vpop.f32.mrf.mxu0
        %v3728 = vadd.f32 %v3559, %v3727
        %3729 = vmatmul.bf16.gmra.mxu0 %v3042
        %v3730 = vpop.f32.mrf.mxu0
        %v3731 = vadd.f32 %v3562, %v3730
        %v3732 = vpop.f32.mrf.mxu0
        %v3733 = vadd.f32 %v3564, %v3732
        %3734 = vmatmul.bf16.gmra.mxu0 %v3043
        %v3735 = vpop.f32.mrf.mxu0
        %v3736 = vadd.f32 %v3567, %v3735
        %v3737 = vpop.f32.mrf.mxu0
        %v3738 = vadd.f32 %v3569, %v3737
        %3739 = vmatmul.bf16.gmra.mxu0 %v3044
        %v3740 = vpop.f32.mrf.mxu0
        %v3741 = vadd.f32 %v3572, %v3740
        %v3742 = vpop.f32.mrf.mxu0
        %v3743 = vadd.f32 %v3574, %v3742
        %3744 = vmatmul.bf16.gmra.mxu0 %v3045
        %v3745 = vpop.f32.mrf.mxu0
        %v3746 = vadd.f32 %v3577, %v3745
        %v3747 = vpop.f32.mrf.mxu0
        %v3748 = vadd.f32 %v3579, %v3747
        %3749 = vmatmul.bf16.gmra.mxu0 %v3046
        %v3750 = vpop.f32.mrf.mxu0
        %v3751 = vadd.f32 %v3582, %v3750
        %v3752 = vpop.f32.mrf.mxu0
        %v3753 = vadd.f32 %v3584, %v3752
        %3754 = vmatmul.bf16.gmra.mxu0 %v3047
        %v3755 = vpop.f32.mrf.mxu0
        %v3756 = vadd.f32 %v3587, %v3755
        %v3757 = vpop.f32.mrf.mxu0
        %v3758 = vadd.f32 %v3589, %v3757
        %3759 = vmatmul.bf16.gmra.mxu0 %v3048
        %v3760 = vpop.f32.mrf.mxu0
        %v3761 = vadd.f32 %v3592, %v3760
        %v3762 = vpop.f32.mrf.mxu0
        %v3763 = vadd.f32 %v3594, %v3762
        %3764 = vmatmul.bf16.gmra.mxu0 %v3049
        %v3765 = vpop.f32.mrf.mxu0
        %v3766 = vadd.f32 %v3597, %v3765
        %v3767 = vpop.f32.mrf.mxu0
        %v3768 = vadd.f32 %v3599, %v3767
        %3769 = vmatmul.bf16.gmra.mxu0 %v3050
        %v3770 = vpop.f32.mrf.mxu0
        %v3771 = vadd.f32 %v3602, %v3770
        %v3772 = vpop.f32.mrf.mxu0
        %v3773 = vadd.f32 %v3604, %v3772
        %3774 = vmatmul.bf16.gmra.mxu0 %v3051
        %v3775 = vpop.f32.mrf.mxu0
        %v3776 = vadd.f32 %v3607, %v3775
        %v3777 = vpop.f32.mrf.mxu0
        %v3778 = vadd.f32 %v3609, %v3777
        %3779 = vmatmul.bf16.gmra.mxu0 %v3052
        %v3780 = vpop.f32.mrf.mxu0
        %v3781 = vadd.f32 %v3612, %v3780
        %v3782 = vpop.f32.mrf.mxu0
        %v3783 = vadd.f32 %v3614, %v3782
        %3784 = vmatmul.bf16.gmra.mxu0 %v3053
        %v3785 = vpop.f32.mrf.mxu0
        %v3786 = vadd.f32 %v3617, %v3785
        %v3787 = vpop.f32.mrf.mxu0
        %v3788 = vadd.f32 %v3619, %v3787
        %3789 = vmatmul.bf16.gmra.mxu0 %v3054
        %v3790 = vpop.f32.mrf.mxu0
        %v3791 = vadd.f32 %v3622, %v3790
        %v3792 = vpop.f32.mrf.mxu0
        %v3793 = vadd.f32 %v3624, %v3792
        %3794 = vmatmul.bf16.gmra.mxu0 %v3055
        %v3795 = vpop.f32.mrf.mxu0
        %v3796 = vadd.f32 %v3627, %v3795
        %v3797 = vpop.f32.mrf.mxu0
        %v3798 = vadd.f32 %v3629, %v3797
        %3799 = vmatmul.bf16.gmra.mxu0 %v3056
        %v3800 = vpop.f32.mrf.mxu0
        %v3801 = vadd.f32 %v3632, %v3800
        %v3802 = vpop.f32.mrf.mxu0
        %v3803 = vadd.f32 %v3634, %v3802
        %3804 = vmatmul.bf16.gmra.mxu0 %v3057
        %v3805 = vpop.f32.mrf.mxu0
        %v3806 = vadd.f32 %v3637, %v3805
        %v3807 = vpop.f32.mrf.mxu0
        %v3808 = vadd.f32 %v3639, %v3807
        %3809 = vmatmul.bf16.gmra.mxu0 %v3058
        %v3810 = vpop.f32.mrf.mxu0
        %v3811 = vadd.f32 %v3642, %v3810
        %v3812 = vpop.f32.mrf.mxu0
        %v3813 = vadd.f32 %v3644, %v3812
        %3814 = vmatmul.bf16.gmra.mxu0 %v3059
        %v3815 = vpop.f32.mrf.mxu0
        %v3816 = vadd.f32 %v3647, %v3815
        %v3817 = vpop.f32.mrf.mxu0
        %v3818 = vadd.f32 %v3649, %v3817
        %3819 = vmatmul.bf16.gmra.mxu0 %v3060
        %v3820 = vpop.f32.mrf.mxu0
        %v3821 = vadd.f32 %v3652, %v3820
        %v3822 = vpop.f32.mrf.mxu0
        %v3823 = vadd.f32 %v3654, %v3822
        %3824 = vmatmul.bf16.gmra.mxu0 %v3061
        %v3825 = vpop.f32.mrf.mxu0
        %v3826 = vadd.f32 %v3657, %v3825
        %v3827 = vpop.f32.mrf.mxu0
        %v3828 = vadd.f32 %v3659, %v3827
        %3829 = vmatmul.bf16.gmra.mxu0 %v3062
        %v3830 = vpop.f32.mrf.mxu0
        %v3831 = vadd.f32 %v3662, %v3830
        %v3832 = vpop.f32.mrf.mxu0
        %v3833 = vadd.f32 %v3664, %v3832
        %3834 = vdwg.mxu0
        %v3835 = vmul.f32 %v3433, %v706
        %v3836 = vmul.f32 %v3434, %v707
        %v3837 = vmul.f32 %v3435, %v708
        %v3838 = vmul.f32 %v3436, %v709
        %v3839 = vmul.f32 %v3437, %v710
        %v3840 = vmul.f32 %v3438, %v711
        %v3841 = vmul.f32 %v3439, %v712
        %v3842 = vmul.f32 %v3440, %v713
        %v3843 = vmul.f32 %v3441, %v714
        %v3844 = vmul.f32 %v3442, %v715
        %v3845 = vmul.f32 %v3443, %v716
        %v3846 = vmul.f32 %v3444, %v717
        %v3847 = vmul.f32 %v3445, %v718
        %v3848 = vmul.f32 %v3446, %v719
        %v3849 = vmul.f32 %v3447, %v720
        %v3850 = vmul.f32 %v3448, %v721
        %v3851 = vmul.f32 %v3449, %v738
        %v3852 = vmul.f32 %v3450, %v739
        %v3853 = vmul.f32 %v3451, %v740
        %v3854 = vmul.f32 %v3452, %v741
        %v3855 = vmul.f32 %v3453, %v742
        %v3856 = vmul.f32 %v3454, %v743
        %v3857 = vmul.f32 %v3455, %v744
        %v3858 = vmul.f32 %v3456, %v745
        %v3859 = vmul.f32 %v3457, %v746
        %v3860 = vmul.f32 %v3458, %v747
        %v3861 = vmul.f32 %v3459, %v748
        %v3862 = vmul.f32 %v3460, %v749
        %v3863 = vmul.f32 %v3461, %v750
        %v3864 = vmul.f32 %v3462, %v751
        %v3865 = vmul.f32 %v3463, %v752
        %v3866 = vmul.f32 %v3464, %v753
        %v3867 = vmul.f32 %v3465, %v770
        %v3868 = vmul.f32 %v3466, %v771
        %v3869 = vmul.f32 %v3467, %v772
        %v3870 = vmul.f32 %v3468, %v773
        %v3871 = vmul.f32 %v3469, %v774
        %v3872 = vmul.f32 %v3470, %v775
        %v3873 = vmul.f32 %v3471, %v776
        %v3874 = vmul.f32 %v3472, %v777
        %v3875 = vmul.f32 %v3473, %v778
        %v3876 = vmul.f32 %v3474, %v779
        %v3877 = vmul.f32 %v3475, %v780
        %v3878 = vmul.f32 %v3476, %v781
        %v3879 = vmul.f32 %v3477, %v782
        %v3880 = vmul.f32 %v3478, %v783
        %v3881 = vmul.f32 %v3479, %v784
        %v3882 = vmul.f32 %v3480, %v785
        %v3883 = vmul.f32 %v3481, %v802
        %v3884 = vmul.f32 %v3482, %v803
        %v3885 = vmul.f32 %v3483, %v804
        %v3886 = vmul.f32 %v3484, %v805
        %v3887 = vmul.f32 %v3485, %v806
        %v3888 = vmul.f32 %v3486, %v807
        %v3889 = vmul.f32 %v3487, %v808
        %v3890 = vmul.f32 %v3488, %v809
        %v3891 = vmul.f32 %v3489, %v810
        %v3892 = vmul.f32 %v3490, %v811
        %v3893 = vmul.f32 %v3491, %v812
        %v3894 = vmul.f32 %v3492, %v813
        %v3895 = vmul.f32 %v3493, %v814
        %v3896 = vmul.f32 %v3494, %v815
        %v3897 = vmul.f32 %v3495, %v816
        %v3898 = vmul.f32 %v3496, %v817
        %v3899 = vmul.f32 %v3676, %v722
        %v3900 = vmul.f32 %v3678, %v723
        %v3901 = vmul.f32 %v3681, %v724
        %v3902 = vmul.f32 %v3683, %v725
        %v3903 = vmul.f32 %v3686, %v726
        %v3904 = vmul.f32 %v3688, %v727
        %v3905 = vmul.f32 %v3691, %v728
        %v3906 = vmul.f32 %v3693, %v729
        %v3907 = vmul.f32 %v3696, %v730
        %v3908 = vmul.f32 %v3698, %v731
        %v3909 = vmul.f32 %v3701, %v732
        %v3910 = vmul.f32 %v3703, %v733
        %v3911 = vmul.f32 %v3706, %v734
        %v3912 = vmul.f32 %v3708, %v735
        %v3913 = vmul.f32 %v3711, %v736
        %v3914 = vmul.f32 %v3713, %v737
        %v3915 = vmul.f32 %v3716, %v754
        %v3916 = vmul.f32 %v3718, %v755
        %v3917 = vmul.f32 %v3721, %v756
        %v3918 = vmul.f32 %v3723, %v757
        %v3919 = vmul.f32 %v3726, %v758
        %v3920 = vmul.f32 %v3728, %v759
        %v3921 = vmul.f32 %v3731, %v760
        %v3922 = vmul.f32 %v3733, %v761
        %v3923 = vmul.f32 %v3736, %v762
        %v3924 = vmul.f32 %v3738, %v763
        %v3925 = vmul.f32 %v3741, %v764
        %v3926 = vmul.f32 %v3743, %v765
        %v3927 = vmul.f32 %v3746, %v766
        %v3928 = vmul.f32 %v3748, %v767
        %v3929 = vmul.f32 %v3751, %v768
        %v3930 = vmul.f32 %v3753, %v769
        %v3931 = vmul.f32 %v3756, %v786
        %v3932 = vmul.f32 %v3758, %v787
        %v3933 = vmul.f32 %v3761, %v788
        %v3934 = vmul.f32 %v3763, %v789
        %v3935 = vmul.f32 %v3766, %v790
        %v3936 = vmul.f32 %v3768, %v791
        %v3937 = vmul.f32 %v3771, %v792
        %v3938 = vmul.f32 %v3773, %v793
        %v3939 = vmul.f32 %v3776, %v794
        %v3940 = vmul.f32 %v3778, %v795
        %v3941 = vmul.f32 %v3781, %v796
        %v3942 = vmul.f32 %v3783, %v797
        %v3943 = vmul.f32 %v3786, %v798
        %v3944 = vmul.f32 %v3788, %v799
        %v3945 = vmul.f32 %v3791, %v800
        %v3946 = vmul.f32 %v3793, %v801
        %v3947 = vmul.f32 %v3796, %v818
        %v3948 = vmul.f32 %v3798, %v819
        %v3949 = vmul.f32 %v3801, %v820
        %v3950 = vmul.f32 %v3803, %v821
        %v3951 = vmul.f32 %v3806, %v822
        %v3952 = vmul.f32 %v3808, %v823
        %v3953 = vmul.f32 %v3811, %v824
        %v3954 = vmul.f32 %v3813, %v825
        %v3955 = vmul.f32 %v3816, %v826
        %v3956 = vmul.f32 %v3818, %v827
        %v3957 = vmul.f32 %v3821, %v828
        %v3958 = vmul.f32 %v3823, %v829
        %v3959 = vmul.f32 %v3826, %v830
        %v3960 = vmul.f32 %v3828, %v831
        %v3961 = vmul.f32 %v3831, %v832
        %v3962 = vmul.f32 %v3833, %v833
        %v3963 = vsub.f32 %v3835, %v3899
        %v3964 = vsub.f32 %v3836, %v3900
        %v3965 = vsub.f32 %v3837, %v3901
        %v3966 = vsub.f32 %v3838, %v3902
        %v3967 = vsub.f32 %v3839, %v3903
        %v3968 = vsub.f32 %v3840, %v3904
        %v3969 = vsub.f32 %v3841, %v3905
        %v3970 = vsub.f32 %v3842, %v3906
        %v3971 = vsub.f32 %v3843, %v3907
        %v3972 = vsub.f32 %v3844, %v3908
        %v3973 = vsub.f32 %v3845, %v3909
        %v3974 = vsub.f32 %v3846, %v3910
        %v3975 = vsub.f32 %v3847, %v3911
        %v3976 = vsub.f32 %v3848, %v3912
        %v3977 = vsub.f32 %v3849, %v3913
        %v3978 = vsub.f32 %v3850, %v3914
        %v3979 = vsub.f32 %v3851, %v3915
        %v3980 = vsub.f32 %v3852, %v3916
        %v3981 = vsub.f32 %v3853, %v3917
        %v3982 = vsub.f32 %v3854, %v3918
        %v3983 = vsub.f32 %v3855, %v3919
        %v3984 = vsub.f32 %v3856, %v3920
        %v3985 = vsub.f32 %v3857, %v3921
        %v3986 = vsub.f32 %v3858, %v3922
        %v3987 = vsub.f32 %v3859, %v3923
        %v3988 = vsub.f32 %v3860, %v3924
        %v3989 = vsub.f32 %v3861, %v3925
        %v3990 = vsub.f32 %v3862, %v3926
        %v3991 = vsub.f32 %v3863, %v3927
        %v3992 = vsub.f32 %v3864, %v3928
        %v3993 = vsub.f32 %v3865, %v3929
        %v3994 = vsub.f32 %v3866, %v3930
        %v3995 = vsub.f32 %v3867, %v3931
        %v3996 = vsub.f32 %v3868, %v3932
        %v3997 = vsub.f32 %v3869, %v3933
        %v3998 = vsub.f32 %v3870, %v3934
        %v3999 = vsub.f32 %v3871, %v3935
        %v4000 = vsub.f32 %v3872, %v3936
        %v4001 = vsub.f32 %v3873, %v3937
        %v4002 = vsub.f32 %v3874, %v3938
        %v4003 = vsub.f32 %v3875, %v3939
        %v4004 = vsub.f32 %v3876, %v3940
        %v4005 = vsub.f32 %v3877, %v3941
        %v4006 = vsub.f32 %v3878, %v3942
        %v4007 = vsub.f32 %v3879, %v3943
        %v4008 = vsub.f32 %v3880, %v3944
        %v4009 = vsub.f32 %v3881, %v3945
        %v4010 = vsub.f32 %v3882, %v3946
        %v4011 = vsub.f32 %v3883, %v3947
        %v4012 = vsub.f32 %v3884, %v3948
        %v4013 = vsub.f32 %v3885, %v3949
        %v4014 = vsub.f32 %v3886, %v3950
        %v4015 = vsub.f32 %v3887, %v3951
        %v4016 = vsub.f32 %v3888, %v3952
        %v4017 = vsub.f32 %v3889, %v3953
        %v4018 = vsub.f32 %v3890, %v3954
        %v4019 = vsub.f32 %v3891, %v3955
        %v4020 = vsub.f32 %v3892, %v3956
        %v4021 = vsub.f32 %v3893, %v3957
        %v4022 = vsub.f32 %v3894, %v3958
        %v4023 = vsub.f32 %v3895, %v3959
        %v4024 = vsub.f32 %v3896, %v3960
        %v4025 = vsub.f32 %v3897, %v3961
        %v4026 = vsub.f32 %v3898, %v3962
        %v4027 = vadd.f32 %v3963, %v3979
        %v4028 = vadd.f32 %v4027, %v3995
        %v4029 = vadd.f32 %v4028, %v4011
        %v4030 = vadd.f32 %v3964, %v3980
        %v4031 = vadd.f32 %v4030, %v3996
        %v4032 = vadd.f32 %v4031, %v4012
        %v4033 = vadd.f32 %v3965, %v3981
        %v4034 = vadd.f32 %v4033, %v3997
        %v4035 = vadd.f32 %v4034, %v4013
        %v4036 = vadd.f32 %v3966, %v3982
        %v4037 = vadd.f32 %v4036, %v3998
        %v4038 = vadd.f32 %v4037, %v4014
        %v4039 = vadd.f32 %v3967, %v3983
        %v4040 = vadd.f32 %v4039, %v3999
        %v4041 = vadd.f32 %v4040, %v4015
        %v4042 = vadd.f32 %v3968, %v3984
        %v4043 = vadd.f32 %v4042, %v4000
        %v4044 = vadd.f32 %v4043, %v4016
        %v4045 = vadd.f32 %v3969, %v3985
        %v4046 = vadd.f32 %v4045, %v4001
        %v4047 = vadd.f32 %v4046, %v4017
        %v4048 = vadd.f32 %v3970, %v3986
        %v4049 = vadd.f32 %v4048, %v4002
        %v4050 = vadd.f32 %v4049, %v4018
        %v4051 = vadd.f32 %v3971, %v3987
        %v4052 = vadd.f32 %v4051, %v4003
        %v4053 = vadd.f32 %v4052, %v4019
        %v4054 = vadd.f32 %v3972, %v3988
        %v4055 = vadd.f32 %v4054, %v4004
        %v4056 = vadd.f32 %v4055, %v4020
        %v4057 = vadd.f32 %v3973, %v3989
        %v4058 = vadd.f32 %v4057, %v4005
        %v4059 = vadd.f32 %v4058, %v4021
        %v4060 = vadd.f32 %v3974, %v3990
        %v4061 = vadd.f32 %v4060, %v4006
        %v4062 = vadd.f32 %v4061, %v4022
        %v4063 = vadd.f32 %v3975, %v3991
        %v4064 = vadd.f32 %v4063, %v4007
        %v4065 = vadd.f32 %v4064, %v4023
        %v4066 = vadd.f32 %v3976, %v3992
        %v4067 = vadd.f32 %v4066, %v4008
        %v4068 = vadd.f32 %v4067, %v4024
        %v4069 = vadd.f32 %v3977, %v3993
        %v4070 = vadd.f32 %v4069, %v4009
        %v4071 = vadd.f32 %v4070, %v4025
        %v4072 = vadd.f32 %v3978, %v3994
        %v4073 = vadd.f32 %v4072, %v4010
        %v4074 = vadd.f32 %v4073, %v4026
        %v4075 = vmul.f32 %v3676, %v706
        %v4076 = vmul.f32 %v3678, %v707
        %v4077 = vmul.f32 %v3681, %v708
        %v4078 = vmul.f32 %v3683, %v709
        %v4079 = vmul.f32 %v3686, %v710
        %v4080 = vmul.f32 %v3688, %v711
        %v4081 = vmul.f32 %v3691, %v712
        %v4082 = vmul.f32 %v3693, %v713
        %v4083 = vmul.f32 %v3696, %v714
        %v4084 = vmul.f32 %v3698, %v715
        %v4085 = vmul.f32 %v3701, %v716
        %v4086 = vmul.f32 %v3703, %v717
        %v4087 = vmul.f32 %v3706, %v718
        %v4088 = vmul.f32 %v3708, %v719
        %v4089 = vmul.f32 %v3711, %v720
        %v4090 = vmul.f32 %v3713, %v721
        %v4091 = vmul.f32 %v3716, %v738
        %v4092 = vmul.f32 %v3718, %v739
        %v4093 = vmul.f32 %v3721, %v740
        %v4094 = vmul.f32 %v3723, %v741
        %v4095 = vmul.f32 %v3726, %v742
        %v4096 = vmul.f32 %v3728, %v743
        %v4097 = vmul.f32 %v3731, %v744
        %v4098 = vmul.f32 %v3733, %v745
        %v4099 = vmul.f32 %v3736, %v746
        %v4100 = vmul.f32 %v3738, %v747
        %v4101 = vmul.f32 %v3741, %v748
        %v4102 = vmul.f32 %v3743, %v749
        %v4103 = vmul.f32 %v3746, %v750
        %v4104 = vmul.f32 %v3748, %v751
        %v4105 = vmul.f32 %v3751, %v752
        %v4106 = vmul.f32 %v3753, %v753
        %v4107 = vmul.f32 %v3756, %v770
        %v4108 = vmul.f32 %v3758, %v771
        %v4109 = vmul.f32 %v3761, %v772
        %v4110 = vmul.f32 %v3763, %v773
        %v4111 = vmul.f32 %v3766, %v774
        %v4112 = vmul.f32 %v3768, %v775
        %v4113 = vmul.f32 %v3771, %v776
        %v4114 = vmul.f32 %v3773, %v777
        %v4115 = vmul.f32 %v3776, %v778
        %v4116 = vmul.f32 %v3778, %v779
        %v4117 = vmul.f32 %v3781, %v780
        %v4118 = vmul.f32 %v3783, %v781
        %v4119 = vmul.f32 %v3786, %v782
        %v4120 = vmul.f32 %v3788, %v783
        %v4121 = vmul.f32 %v3791, %v784
        %v4122 = vmul.f32 %v3793, %v785
        %v4123 = vmul.f32 %v3796, %v802
        %v4124 = vmul.f32 %v3798, %v803
        %v4125 = vmul.f32 %v3801, %v804
        %v4126 = vmul.f32 %v3803, %v805
        %v4127 = vmul.f32 %v3806, %v806
        %v4128 = vmul.f32 %v3808, %v807
        %v4129 = vmul.f32 %v3811, %v808
        %v4130 = vmul.f32 %v3813, %v809
        %v4131 = vmul.f32 %v3816, %v810
        %v4132 = vmul.f32 %v3818, %v811
        %v4133 = vmul.f32 %v3821, %v812
        %v4134 = vmul.f32 %v3823, %v813
        %v4135 = vmul.f32 %v3826, %v814
        %v4136 = vmul.f32 %v3828, %v815
        %v4137 = vmul.f32 %v3831, %v816
        %v4138 = vmul.f32 %v3833, %v817
        %v4139 = vmul.f32 %v3433, %v722
        %v4140 = vmul.f32 %v3434, %v723
        %v4141 = vmul.f32 %v3435, %v724
        %v4142 = vmul.f32 %v3436, %v725
        %v4143 = vmul.f32 %v3437, %v726
        %v4144 = vmul.f32 %v3438, %v727
        %v4145 = vmul.f32 %v3439, %v728
        %v4146 = vmul.f32 %v3440, %v729
        %v4147 = vmul.f32 %v3441, %v730
        %v4148 = vmul.f32 %v3442, %v731
        %v4149 = vmul.f32 %v3443, %v732
        %v4150 = vmul.f32 %v3444, %v733
        %v4151 = vmul.f32 %v3445, %v734
        %v4152 = vmul.f32 %v3446, %v735
        %v4153 = vmul.f32 %v3447, %v736
        %v4154 = vmul.f32 %v3448, %v737
        %v4155 = vmul.f32 %v3449, %v754
        %v4156 = vmul.f32 %v3450, %v755
        %v4157 = vmul.f32 %v3451, %v756
        %v4158 = vmul.f32 %v3452, %v757
        %v4159 = vmul.f32 %v3453, %v758
        %v4160 = vmul.f32 %v3454, %v759
        %v4161 = vmul.f32 %v3455, %v760
        %v4162 = vmul.f32 %v3456, %v761
        %v4163 = vmul.f32 %v3457, %v762
        %v4164 = vmul.f32 %v3458, %v763
        %v4165 = vmul.f32 %v3459, %v764
        %v4166 = vmul.f32 %v3460, %v765
        %v4167 = vmul.f32 %v3461, %v766
        %v4168 = vmul.f32 %v3462, %v767
        %v4169 = vmul.f32 %v3463, %v768
        %v4170 = vmul.f32 %v3464, %v769
        %v4171 = vmul.f32 %v3465, %v786
        %v4172 = vmul.f32 %v3466, %v787
        %v4173 = vmul.f32 %v3467, %v788
        %v4174 = vmul.f32 %v3468, %v789
        %v4175 = vmul.f32 %v3469, %v790
        %v4176 = vmul.f32 %v3470, %v791
        %v4177 = vmul.f32 %v3471, %v792
        %v4178 = vmul.f32 %v3472, %v793
        %v4179 = vmul.f32 %v3473, %v794
        %v4180 = vmul.f32 %v3474, %v795
        %v4181 = vmul.f32 %v3475, %v796
        %v4182 = vmul.f32 %v3476, %v797
        %v4183 = vmul.f32 %v3477, %v798
        %v4184 = vmul.f32 %v3478, %v799
        %v4185 = vmul.f32 %v3479, %v800
        %v4186 = vmul.f32 %v3480, %v801
        %v4187 = vmul.f32 %v3481, %v818
        %v4188 = vmul.f32 %v3482, %v819
        %v4189 = vmul.f32 %v3483, %v820
        %v4190 = vmul.f32 %v3484, %v821
        %v4191 = vmul.f32 %v3485, %v822
        %v4192 = vmul.f32 %v3486, %v823
        %v4193 = vmul.f32 %v3487, %v824
        %v4194 = vmul.f32 %v3488, %v825
        %v4195 = vmul.f32 %v3489, %v826
        %v4196 = vmul.f32 %v3490, %v827
        %v4197 = vmul.f32 %v3491, %v828
        %v4198 = vmul.f32 %v3492, %v829
        %v4199 = vmul.f32 %v3493, %v830
        %v4200 = vmul.f32 %v3494, %v831
        %v4201 = vmul.f32 %v3495, %v832
        %v4202 = vmul.f32 %v3496, %v833
        %v4203 = vadd.f32 %v4075, %v4139
        %v4204 = vadd.f32 %v4076, %v4140
        %v4205 = vadd.f32 %v4077, %v4141
        %v4206 = vadd.f32 %v4078, %v4142
        %v4207 = vadd.f32 %v4079, %v4143
        %v4208 = vadd.f32 %v4080, %v4144
        %v4209 = vadd.f32 %v4081, %v4145
        %v4210 = vadd.f32 %v4082, %v4146
        %v4211 = vadd.f32 %v4083, %v4147
        %v4212 = vadd.f32 %v4084, %v4148
        %v4213 = vadd.f32 %v4085, %v4149
        %v4214 = vadd.f32 %v4086, %v4150
        %v4215 = vadd.f32 %v4087, %v4151
        %v4216 = vadd.f32 %v4088, %v4152
        %v4217 = vadd.f32 %v4089, %v4153
        %v4218 = vadd.f32 %v4090, %v4154
        %v4219 = vadd.f32 %v4091, %v4155
        %v4220 = vadd.f32 %v4092, %v4156
        %v4221 = vadd.f32 %v4093, %v4157
        %v4222 = vadd.f32 %v4094, %v4158
        %v4223 = vadd.f32 %v4095, %v4159
        %v4224 = vadd.f32 %v4096, %v4160
        %v4225 = vadd.f32 %v4097, %v4161
        %v4226 = vadd.f32 %v4098, %v4162
        %v4227 = vadd.f32 %v4099, %v4163
        %v4228 = vadd.f32 %v4100, %v4164
        %v4229 = vadd.f32 %v4101, %v4165
        %v4230 = vadd.f32 %v4102, %v4166
        %v4231 = vadd.f32 %v4103, %v4167
        %v4232 = vadd.f32 %v4104, %v4168
        %v4233 = vadd.f32 %v4105, %v4169
        %v4234 = vadd.f32 %v4106, %v4170
        %v4235 = vadd.f32 %v4107, %v4171
        %v4236 = vadd.f32 %v4108, %v4172
        %v4237 = vadd.f32 %v4109, %v4173
        %v4238 = vadd.f32 %v4110, %v4174
        %v4239 = vadd.f32 %v4111, %v4175
        %v4240 = vadd.f32 %v4112, %v4176
        %v4241 = vadd.f32 %v4113, %v4177
        %v4242 = vadd.f32 %v4114, %v4178
        %v4243 = vadd.f32 %v4115, %v4179
        %v4244 = vadd.f32 %v4116, %v4180
        %v4245 = vadd.f32 %v4117, %v4181
        %v4246 = vadd.f32 %v4118, %v4182
        %v4247 = vadd.f32 %v4119, %v4183
        %v4248 = vadd.f32 %v4120, %v4184
        %v4249 = vadd.f32 %v4121, %v4185
        %v4250 = vadd.f32 %v4122, %v4186
        %v4251 = vadd.f32 %v4123, %v4187
        %v4252 = vadd.f32 %v4124, %v4188
        %v4253 = vadd.f32 %v4125, %v4189
        %v4254 = vadd.f32 %v4126, %v4190
        %v4255 = vadd.f32 %v4127, %v4191
        %v4256 = vadd.f32 %v4128, %v4192
        %v4257 = vadd.f32 %v4129, %v4193
        %v4258 = vadd.f32 %v4130, %v4194
        %v4259 = vadd.f32 %v4131, %v4195
        %v4260 = vadd.f32 %v4132, %v4196
        %v4261 = vadd.f32 %v4133, %v4197
        %v4262 = vadd.f32 %v4134, %v4198
        %v4263 = vadd.f32 %v4135, %v4199
        %v4264 = vadd.f32 %v4136, %v4200
        %v4265 = vadd.f32 %v4137, %v4201
        %v4266 = vadd.f32 %v4138, %v4202
        %v4267 = vadd.f32 %v4203, %v4219
        %v4268 = vadd.f32 %v4267, %v4235
        %v4269 = vadd.f32 %v4268, %v4251
        %v4270 = vadd.f32 %v4204, %v4220
        %v4271 = vadd.f32 %v4270, %v4236
        %v4272 = vadd.f32 %v4271, %v4252
        %v4273 = vadd.f32 %v4205, %v4221
        %v4274 = vadd.f32 %v4273, %v4237
        %v4275 = vadd.f32 %v4274, %v4253
        %v4276 = vadd.f32 %v4206, %v4222
        %v4277 = vadd.f32 %v4276, %v4238
        %v4278 = vadd.f32 %v4277, %v4254
        %v4279 = vadd.f32 %v4207, %v4223
        %v4280 = vadd.f32 %v4279, %v4239
        %v4281 = vadd.f32 %v4280, %v4255
        %v4282 = vadd.f32 %v4208, %v4224
        %v4283 = vadd.f32 %v4282, %v4240
        %v4284 = vadd.f32 %v4283, %v4256
        %v4285 = vadd.f32 %v4209, %v4225
        %v4286 = vadd.f32 %v4285, %v4241
        %v4287 = vadd.f32 %v4286, %v4257
        %v4288 = vadd.f32 %v4210, %v4226
        %v4289 = vadd.f32 %v4288, %v4242
        %v4290 = vadd.f32 %v4289, %v4258
        %v4291 = vadd.f32 %v4211, %v4227
        %v4292 = vadd.f32 %v4291, %v4243
        %v4293 = vadd.f32 %v4292, %v4259
        %v4294 = vadd.f32 %v4212, %v4228
        %v4295 = vadd.f32 %v4294, %v4244
        %v4296 = vadd.f32 %v4295, %v4260
        %v4297 = vadd.f32 %v4213, %v4229
        %v4298 = vadd.f32 %v4297, %v4245
        %v4299 = vadd.f32 %v4298, %v4261
        %v4300 = vadd.f32 %v4214, %v4230
        %v4301 = vadd.f32 %v4300, %v4246
        %v4302 = vadd.f32 %v4301, %v4262
        %v4303 = vadd.f32 %v4215, %v4231
        %v4304 = vadd.f32 %v4303, %v4247
        %v4305 = vadd.f32 %v4304, %v4263
        %v4306 = vadd.f32 %v4216, %v4232
        %v4307 = vadd.f32 %v4306, %v4248
        %v4308 = vadd.f32 %v4307, %v4264
        %v4309 = vadd.f32 %v4217, %v4233
        %v4310 = vadd.f32 %v4309, %v4249
        %v4311 = vadd.f32 %v4310, %v4265
        %v4312 = vadd.f32 %v4218, %v4234
        %v4313 = vadd.f32 %v4312, %v4250
        %v4314 = vadd.f32 %v4313, %v4266
        %v4315 = vsub.f32 0.0, %v4269
        %v4316 = vsub.f32 0.0, %v4272
        %v4317 = vsub.f32 0.0, %v4275
        %v4318 = vsub.f32 0.0, %v4278
        %v4319 = vsub.f32 0.0, %v4281
        %v4320 = vsub.f32 0.0, %v4284
        %v4321 = vsub.f32 0.0, %v4287
        %v4322 = vsub.f32 0.0, %v4290
        %v4323 = vsub.f32 0.0, %v4293
        %v4324 = vsub.f32 0.0, %v4296
        %v4325 = vsub.f32 0.0, %v4299
        %v4326 = vsub.f32 0.0, %v4302
        %v4327 = vsub.f32 0.0, %v4305
        %v4328 = vsub.f32 0.0, %v4308
        %v4329 = vsub.f32 0.0, %v4311
        %v4330 = vsub.f32 0.0, %v4314
        %v4331 = vld [vmem:[%s502] sm:$0xff]
        %v4332 = vld [vmem:[%s502 + $0x8] sm:$0xff]
        %v4333 = vld [vmem:[%s502 + $0x10] sm:$0xff]
        %v4334 = vld [vmem:[%s502 + $0x18] sm:$0xff]
        %v4335 = vld [vmem:[%s502 + $0x20] sm:$0xff]
        %v4336 = vld [vmem:[%s502 + $0x28] sm:$0xff]
        %v4337 = vld [vmem:[%s502 + $0x30] sm:$0xff]
        %v4338 = vld [vmem:[%s502 + $0x38] sm:$0xff]
        %v4339 = vld [vmem:[%s502 + $0x40] sm:$0xff]
        %v4340 = vld [vmem:[%s502 + $0x48] sm:$0xff]
        %v4341 = vld [vmem:[%s502 + $0x50] sm:$0xff]
        %v4342 = vld [vmem:[%s502 + $0x58] sm:$0xff]
        %v4343 = vld [vmem:[%s502 + $0x60] sm:$0xff]
        %v4344 = vld [vmem:[%s502 + $0x68] sm:$0xff]
        %v4345 = vld [vmem:[%s502 + $0x70] sm:$0xff]
        %v4346 = vld [vmem:[%s502 + $0x78] sm:$0xff]
        %v4347 = vadd.f32 %v4331, %v4029
        %v4348 = vadd.f32 %v4332, %v4032
        %v4349 = vadd.f32 %v4333, %v4035
        %v4350 = vadd.f32 %v4334, %v4038
        %v4351 = vadd.f32 %v4335, %v4041
        %v4352 = vadd.f32 %v4336, %v4044
        %v4353 = vadd.f32 %v4337, %v4047
        %v4354 = vadd.f32 %v4338, %v4050
        %v4355 = vadd.f32 %v4339, %v4053
        %v4356 = vadd.f32 %v4340, %v4056
        %v4357 = vadd.f32 %v4341, %v4059
        %v4358 = vadd.f32 %v4342, %v4062
        %v4359 = vadd.f32 %v4343, %v4065
        %v4360 = vadd.f32 %v4344, %v4068
        %v4361 = vadd.f32 %v4345, %v4071
        %v4362 = vadd.f32 %v4346, %v4074
        %4363 = vst [vmem:[%s502] sm:$0xff] %v4347
        %4364 = vst [vmem:[%s502 + $0x8] sm:$0xff] %v4348
        %4365 = vst [vmem:[%s502 + $0x10] sm:$0xff] %v4349
        %4366 = vst [vmem:[%s502 + $0x18] sm:$0xff] %v4350
        %4367 = vst [vmem:[%s502 + $0x20] sm:$0xff] %v4351
        %4368 = vst [vmem:[%s502 + $0x28] sm:$0xff] %v4352
        %4369 = vst [vmem:[%s502 + $0x30] sm:$0xff] %v4353
        %4370 = vst [vmem:[%s502 + $0x38] sm:$0xff] %v4354
        %4371 = vst [vmem:[%s502 + $0x40] sm:$0xff] %v4355
        %4372 = vst [vmem:[%s502 + $0x48] sm:$0xff] %v4356
        %4373 = vst [vmem:[%s502 + $0x50] sm:$0xff] %v4357
        %4374 = vst [vmem:[%s502 + $0x58] sm:$0xff] %v4358
        %4375 = vst [vmem:[%s502 + $0x60] sm:$0xff] %v4359
        %4376 = vst [vmem:[%s502 + $0x68] sm:$0xff] %v4360
        %4377 = vst [vmem:[%s502 + $0x70] sm:$0xff] %v4361
        %4378 = vst [vmem:[%s502 + $0x78] sm:$0xff] %v4362
        %s4379 = scalar_lea.vmem %s502, 128 [#allocation17]
        %v4380 = vld [vmem:[%s4379] sm:$0xff]
        %v4381 = vld [vmem:[%s4379 + $0x8] sm:$0xff]
        %v4382 = vld [vmem:[%s4379 + $0x10] sm:$0xff]
        %v4383 = vld [vmem:[%s4379 + $0x18] sm:$0xff]
        %v4384 = vld [vmem:[%s4379 + $0x20] sm:$0xff]
        %v4385 = vld [vmem:[%s4379 + $0x28] sm:$0xff]
        %v4386 = vld [vmem:[%s4379 + $0x30] sm:$0xff]
        %v4387 = vld [vmem:[%s4379 + $0x38] sm:$0xff]
        %v4388 = vld [vmem:[%s4379 + $0x40] sm:$0xff]
        %v4389 = vld [vmem:[%s4379 + $0x48] sm:$0xff]
        %v4390 = vld [vmem:[%s4379 + $0x50] sm:$0xff]
        %v4391 = vld [vmem:[%s4379 + $0x58] sm:$0xff]
        %v4392 = vld [vmem:[%s4379 + $0x60] sm:$0xff]
        %v4393 = vld [vmem:[%s4379 + $0x68] sm:$0xff]
        %v4394 = vld [vmem:[%s4379 + $0x70] sm:$0xff]
        %v4395 = vld [vmem:[%s4379 + $0x78] sm:$0xff]
        %v4396 = vadd.f32 %v4380, %v4315
        %v4397 = vadd.f32 %v4381, %v4316
        %v4398 = vadd.f32 %v4382, %v4317
        %v4399 = vadd.f32 %v4383, %v4318
        %v4400 = vadd.f32 %v4384, %v4319
        %v4401 = vadd.f32 %v4385, %v4320
        %v4402 = vadd.f32 %v4386, %v4321
        %v4403 = vadd.f32 %v4387, %v4322
        %v4404 = vadd.f32 %v4388, %v4323
        %v4405 = vadd.f32 %v4389, %v4324
        %v4406 = vadd.f32 %v4390, %v4325
        %v4407 = vadd.f32 %v4391, %v4326
        %v4408 = vadd.f32 %v4392, %v4327
        %v4409 = vadd.f32 %v4393, %v4328
        %v4410 = vadd.f32 %v4394, %v4329
        %v4411 = vadd.f32 %v4395, %v4330
        %4412 = vst [vmem:[%s4379] sm:$0xff] %v4396
        %4413 = vst [vmem:[%s4379 + $0x8] sm:$0xff] %v4397
        %4414 = vst [vmem:[%s4379 + $0x10] sm:$0xff] %v4398
        %4415 = vst [vmem:[%s4379 + $0x18] sm:$0xff] %v4399
        %4416 = vst [vmem:[%s4379 + $0x20] sm:$0xff] %v4400
        %4417 = vst [vmem:[%s4379 + $0x28] sm:$0xff] %v4401
        %4418 = vst [vmem:[%s4379 + $0x30] sm:$0xff] %v4402
        %4419 = vst [vmem:[%s4379 + $0x38] sm:$0xff] %v4403
        %4420 = vst [vmem:[%s4379 + $0x40] sm:$0xff] %v4404
        %4421 = vst [vmem:[%s4379 + $0x48] sm:$0xff] %v4405
        %4422 = vst [vmem:[%s4379 + $0x50] sm:$0xff] %v4406
        %4423 = vst [vmem:[%s4379 + $0x58] sm:$0xff] %v4407
        %4424 = vst [vmem:[%s4379 + $0x60] sm:$0xff] %v4408
        %4425 = vst [vmem:[%s4379 + $0x68] sm:$0xff] %v4409
        %4426 = vst [vmem:[%s4379 + $0x70] sm:$0xff] %v4410
        %4427 = vst [vmem:[%s4379 + $0x78] sm:$0xff] %v4411
        %s4428 = sand.u32 %s247, 1
        %s4429 = scalar_lea.sflag [#allocation7], %s4428
        %s4430 = sand.u32 %s247, 1
        %s4431 = smul.addr %s4430, 256
        %s4432 = scalar_lea.vmem [#allocation17], %s4431
        // Predicated region
        $region92: #{tpu_custom_call.1} parent=51 // pred_check
          %p4433 = pneg %p257
        $region93: #{tpu_custom_call.1} parent=51 // pred_check_branch
          %4435 = sbr.rel (%p4433) target = $region95
        $region94: #{tpu_custom_call.1} parent=51 // pred_region
          %4437 = vsyncadd %s4429, 0
          %s4438 = smul.addr %s37, 32
          %s4439 = smul.addr %s36, 64
          %s4440 = sadd.s32 %s4438, %s4439
          %s4441 = smul.addr %s4440, 8
          %s4442 = scalar_lea.hbm %s8, %s4441
          %s4443 = sshll.u32 %s4432, 4
          %s4444 = int_to_ptr.vmem [resolvable:$true] %s4443
          %s4445 = sshll.u32 %s4442, 4
          %s4446 = int_to_ptr.hbm [resolvable:$true] %s4445
          %4451 = dma.vmem_to_hbm [thread:$0]  %s4444, 4096, %s4446, %s4429, 128, 128, 8
        $region95: #{tpu_custom_call.1} parent=51 // pred_fallthru
          _
      $region52: #{tpu_custom_call.1} parent=5 // pred_fallthru
        _
      %p4452 = scmp.le.s32.totalorder 2, %s26
      // Predicated region
      $region96: #{tpu_custom_call.1} parent=5 // pred_check
        %p4453 = pneg %p4452
      $region97: #{tpu_custom_call.1} parent=5 // pred_check_branch
        %4455 = sbr.rel (%p4453) target = $region99
      $region98: #{tpu_custom_call.1} parent=5 // pred_region
        %s4456 = ssub.s32 %s26, 2
        // Predicated region
        $region100: #{tpu_custom_call.1} parent=98 // pred_check
          %p4457 = pneg %p263
        $region101: #{tpu_custom_call.1} parent=98 // pred_check_branch
          %4459 = sbr.rel (%p4457) target = $region103
        $region102: #{tpu_custom_call.1} parent=98 // pred_region
          %s4460 = sand.u32 %s248, 1
          %s4461 = scalar_lea.sflag [#allocation7], %s4460
          %s4462 = sand.u32 %s248, 1
          %s4463 = smul.addr %s4462, 256
          %s4464 = scalar_lea.vmem [#allocation17], %s4463
          %4466 = dma.done %s4461, 4096
        $region103: #{tpu_custom_call.1} parent=98 // pred_fallthru
          _
      $region99: #{tpu_custom_call.1} parent=5 // pred_fallthru
        _
    $region6: #{tpu_custom_call.1} parent=1 // loop_footer
      %s30 = sadd.s32 1, %s26
    $region7: #{tpu_custom_call.1} parent=1 // loop_footer_branch
      %25 = sbr.rel target = $region3
    $region8: #{tpu_custom_call.1} parent=1 // loop_exit
      _
    %4467 = vsyncpa [#allocation6], 1
    %s4468 = scalar_lea.sflag [#allocation6], 1
    %4469 = vsyncpa %s4468, 1
    %4470 = vsyncpa [#allocation9], 1
    %s4471 = scalar_lea.sflag [#allocation9], 1
    %4472 = vsyncpa %s4471, 1
    %4473 = vsyncpa [#allocation12], 1
    %4474 = vsyncpa [#allocation15], 1
    %4475 = vsyncpa [#allocation7], 1
    %s4476 = scalar_lea.sflag [#allocation7], 1
    %4477 = vsyncpa %s4476, 1

</llo_original>
